<compile_context>
chip_gen: v7x
topology: tpu7x:2x2x1
jax: 0.10.0
libtpu: 0.0.40
codegen_flags: <defaults>
</compile_context>

<pallas_src>
import math

import jax
import jax.numpy as jnp
from jax.experimental import pallas as pl
from jax.experimental.pallas import tpu as pltpu

K = 7          # conv kernel size
PAD = K // 2   # SAME padding = 3


def _round_up(x, m):
    return ((x + m - 1) // m) * m


def _spatial_attention_kernel(x_ref, t_ref, o_ref, pad_ref):
    # x_ref  : (TB, C, H, W)            input block (TB batch elements)
    # t_ref  : (K, Lpad, W)             banded conv matrices (grid-invariant)
    # o_ref  : (TB, C, H, W)            output block
    # pad_ref: (TB, H_pad + 2*PAD, Lpad) zero-padded [avg | max] maps (scratch)
    TB, C, H, W = x_ref.shape
    _, Lpad, _ = t_ref.shape
    _, hp_ext, _ = pad_ref.shape
    H_pad = hp_ext - 2 * PAD          # H rounded up to a multiple of 8
    Wp = W + 2 * PAD
    inv_c = 1.0 / C

    # Halo rows/lanes of the padded scratch must be zero; the interior is
    # overwritten below.  Re-zeroed per step for correctness under megacore
    # sharding (each core owns its own scratch and never runs "step 0" twice).
    pad_ref[...] = jnp.zeros_like(pad_ref)

    # Fused channel reduce over the whole block: one load feeds mean and max.
    xs = x_ref[...]                                        # (TB, C, H, W)
    avg = jnp.sum(xs.astype(jnp.float32), axis=1) * inv_c  # (TB, H, W)
    mx = jnp.max(xs, axis=1).astype(jnp.float32)           # (TB, H, W)

    # Stage zero-padded avg (cols [PAD, PAD+W)) and max (cols [Wp+PAD, ...)).
    pad_ref[:, PAD:PAD + H, PAD:PAD + W] = avg
    pad_ref[:, PAD:PAD + H, Wp + PAD:Wp + PAD + W] = mx

    # 7x7 conv (2 -> 1 channel, no bias) as K banded matmuls on the MXU with
    # the batch dim folded into M:
    #   acc[(b, h), :] += padded[b, kh + h, :] @ T[kh]
    # The (TB, H_pad, Lpad) -> (TB*H_pad, Lpad) collapse is tile-aligned
    # (H_pad % 8 == 0, Lpad % 128 == 0), so it is a free relayout.
    acc = jnp.zeros((TB * H_pad, W), jnp.float32)
    for kh in range(K):                                    # static, K == 7
        lhs = pad_ref[:, kh:kh + H_pad, :].reshape(TB * H_pad, Lpad)
        acc = acc + jnp.dot(
            lhs, t_ref[kh],
            preferred_element_type=jnp.float32,
            precision=jax.lax.Precision.HIGHEST,  # full-f32 conv numerics
        )

    att = jax.nn.sigmoid(acc.reshape(TB, H_pad, W)[:, :H, :])   # (TB, H, W)

    # Re-read x for the multiply (cheap VMEM loads) instead of keeping the
    # block-sized value live across the conv; keep the pass in x's dtype.
    xv = x_ref[...]
    o_ref[...] = (xv * att[:, None, :, :].astype(xv.dtype)).astype(o_ref.dtype)


def _build_banded_conv_matrices(weight, W):
    """T[kh, c*Wp + (w + kw), w] = weight[0, c, kh, kw]; zeros elsewhere.

    With the padded [avg | max] maps laid out side-by-side along the lane
    axis, the whole 7x7, 2->1-channel conv becomes
        out[h, :] = sum_kh  padded[kh + h, :] @ T[kh].
    """
    Wp = W + 2 * PAD
    w = weight.reshape(2, K, K).astype(jnp.float32)        # (2, K, K), OIHW -> IHW
    j = jnp.arange(2 * Wp)                                 # padded column index
    c_of_j = j // Wp                                       # conv input channel
    off = j % Wp                                           # column within channel
    col = jnp.arange(W)                                    # output column
    kw = off[:, None] - col[None, :]                       # (2*Wp, W)
    valid = (kw >= 0) & (kw < K)
    kw_c = jnp.clip(kw, 0, K - 1)
    kh = jnp.arange(K)
    t = w[c_of_j[None, :, None], kh[:, None, None], kw_c[None, :, :]]  # (K, 2*Wp, W)
    return jnp.where(valid[None, :, :], t, 0.0)


def spatial_attention(x, weight, *, block_budget_bytes=2 * 1024 * 1024):
    """x: (B, C, H, W) float; weight: (1, 2, K, K) OIHW (nn.Conv2d, bias-free)."""
    B, C, H, W = x.shape
    Wp = W + 2 * PAD
    H_pad = _round_up(H, 8)                 # sublane-aligned conv M rows
    hp_ext = H_pad + 2 * PAD                # scratch rows per batch element
    Lpad = _round_up(2 * Wp, 128)           # lane-aligned conv K dim (free on MXU)

    # Banded conv matrices, zero-extended along K to the lane-padded width.
    t = _build_banded_conv_matrices(weight, W)                     # (K, 2*Wp, W)
    t = jnp.pad(t, ((0, 0), (0, Lpad - 2 * Wp), (0, 0)))           # (K, Lpad, W)

    # Block size: ~2 MiB of x per step (amortizes per-step overhead, big DMAs),
    # but keep at least 2 grid steps when B allows so the "parallel" batch axis
    # can be sharded across v7x's two TensorCores.
    per_b_bytes = C * H * W * x.dtype.itemsize
    tb = max(1, min(B, block_budget_bytes // max(per_b_bytes, 1)))
    if B >= 2:
        tb = min(tb, -(-B // 2))            # ceil(B/2) -> grid length >= 2
    grid = pl.cdiv(B, tb)                   # padded tail block is masked by Pallas

    block_bytes = tb * per_b_bytes
    t_bytes = t.size * 4
    scratch_bytes = tb * hp_ext * Lpad * 4
    vmem_need = 4 * block_bytes + 2 * t_bytes + scratch_bytes
    vmem_limit = int(min(48 << 20, max(vmem_need + (8 << 20), 16 << 20)))

    return pl.pallas_call(
        _spatial_attention_kernel,
        out_shape=jax.ShapeDtypeStruct((B, C, H, W), x.dtype),
        grid_spec=pltpu.PrefetchScalarGridSpec(
            num_scalar_prefetch=0,
            grid=(grid,),
            in_specs=[
                pl.BlockSpec((tb, C, H, W), lambda b: (b, 0, 0, 0)),
                pl.BlockSpec((K, Lpad, W), lambda b: (0, 0, 0)),
            ],
            out_specs=pl.BlockSpec((tb, C, H, W), lambda b: (b, 0, 0, 0)),
            scratch_shapes=[
                pltpu.VMEM((tb, hp_ext, Lpad), jnp.float32),
            ],
        ),
        # Batch steps are fully independent -> shard across v7x's two
        # TensorCores; harmless (single TC) on v5e/v6e.
        compiler_params=pltpu.CompilerParams(
            dimension_semantics=("parallel",),
            vmem_limit_bytes=vmem_limit,
        ),
    )(x, t)


def reference(x, weight):
    """Pure-JAX (XLA) reference of the PyTorch forward pass."""
    avg = jnp.mean(x, axis=1, keepdims=True)
    mx = jnp.max(x, axis=1, keepdims=True)
    att = jnp.concatenate([avg, mx], axis=1)
    conv = jax.lax.conv_general_dilated(
        att, weight, window_strides=(1, 1), padding="SAME",
        dimension_numbers=("NCHW", "OIHW", "NCHW"),
        precision=jax.lax.Precision.HIGHEST)
    return x * jax.nn.sigmoid(conv)


if __name__ == "__main__":
    key = jax.random.PRNGKey(0)
    kx, kwt = jax.random.split(key)

    B, C, H, W = 2, 4, 16, 16
    x = jax.random.normal(kx, (B, C, H, W), dtype=jnp.float32)

    # Deterministic conv weight init (matches nn.Conv2d kaiming-uniform bound).
    fan_in = 2 * K * K
    bound = 1.0 / math.sqrt(fan_in)
    weight = jax.random.uniform(kwt, (1, 2, K, K), dtype=jnp.float32,
                                minval=-bound, maxval=bound)

    out = jax.block_until_ready(spatial_attention(x, weight))
    ref = jax.block_until_ready(reference(x, weight))

    max_err = float(jnp.max(jnp.abs(out - ref)))
    assert out.shape == (B, C, H, W)
    assert jnp.allclose(out, ref, atol=1e-4, rtol=1e-4), f"max abs err {max_err}"

    print("KERNEL_OK")
</pallas_src>

<mosaic_0001>
module attributes {stable_mosaic.version = 11 : i64} {
  func.func @_spatial_attention_kernel(%arg0: i32, %arg1: memref<1x4x16x16xf32, #tpu.memory_space<vmem>>, %arg2: memref<7x128x16xf32, #tpu.memory_space<vmem>>, %arg3: memref<1x4x16x16xf32, #tpu.memory_space<vmem>>, %arg4: memref<1x22x128xf32, #tpu.memory_space<vmem>>) attributes {dimension_semantics = [#tpu.dimension_semantics<parallel>], iteration_bounds = array<i64: 2>, scalar_prefetch = 0 : i64, scratch_operands = 1 : i64, tpu.core_type = #tpu.core_type<tc>, window_params = [{transform_indices = @transform_0, window_bounds = array<i64: 1, 4, 16, 16>}, {pipeline_mode = #tpu.pipeline_mode<synchronous>, transform_indices = @transform_1, window_bounds = array<i64: 7, 128, 16>}, {transform_indices = @transform_2, window_bounds = array<i64: 1, 4, 16, 16>}]} {
    %cst = arith.constant 0.000000e+00 : f32
    %0 = vector.broadcast %cst : f32 to vector<1x22x128xf32>
    %c0 = arith.constant 0 : index
    %c0_0 = arith.constant 0 : index
    %c0_1 = arith.constant 0 : index
    %1 = vector.load %arg4[%c0, %c0_0, %c0_1] : memref<1x22x128xf32, #tpu.memory_space<vmem>>, vector<1x22x128xf32>
    tpu.vector_store %arg4[%c0, %c0_0, %c0_1], %0 {strides = array<i32>} : memref<1x22x128xf32, #tpu.memory_space<vmem>>, vector<1x22x128xf32>,
    %c0_2 = arith.constant 0 : index
    %c0_3 = arith.constant 0 : index
    %c0_4 = arith.constant 0 : index
    %c0_5 = arith.constant 0 : index
    %2 = vector.load %arg1[%c0_2, %c0_3, %c0_4, %c0_5] : memref<1x4x16x16xf32, #tpu.memory_space<vmem>>, vector<1x4x16x16xf32>
    %cst_6 = arith.constant dense<0.000000e+00> : vector<1x16x16xf32>
    %3 = vector.multi_reduction <add>, %2, %cst_6 [1] : vector<1x4x16x16xf32> to vector<1x16x16xf32>
    %cst_7 = arith.constant 2.500000e-01 : f32
    %4 = vector.broadcast %cst_7 : f32 to vector<1x16x16xf32>
    %5 = arith.mulf %3, %4 : vector<1x16x16xf32>
    %cst_8 = arith.constant dense<0xFF800000> : vector<1x16x16xf32>
    %6 = vector.multi_reduction <maximumf>, %2, %cst_8 [1] : vector<1x4x16x16xf32> to vector<1x16x16xf32>
    %c0_9 = arith.constant 0 : index
    %c3 = arith.constant 3 : index
    %c3_10 = arith.constant 3 : index
    %7 = vector.load %arg4[%c0_9, %c3, %c3_10] : memref<1x22x128xf32, #tpu.memory_space<vmem>>, vector<1x16x16xf32>
    tpu.vector_store %arg4[%c0_9, %c3, %c3_10], %5 {strides = array<i32>} : memref<1x22x128xf32, #tpu.memory_space<vmem>>, vector<1x16x16xf32>,
    %c0_11 = arith.constant 0 : index
    %c3_12 = arith.constant 3 : index
    %c25 = arith.constant 25 : index
    %8 = vector.load %arg4[%c0_11, %c3_12, %c25] : memref<1x22x128xf32, #tpu.memory_space<vmem>>, vector<1x16x16xf32>
    tpu.vector_store %arg4[%c0_11, %c3_12, %c25], %6 {strides = array<i32>} : memref<1x22x128xf32, #tpu.memory_space<vmem>>, vector<1x16x16xf32>,
    %cst_13 = arith.constant 0.000000e+00 : f32
    %9 = vector.broadcast %cst_13 : f32 to vector<16x16xf32>
    %c0_14 = arith.constant 0 : index
    %c0_15 = arith.constant 0 : index
    %c0_16 = arith.constant 0 : index
    %10 = vector.load %arg4[%c0_14, %c0_15, %c0_16] : memref<1x22x128xf32, #tpu.memory_space<vmem>>, vector<1x16x128xf32>
    %11 = vector.shape_cast %10 : vector<1x16x128xf32> to vector<16x128xf32>
    %c0_17 = arith.constant 0 : index
    %c0_18 = arith.constant 0 : index
    %c0_19 = arith.constant 0 : index
    %12 = vector.load %arg2[%c0_17, %c0_18, %c0_19] : memref<7x128x16xf32, #tpu.memory_space<vmem>>, vector<1x128x16xf32>
    %13 = vector.shape_cast %12 : vector<1x128x16xf32> to vector<128x16xf32>
    %cst_20 = arith.constant dense<0.000000e+00> : vector<16x16xf32>
    %14 = tpu.matmul %11, %13, %cst_20 {dimension_numbers = #tpu.dot_dimension_numbers<[1], [0], [0], [1], [0, 0, 1, 1], [], []>, precision = #tpu.contract_precision<fp32>} : vector<16x128xf32>, vector<128x16xf32>, vector<16x16xf32> -> vector<16x16xf32>
    %15 = arith.addf %9, %14 : vector<16x16xf32>
    %c0_21 = arith.constant 0 : index
    %c1 = arith.constant 1 : index
    %c0_22 = arith.constant 0 : index
    %16 = vector.load %arg4[%c0_21, %c1, %c0_22] : memref<1x22x128xf32, #tpu.memory_space<vmem>>, vector<1x16x128xf32>
    %17 = vector.shape_cast %16 : vector<1x16x128xf32> to vector<16x128xf32>
    %c1_23 = arith.constant 1 : index
    %c0_24 = arith.constant 0 : index
    %c0_25 = arith.constant 0 : index
    %18 = vector.load %arg2[%c1_23, %c0_24, %c0_25] : memref<7x128x16xf32, #tpu.memory_space<vmem>>, vector<1x128x16xf32>
    %19 = vector.shape_cast %18 : vector<1x128x16xf32> to vector<128x16xf32>
    %cst_26 = arith.constant dense<0.000000e+00> : vector<16x16xf32>
    %20 = tpu.matmul %17, %19, %cst_26 {dimension_numbers = #tpu.dot_dimension_numbers<[1], [0], [0], [1], [0, 0, 1, 1], [], []>, precision = #tpu.contract_precision<fp32>} : vector<16x128xf32>, vector<128x16xf32>, vector<16x16xf32> -> vector<16x16xf32>
    %21 = arith.addf %15, %20 : vector<16x16xf32>
    %c0_27 = arith.constant 0 : index
    %c2 = arith.constant 2 : index
    %c0_28 = arith.constant 0 : index
    %22 = vector.load %arg4[%c0_27, %c2, %c0_28] : memref<1x22x128xf32, #tpu.memory_space<vmem>>, vector<1x16x128xf32>
    %23 = vector.shape_cast %22 : vector<1x16x128xf32> to vector<16x128xf32>
    %c2_29 = arith.constant 2 : index
    %c0_30 = arith.constant 0 : index
    %c0_31 = arith.constant 0 : index
    %24 = vector.load %arg2[%c2_29, %c0_30, %c0_31] : memref<7x128x16xf32, #tpu.memory_space<vmem>>, vector<1x128x16xf32>
    %25 = vector.shape_cast %24 : vector<1x128x16xf32> to vector<128x16xf32>
    %cst_32 = arith.constant dense<0.000000e+00> : vector<16x16xf32>
    %26 = tpu.matmul %23, %25, %cst_32 {dimension_numbers = #tpu.dot_dimension_numbers<[1], [0], [0], [1], [0, 0, 1, 1], [], []>, precision = #tpu.contract_precision<fp32>} : vector<16x128xf32>, vector<128x16xf32>, vector<16x16xf32> -> vector<16x16xf32>
    %27 = arith.addf %21, %26 : vector<16x16xf32>
    %c0_33 = arith.constant 0 : index
    %c3_34 = arith.constant 3 : index
    %c0_35 = arith.constant 0 : index
    %28 = vector.load %arg4[%c0_33, %c3_34, %c0_35] : memref<1x22x128xf32, #tpu.memory_space<vmem>>, vector<1x16x128xf32>
    %29 = vector.shape_cast %28 : vector<1x16x128xf32> to vector<16x128xf32>
    %c3_36 = arith.constant 3 : index
    %c0_37 = arith.constant 0 : index
    %c0_38 = arith.constant 0 : index
    %30 = vector.load %arg2[%c3_36, %c0_37, %c0_38] : memref<7x128x16xf32, #tpu.memory_space<vmem>>, vector<1x128x16xf32>
    %31 = vector.shape_cast %30 : vector<1x128x16xf32> to vector<128x16xf32>
    %cst_39 = arith.constant dense<0.000000e+00> : vector<16x16xf32>
    %32 = tpu.matmul %29, %31, %cst_39 {dimension_numbers = #tpu.dot_dimension_numbers<[1], [0], [0], [1], [0, 0, 1, 1], [], []>, precision = #tpu.contract_precision<fp32>} : vector<16x128xf32>, vector<128x16xf32>, vector<16x16xf32> -> vector<16x16xf32>
    %33 = arith.addf %27, %32 : vector<16x16xf32>
    %c0_40 = arith.constant 0 : index
    %c4 = arith.constant 4 : index
    %c0_41 = arith.constant 0 : index
    %34 = vector.load %arg4[%c0_40, %c4, %c0_41] : memref<1x22x128xf32, #tpu.memory_space<vmem>>, vector<1x16x128xf32>
    %35 = vector.shape_cast %34 : vector<1x16x128xf32> to vector<16x128xf32>
    %c4_42 = arith.constant 4 : index
    %c0_43 = arith.constant 0 : index
    %c0_44 = arith.constant 0 : index
    %36 = vector.load %arg2[%c4_42, %c0_43, %c0_44] : memref<7x128x16xf32, #tpu.memory_space<vmem>>, vector<1x128x16xf32>
    %37 = vector.shape_cast %36 : vector<1x128x16xf32> to vector<128x16xf32>
    %cst_45 = arith.constant dense<0.000000e+00> : vector<16x16xf32>
    %38 = tpu.matmul %35, %37, %cst_45 {dimension_numbers = #tpu.dot_dimension_numbers<[1], [0], [0], [1], [0, 0, 1, 1], [], []>, precision = #tpu.contract_precision<fp32>} : vector<16x128xf32>, vector<128x16xf32>, vector<16x16xf32> -> vector<16x16xf32>
    %39 = arith.addf %33, %38 : vector<16x16xf32>
    %c0_46 = arith.constant 0 : index
    %c5 = arith.constant 5 : index
    %c0_47 = arith.constant 0 : index
    %40 = vector.load %arg4[%c0_46, %c5, %c0_47] : memref<1x22x128xf32, #tpu.memory_space<vmem>>, vector<1x16x128xf32>
    %41 = vector.shape_cast %40 : vector<1x16x128xf32> to vector<16x128xf32>
    %c5_48 = arith.constant 5 : index
    %c0_49 = arith.constant 0 : index
    %c0_50 = arith.constant 0 : index
    %42 = vector.load %arg2[%c5_48, %c0_49, %c0_50] : memref<7x128x16xf32, #tpu.memory_space<vmem>>, vector<1x128x16xf32>
    %43 = vector.shape_cast %42 : vector<1x128x16xf32> to vector<128x16xf32>
    %cst_51 = arith.constant dense<0.000000e+00> : vector<16x16xf32>
    %44 = tpu.matmul %41, %43, %cst_51 {dimension_numbers = #tpu.dot_dimension_numbers<[1], [0], [0], [1], [0, 0, 1, 1], [], []>, precision = #tpu.contract_precision<fp32>} : vector<16x128xf32>, vector<128x16xf32>, vector<16x16xf32> -> vector<16x16xf32>
    %45 = arith.addf %39, %44 : vector<16x16xf32>
    %c0_52 = arith.constant 0 : index
    %c6 = arith.constant 6 : index
    %c0_53 = arith.constant 0 : index
    %46 = vector.load %arg4[%c0_52, %c6, %c0_53] : memref<1x22x128xf32, #tpu.memory_space<vmem>>, vector<1x16x128xf32>
    %47 = vector.shape_cast %46 : vector<1x16x128xf32> to vector<16x128xf32>
    %c6_54 = arith.constant 6 : index
    %c0_55 = arith.constant 0 : index
    %c0_56 = arith.constant 0 : index
    %48 = vector.load %arg2[%c6_54, %c0_55, %c0_56] : memref<7x128x16xf32, #tpu.memory_space<vmem>>, vector<1x128x16xf32>
    %49 = vector.shape_cast %48 : vector<1x128x16xf32> to vector<128x16xf32>
    %cst_57 = arith.constant dense<0.000000e+00> : vector<16x16xf32>
    %50 = tpu.matmul %47, %49, %cst_57 {dimension_numbers = #tpu.dot_dimension_numbers<[1], [0], [0], [1], [0, 0, 1, 1], [], []>, precision = #tpu.contract_precision<fp32>} : vector<16x128xf32>, vector<128x16xf32>, vector<16x16xf32> -> vector<16x16xf32>
    %51 = arith.addf %45, %50 : vector<16x16xf32>
    %52 = vector.shape_cast %51 : vector<16x16xf32> to vector<1x16x16xf32>
    %53 = arith.negf %52 : vector<1x16x16xf32>
    %54 = math.exp %53 : vector<1x16x16xf32>
    %cst_58 = arith.constant 1.000000e+00 : f32
    %55 = vector.broadcast %cst_58 : f32 to vector<1x16x16xf32>
    %56 = arith.addf %55, %54 : vector<1x16x16xf32>
    %57 = arith.divf %55, %56 : vector<1x16x16xf32>
    %c0_59 = arith.constant 0 : index
    %c0_60 = arith.constant 0 : index
    %c0_61 = arith.constant 0 : index
    %c0_62 = arith.constant 0 : index
    %58 = vector.load %arg1[%c0_59, %c0_60, %c0_61, %c0_62] : memref<1x4x16x16xf32, #tpu.memory_space<vmem>>, vector<1x4x16x16xf32>
    %59 = vector.shape_cast %57 : vector<1x16x16xf32> to vector<1x1x16x16xf32>
    %60 = vector.broadcast %59 : vector<1x1x16x16xf32> to vector<1x4x16x16xf32>
    %61 = arith.mulf %58, %60 : vector<1x4x16x16xf32>
    %c0_63 = arith.constant 0 : index
    %c0_64 = arith.constant 0 : index
    %c0_65 = arith.constant 0 : index
    %c0_66 = arith.constant 0 : index
    %62 = vector.load %arg3[%c0_63, %c0_64, %c0_65, %c0_66] : memref<1x4x16x16xf32, #tpu.memory_space<vmem>>, vector<1x4x16x16xf32>
    tpu.vector_store %arg3[%c0_63, %c0_64, %c0_65, %c0_66], %61 {strides = array<i32>} : memref<1x4x16x16xf32, #tpu.memory_space<vmem>>, vector<1x4x16x16xf32>,
    return
  }
  func.func @transform_0(%arg0: i32) -> (i32, i32, i32, i32) {
    %c0_i32 = arith.constant 0 : i32
    %c0_i32_0 = arith.constant 0 : i32
    %c0_i32_1 = arith.constant 0 : i32
    %c0_i32_2 = arith.constant 0 : i32
    return %arg0, %c0_i32, %c0_i32_0, %c0_i32_1 : i32, i32, i32, i32
  }
  func.func @transform_1(%arg0: i32) -> (i32, i32, i32) {
    %c0_i32 = arith.constant 0 : i32
    %c0_i32_0 = arith.constant 0 : i32
    %c0_i32_1 = arith.constant 0 : i32
    %c0_i32_2 = arith.constant 0 : i32
    return %c0_i32, %c0_i32_0, %c0_i32_1 : i32, i32, i32
  }
  func.func @transform_2(%arg0: i32) -> (i32, i32, i32, i32) {
    %c0_i32 = arith.constant 0 : i32
    %c0_i32_0 = arith.constant 0 : i32
    %c0_i32_1 = arith.constant 0 : i32
    %c0_i32_2 = arith.constant 0 : i32
    return %arg0, %c0_i32, %c0_i32_0, %c0_i32_1 : i32, i32, i32, i32
  }
}

</mosaic_0001>

<llo_original>
// kernel: tpu_custom_call.1
$region0: #{tpu_custom_call.1}
  #allocation0 [shape = 'u32[]', space=smem, size = 0x4, offset = 0x4, fixed_abs, tag = 'smem constant byte address 0x4 - core index']
  #allocation1 [shape = 'u32[144,128]{1,0:T(1,128)}', space=vmem, size = 0x12000, scoped, tag = 'internal scratch']
  #allocation2 [shape = 'f32[1,22,128]{2,1,0:T(8,128)}', space=vmem, size = 0x3000, scoped, tag = 'scratch operand']
  %s0 = inlined_call_operand.vmem [shape: f32[2,4,16,16], index: 0, kind: input, shape index: {}]
  %s1 = inlined_call_operand.vmem [shape: f32[7,128,16], index: 1, kind: input, shape index: {}]
  %s2 = inlined_call_operand.hbm [shape: f32[2,4,16,16], index: 2, kind: output, shape index: {}]
  %s3 = sld [smem:[#allocation0]]
  $region41: #{tpu_custom_call.1} parent=0
    _
  %s5 = ssub.s32 1, %s3
  %s6 = scalar_select 0, %s5, %s3
  $region1: #{tpu_custom_call.1} parent=0
    #allocation3 [shape = 'u8[65536]{0}', space=vmem, size = 0x10000, scoped, tag = 'output window, operand 0']
    #allocation4 [shape = 's32[2]{0}', space=sflag, size = 0x8, scoped, tag = 'scoped memory for tpu_custom_call.1']
    %7 = vsyncpa [#allocation4], 0
    %s8 = scalar_lea.sflag [#allocation4], 1
    %9 = vsyncpa %s8, 0
    loop: start=0, step=1, limit=4
    $region2: #{tpu_custom_call.1} parent=1 // loop_pre_header
      _
    $region3: #{tpu_custom_call.1} parent=1 // loop_header
      %s11 = sphi 0, %s15
      %p12 = scmp.ge.s32.totalorder %s11, 4
      %s21 = sphi 0, %s23
      %s24 = sphi 0, %s21
      %s25 = sphi 0, %s24
      %s41 = sphi 0, %s25
      %s45 = sphi 0, %s45
      %s47 = sphi 0, %s45
      %s48 = sphi 0, %s47
      %s62 = sphi 0, %s48
      %s68 = sphi 0, %s70
      %s71 = sphi 0, %s68
      %s72 = sphi 0, %s71
      %s88 = sphi 0, %s72
    $region4: #{tpu_custom_call.1} parent=1 // loop_header_branch
      %14 = sbr.rel (%p12) target = $region8
    $region5: #{tpu_custom_call.1} parent=1 // loop_body
      %s16 = ssub.s32 %s11, 1
      %s17 = ssub.s32 %s11, 2
      %s18 = sadd.s32 %s11, 1
      %s19 = ssub.s32 %s11, %s18
      %p20 = scmp.eq.s32.totalorder %s19, 0
      %s22 = sadd.s32 %s21, 1
      %s23 = scalar_select %p20, %s21, %s22
      %p26 = pneg %p20
      %p27 = scmp.eq.s32.totalorder %s11, 1
      %p28 = por %p26, %p27
      %p29 = scmp.ne.s32.totalorder %s21, %s24
      %p30 = scmp.eq.s32.totalorder %s11, 0
      %p31 = por %p29, %p30
      %p32 = scmp.ne.s32.totalorder %s21, %s24
      %p33 = scmp.eq.s32.totalorder %s16, 1
      %p34 = por %p32, %p33
      %p35 = scmp.ne.s32.totalorder %s24, %s25
      %p36 = scmp.eq.s32.totalorder %s16, 0
      %p37 = por %p35, %p36
      %p38 = scmp.ne.s32.totalorder %s24, %s25
      %p39 = scmp.eq.s32.totalorder %s17, 1
      %p40 = por %p38, %p39
      %p42 = scmp.ne.s32.totalorder %s25, %s41
      %p43 = scmp.eq.s32.totalorder %s17, 0
      %p44 = por %p42, %p43
      %s46 = sadd.s32 %s45, 1
      %p49 = scmp.eq.s32.totalorder %s11, 1
      %p50 = scmp.ne.s32.totalorder %s45, %s47
      %p51 = scmp.eq.s32.totalorder %s11, 0
      %p52 = por %p50, %p51
      %p53 = scmp.ne.s32.totalorder %s45, %s47
      %p54 = scmp.eq.s32.totalorder %s16, 1
      %p55 = por %p53, %p54
      %p56 = scmp.ne.s32.totalorder %s47, %s48
      %p57 = scmp.eq.s32.totalorder %s16, 0
      %p58 = por %p56, %p57
      %p59 = scmp.ne.s32.totalorder %s47, %s48
      %p60 = scmp.eq.s32.totalorder %s17, 1
      %p61 = por %p59, %p60
      %p63 = scmp.ne.s32.totalorder %s48, %s62
      %p64 = scmp.eq.s32.totalorder %s17, 0
      %p65 = por %p63, %p64
      %s66 = ssub.s32 %s11, %s18
      %p67 = scmp.eq.s32.totalorder %s66, 0
      %s69 = sadd.s32 %s68, 1
      %s70 = scalar_select %p67, %s68, %s69
      %p73 = pneg %p67
      %p74 = scmp.eq.s32.totalorder %s11, 1
      %p75 = por %p73, %p74
      %p76 = scmp.ne.s32.totalorder %s68, %s71
      %p77 = scmp.eq.s32.totalorder %s11, 0
      %p78 = por %p76, %p77
      %p79 = scmp.ne.s32.totalorder %s68, %s71
      %p80 = scmp.eq.s32.totalorder %s16, 1
      %p81 = por %p79, %p80
      %p82 = scmp.ne.s32.totalorder %s71, %s72
      %p83 = scmp.eq.s32.totalorder %s16, 0
      %p84 = por %p82, %p83
      %p85 = scmp.ne.s32.totalorder %s71, %s72
      %p86 = scmp.eq.s32.totalorder %s17, 1
      %p87 = por %p85, %p86
      %p89 = scmp.ne.s32.totalorder %s72, %s88
      %p90 = scmp.eq.s32.totalorder %s17, 0
      %p91 = por %p89, %p90
      %p92 = scmp.le.s32.totalorder 1, %s11
      %p93 = scmp.lt.s32.totalorder %s11, 3
      %p94 = pnand %p92, %p93
      %p95 = pneg %p94
      // Predicated region
      $region9: #{tpu_custom_call.1} parent=5 // pred_check
        _
      $region10: #{tpu_custom_call.1} parent=5 // pred_check_branch
        %97 = sbr.rel (%p94) target = $region12
      $region11: #{tpu_custom_call.1} parent=5 // pred_region
        %s98 = ssub.s32 %s11, 1
        // Predicated region
        $region13: #{tpu_custom_call.1} parent=11 // pred_check
          %p99 = pneg %p58
        $region14: #{tpu_custom_call.1} parent=11 // pred_check_branch
          %101 = sbr.rel (%p99) target = $region16
        $region15: #{tpu_custom_call.1} parent=11 // pred_region
          _
        $region16: #{tpu_custom_call.1} parent=11 // pred_fallthru
          _
      $region12: #{tpu_custom_call.1} parent=5 // pred_fallthru
        _
      %p102 = scmp.lt.s32.totalorder %s11, 2
      // Predicated region
      $region17: #{tpu_custom_call.1} parent=5 // pred_check
        %p103 = pneg %p102
      $region18: #{tpu_custom_call.1} parent=5 // pred_check_branch
        %105 = sbr.rel (%p103) target = $region20
      $region19: #{tpu_custom_call.1} parent=5 // pred_region
        // Predicated region
        $region21: #{tpu_custom_call.1} parent=19 // pred_check
          %p106 = pneg %p31
        $region22: #{tpu_custom_call.1} parent=19 // pred_check_branch
          %108 = sbr.rel (%p106) target = $region24
        $region23: #{tpu_custom_call.1} parent=19 // pred_region
          %p109 = scmp.lt.s32.totalorder %s11, 1
          %s110 = scalar_select %p109, %s11, 1
          %s111 = smul.addr %s110, 8
          %s112 = smul.addr %s111, 8
          %s113 = scalar_lea.vmem %s0, %s112
        $region24: #{tpu_custom_call.1} parent=19 // pred_fallthru
          _
      $region20: #{tpu_custom_call.1} parent=5 // pred_fallthru
        _
      %p114 = scmp.le.s32.totalorder 1, %s11
      %p115 = scmp.lt.s32.totalorder %s11, 3
      %p116 = pnand %p114, %p115
      %p117 = pneg %p116
      // Predicated region
      $region25: #{tpu_custom_call.1} parent=5 // pred_check
        _
      $region26: #{tpu_custom_call.1} parent=5 // pred_check_branch
        %119 = sbr.rel (%p116) target = $region28
      $region27: #{tpu_custom_call.1} parent=5 // pred_region
        %s120 = ssub.s32 %s11, 1
        %p121 = scmp.lt.s32.totalorder %s16, 1
        %s122 = scalar_select %p121, %s16, 1
        %s123 = smul.addr %s122, 8
        %s124 = smul.addr %s123, 8
        %s125 = scalar_lea.vmem %s0, %s124
        %p126 = pneg %p37
        %p127 = pneg %p34
        %p128 = pneg %p58
        %p129 = pneg %p55
        %p130 = pneg %p84
        %p131 = pneg %p81
        %s132 = sand.u32 %s71, 1
        %s133 = scalar_lea.sflag [#allocation4], %s132
        %s134 = sand.u32 %s71, 1
        %s135 = smul.addr %s134, 64
        %s136 = scalar_lea.vmem [#allocation3], %s135
        %p137 = scmp.lt.s32.totalorder %s16, 1
        %s138 = scalar_select %p137, %s16, 1
        %s139 = smul.addr %s138, 8
        %s140 = smul.addr %s139, 8
        %s141 = scalar_lea.vmem %s0, %s140
        %142 = vst [vmem:[#allocation2] sm:$0xff] 0.0
        %143 = vst [vmem:[#allocation2 + $0x8] sm:$0xff] 0.0
        %144 = vst [vmem:[#allocation2 + $0x10] sm:$0x3f] 0.0
        %v145 = vld [vmem:[%s141] sm:$0xff]
        %v146 = vld [vmem:[%s141 + $0x8] sm:$0xff]
        %v147 = vld [vmem:[%s141 + $0x10] sm:$0xff]
        %v148 = vld [vmem:[%s141 + $0x18] sm:$0xff]
        %v149 = vld [vmem:[%s141 + $0x20] sm:$0xff]
        %v150 = vld [vmem:[%s141 + $0x28] sm:$0xff]
        %v151 = vld [vmem:[%s141 + $0x30] sm:$0xff]
        %v152 = vld [vmem:[%s141 + $0x38] sm:$0xff]
        %vm153 = vcmask 130048
        %v154 = vsel %vm153, %v145, 0.0
        %v155 = vsel %vm153, %v147, 0.0
        %v156 = vadd.f32 %v154, %v155
        %v157 = vsel %vm153, %v149, 0.0
        %v158 = vadd.f32 %v156, %v157
        %v159 = vsel %vm153, %v151, 0.0
        %v160 = vadd.f32 %v158, %v159
        %v161 = vsel %vm153, %v146, 0.0
        %v162 = vsel %vm153, %v148, 0.0
        %v163 = vadd.f32 %v161, %v162
        %v164 = vsel %vm153, %v150, 0.0
        %v165 = vadd.f32 %v163, %v164
        %v166 = vsel %vm153, %v152, 0.0
        %v167 = vadd.f32 %v165, %v166
        %v168 = vmul.f32 %v160, 0.25
        %v169 = vmul.f32 %v167, 0.25
        %v170 = vsel %vm153, %v145, -inf
        %v171 = vsel %vm153, %v147, -inf
        %v172 = vsel %vm153, %v149, -inf
        %v173 = vmax.f32 %v170, %v172
        %v174 = vsel %vm153, %v151, -inf
        %v175 = vmax.f32 %v171, %v174
        %v176 = vmax.f32 %v173, %v175
        %v177 = vsel %vm153, %v146, -inf
        %v178 = vsel %vm153, %v148, -inf
        %v179 = vsel %vm153, %v150, -inf
        %v180 = vmax.f32 %v177, %v179
        %v181 = vsel %vm153, %v152, -inf
        %v182 = vmax.f32 %v178, %v181
        %v183 = vmax.f32 %v180, %v182
        %186 = vrot.lane.b32.xlu0 %v168, 3
        %v187 = vpop.permute.xlu0 %186
        %188 = vrot.lane.b32.xlu0 %v169, 3
        %v189 = vpop.permute.xlu0 %188
        %vm192 = vcmask 154648
        %193 = vst.msk [vmem:[#allocation2 + $0x3] sm:$0xff] %vm192, %v187
        %194 = vst.msk [vmem:[#allocation2 + $0xb] sm:$0xff] %vm192, %v189
        %197 = vrot.lane.b32.xlu0 %v176, 25
        %v198 = vpop.permute.xlu0 %197
        %199 = vrot.lane.b32.xlu0 %v183, 25
        %v200 = vpop.permute.xlu0 %199
        %vm203 = vcmask 335048
        %204 = vst.msk [vmem:[#allocation2 + $0x3] sm:$0xff] %vm203, %v198
        %205 = vst.msk [vmem:[#allocation2 + $0xb] sm:$0xff] %vm203, %v200
        %v206 = vld [vmem:[#allocation2] sm:$0xff]
        %v207 = vld [vmem:[#allocation2 + $0x8] sm:$0xff]
        %v208 = vld [vmem:[%s1] sm:$0xff]
        %v209 = vld [vmem:[%s1 + $0x8] sm:$0xff]
        %v210 = vld [vmem:[%s1 + $0x10] sm:$0xff]
        %v211 = vld [vmem:[%s1 + $0x18] sm:$0xff]
        %v212 = vld [vmem:[%s1 + $0x20] sm:$0xff]
        %v213 = vld [vmem:[%s1 + $0x28] sm:$0xff]
        %v214 = vld [vmem:[%s1 + $0x30] sm:$0xff]
        %v215 = vld [vmem:[%s1 + $0x38] sm:$0xff]
        %v216 = vld [vmem:[%s1 + $0x40] sm:$0xff]
        %v217 = vld [vmem:[%s1 + $0x48] sm:$0xff]
        %v218 = vld [vmem:[%s1 + $0x50] sm:$0xff]
        %v219 = vld [vmem:[%s1 + $0x58] sm:$0xff]
        %v220 = vld [vmem:[%s1 + $0x60] sm:$0xff]
        %v221 = vld [vmem:[%s1 + $0x68] sm:$0xff]
        %v222 = vld [vmem:[%s1 + $0x70] sm:$0xff]
        %v223 = vld [vmem:[%s1 + $0x78] sm:$0xff]
        %v224 = vld [vmem:[#allocation2 + $0x1] sm:$0xff]
        %v225 = vld [vmem:[#allocation2 + $0x9] sm:$0xff]
        %s226 = scalar_lea.vmem %s1, 128
        %v227 = vld [vmem:[%s226] sm:$0xff]
        %v228 = vld [vmem:[%s226 + $0x8] sm:$0xff]
        %v229 = vld [vmem:[%s226 + $0x10] sm:$0xff]
        %v230 = vld [vmem:[%s226 + $0x18] sm:$0xff]
        %v231 = vld [vmem:[%s226 + $0x20] sm:$0xff]
        %v232 = vld [vmem:[%s226 + $0x28] sm:$0xff]
        %v233 = vld [vmem:[%s226 + $0x30] sm:$0xff]
        %v234 = vld [vmem:[%s226 + $0x38] sm:$0xff]
        %v235 = vld [vmem:[%s226 + $0x40] sm:$0xff]
        %v236 = vld [vmem:[%s226 + $0x48] sm:$0xff]
        %v237 = vld [vmem:[%s226 + $0x50] sm:$0xff]
        %v238 = vld [vmem:[%s226 + $0x58] sm:$0xff]
        %v239 = vld [vmem:[%s226 + $0x60] sm:$0xff]
        %v240 = vld [vmem:[%s226 + $0x68] sm:$0xff]
        %v241 = vld [vmem:[%s226 + $0x70] sm:$0xff]
        %v242 = vld [vmem:[%s226 + $0x78] sm:$0xff]
        %243 = vmatprep.subr.mxu0 0.0
        %v244 = vand.u32 %v227, 4294901760
        %245 = vmatpush1.msra.mxu0 %v244
        %246 = vmatprep.subr.mxu0 0.0
        %v247 = vand.u32 %v228, 4294901760
        %248 = vmatpush1.msra.mxu0 %v247
        %249 = vmatprep.subr.mxu0 0.0
        %v250 = vand.u32 %v229, 4294901760
        %251 = vmatpush1.msra.mxu0 %v250
        %252 = vmatprep.subr.mxu0 0.0
        %v253 = vand.u32 %v230, 4294901760
        %254 = vmatpush1.msra.mxu0 %v253
        %255 = vmatprep.subr.mxu0 0.0
        %v256 = vand.u32 %v231, 4294901760
        %257 = vmatpush1.msra.mxu0 %v256
        %258 = vmatprep.subr.mxu0 0.0
        %v259 = vand.u32 %v232, 4294901760
        %260 = vmatpush1.msra.mxu0 %v259
        %261 = vmatprep.subr.mxu0 0.0
        %v262 = vand.u32 %v233, 4294901760
        %263 = vmatpush1.msra.mxu0 %v262
        %264 = vmatprep.subr.mxu0 0.0
        %v265 = vand.u32 %v234, 4294901760
        %266 = vmatpush1.msra.mxu0 %v265
        %267 = vmatprep.subr.mxu0 0.0
        %v268 = vand.u32 %v235, 4294901760
        %269 = vmatpush1.msra.mxu0 %v268
        %270 = vmatprep.subr.mxu0 0.0
        %v271 = vand.u32 %v236, 4294901760
        %272 = vmatpush1.msra.mxu0 %v271
        %273 = vmatprep.subr.mxu0 0.0
        %v274 = vand.u32 %v237, 4294901760
        %275 = vmatpush1.msra.mxu0 %v274
        %276 = vmatprep.subr.mxu0 0.0
        %v277 = vand.u32 %v238, 4294901760
        %278 = vmatpush1.msra.mxu0 %v277
        %279 = vmatprep.subr.mxu0 0.0
        %v280 = vand.u32 %v239, 4294901760
        %281 = vmatpush1.msra.mxu0 %v280
        %282 = vmatprep.subr.mxu0 0.0
        %v283 = vand.u32 %v240, 4294901760
        %284 = vmatpush1.msra.mxu0 %v283
        %285 = vmatprep.subr.mxu0 0.0
        %v286 = vand.u32 %v241, 4294901760
        %287 = vmatpush1.msra.mxu0 %v286
        %288 = vmatprep.subr.mxu0 0.0
        %v289 = vand.u32 %v242, 4294901760
        %290 = vmatpush1.msra.mxu0 %v289
        %291 = vmatprep.subr.mxu0 0.0
        %292 = vmatpush1.msra.mxu0 0.0
        %293 = vmatprep.subr.mxu0 0.0
        %294 = vmatpush1.msra.mxu0 0.0
        %295 = vmatprep.subr.mxu0 0.0
        %296 = vmatpush1.msra.mxu0 0.0
        %297 = vmatprep.subr.mxu0 0.0
        %298 = vmatpush1.msra.mxu0 0.0
        %299 = vmatprep.subr.mxu0 0.0
        %300 = vmatpush1.msra.mxu0 0.0
        %301 = vmatprep.subr.mxu0 0.0
        %302 = vmatpush1.msra.mxu0 0.0
        %303 = vmatprep.subr.mxu0 0.0
        %304 = vmatpush1.msra.mxu0 0.0
        %305 = vmatprep.subr.mxu0 0.0
        %306 = vmatpush1.msra.mxu0 0.0
        %307 = vmatprep.subr.mxu0 0.0
        %308 = vmatpush1.msra.mxu0 0.0
        %309 = vmatprep.subr.mxu0 0.0
        %310 = vmatpush1.msra.mxu0 0.0
        %311 = vmatprep.subr.mxu0 0.0
        %312 = vmatpush1.msra.mxu0 0.0
        %313 = vmatprep.subr.mxu0 0.0
        %314 = vmatpush1.msra.mxu0 0.0
        %315 = vmatprep.subr.mxu0 0.0
        %316 = vmatpush1.msra.mxu0 0.0
        %317 = vmatprep.subr.mxu0 0.0
        %318 = vmatpush1.msra.mxu0 0.0
        %319 = vmatprep.subr.mxu0 0.0
        %320 = vmatpush1.msra.mxu0 0.0
        %321 = vmatprep.subr.mxu0 0.0
        %322 = vmatpush1.msra.mxu0 0.0
        %323 = vmatprep.mubr.f32.mxu0 0.0
        %v324 = vand.u32 %v224, 4294901760
        %v325 = vsub.f32 %v224, %v324
        %v326 = vand.u32 %v325, 4294901760
        %v327 = vsub.f32 %v325, %v326
        %v328 = vand.u32 %v327, 4294901760
        %329 = vmatmul.mubr.f32.gmra.mrb[0].mxu0 %v328
        %v330 = vpop.f32.mrb[0].mxu0
        %v331 = vadd.f32 0.0, %v330
        %v332 = vpop.f32.mrb[0].mxu0
        %333 = vmatprep.mubr.f32.mxu0 0.0
        %v334 = vand.u32 %v225, 4294901760
        %v335 = vsub.f32 %v225, %v334
        %v336 = vand.u32 %v335, 4294901760
        %v337 = vsub.f32 %v335, %v336
        %v338 = vand.u32 %v337, 4294901760
        %339 = vmatmul.mubr.f32.gmra.mrb[0].mxu0 %v338
        %v340 = vpop.f32.mrb[0].mxu0
        %v341 = vadd.f32 0.0, %v340
        %v342 = vpop.f32.mrb[0].mxu0
        %343 = vdwg.mxu0
        %344 = vmatprep.subr.mxu0 0.0
        %v345 = vand.u32 %v227, 4294901760
        %v346 = vsub.f32 %v227, %v345
        %v347 = vand.u32 %v346, 4294901760
        %v348 = vsub.f32 %v346, %v347
        %v349 = vand.u32 %v348, 4294901760
        %350 = vmatpush1.msra.mxu0 %v349
        %351 = vmatprep.subr.mxu0 0.0
        %v352 = vand.u32 %v228, 4294901760
        %v353 = vsub.f32 %v228, %v352
        %v354 = vand.u32 %v353, 4294901760
        %v355 = vsub.f32 %v353, %v354
        %v356 = vand.u32 %v355, 4294901760
        %357 = vmatpush1.msra.mxu0 %v356
        %358 = vmatprep.subr.mxu0 0.0
        %v359 = vand.u32 %v229, 4294901760
        %v360 = vsub.f32 %v229, %v359
        %v361 = vand.u32 %v360, 4294901760
        %v362 = vsub.f32 %v360, %v361
        %v363 = vand.u32 %v362, 4294901760
        %364 = vmatpush1.msra.mxu0 %v363
        %365 = vmatprep.subr.mxu0 0.0
        %v366 = vand.u32 %v230, 4294901760
        %v367 = vsub.f32 %v230, %v366
        %v368 = vand.u32 %v367, 4294901760
        %v369 = vsub.f32 %v367, %v368
        %v370 = vand.u32 %v369, 4294901760
        %371 = vmatpush1.msra.mxu0 %v370
        %372 = vmatprep.subr.mxu0 0.0
        %v373 = vand.u32 %v231, 4294901760
        %v374 = vsub.f32 %v231, %v373
        %v375 = vand.u32 %v374, 4294901760
        %v376 = vsub.f32 %v374, %v375
        %v377 = vand.u32 %v376, 4294901760
        %378 = vmatpush1.msra.mxu0 %v377
        %379 = vmatprep.subr.mxu0 0.0
        %v380 = vand.u32 %v232, 4294901760
        %v381 = vsub.f32 %v232, %v380
        %v382 = vand.u32 %v381, 4294901760
        %v383 = vsub.f32 %v381, %v382
        %v384 = vand.u32 %v383, 4294901760
        %385 = vmatpush1.msra.mxu0 %v384
        %386 = vmatprep.subr.mxu0 0.0
        %v387 = vand.u32 %v233, 4294901760
        %v388 = vsub.f32 %v233, %v387
        %v389 = vand.u32 %v388, 4294901760
        %v390 = vsub.f32 %v388, %v389
        %v391 = vand.u32 %v390, 4294901760
        %392 = vmatpush1.msra.mxu0 %v391
        %393 = vmatprep.subr.mxu0 0.0
        %v394 = vand.u32 %v234, 4294901760
        %v395 = vsub.f32 %v234, %v394
        %v396 = vand.u32 %v395, 4294901760
        %v397 = vsub.f32 %v395, %v396
        %v398 = vand.u32 %v397, 4294901760
        %399 = vmatpush1.msra.mxu0 %v398
        %400 = vmatprep.subr.mxu0 0.0
        %v401 = vand.u32 %v235, 4294901760
        %v402 = vsub.f32 %v235, %v401
        %v403 = vand.u32 %v402, 4294901760
        %v404 = vsub.f32 %v402, %v403
        %v405 = vand.u32 %v404, 4294901760
        %406 = vmatpush1.msra.mxu0 %v405
        %407 = vmatprep.subr.mxu0 0.0
        %v408 = vand.u32 %v236, 4294901760
        %v409 = vsub.f32 %v236, %v408
        %v410 = vand.u32 %v409, 4294901760
        %v411 = vsub.f32 %v409, %v410
        %v412 = vand.u32 %v411, 4294901760
        %413 = vmatpush1.msra.mxu0 %v412
        %414 = vmatprep.subr.mxu0 0.0
        %v415 = vand.u32 %v237, 4294901760
        %v416 = vsub.f32 %v237, %v415
        %v417 = vand.u32 %v416, 4294901760
        %v418 = vsub.f32 %v416, %v417
        %v419 = vand.u32 %v418, 4294901760
        %420 = vmatpush1.msra.mxu0 %v419
        %421 = vmatprep.subr.mxu0 0.0
        %v422 = vand.u32 %v238, 4294901760
        %v423 = vsub.f32 %v238, %v422
        %v424 = vand.u32 %v423, 4294901760
        %v425 = vsub.f32 %v423, %v424
        %v426 = vand.u32 %v425, 4294901760
        %427 = vmatpush1.msra.mxu0 %v426
        %428 = vmatprep.subr.mxu0 0.0
        %v429 = vand.u32 %v239, 4294901760
        %v430 = vsub.f32 %v239, %v429
        %v431 = vand.u32 %v430, 4294901760
        %v432 = vsub.f32 %v430, %v431
        %v433 = vand.u32 %v432, 4294901760
        %434 = vmatpush1.msra.mxu0 %v433
        %435 = vmatprep.subr.mxu0 0.0
        %v436 = vand.u32 %v240, 4294901760
        %v437 = vsub.f32 %v240, %v436
        %v438 = vand.u32 %v437, 4294901760
        %v439 = vsub.f32 %v437, %v438
        %v440 = vand.u32 %v439, 4294901760
        %441 = vmatpush1.msra.mxu0 %v440
        %442 = vmatprep.subr.mxu0 0.0
        %v443 = vand.u32 %v241, 4294901760
        %v444 = vsub.f32 %v241, %v443
        %v445 = vand.u32 %v444, 4294901760
        %v446 = vsub.f32 %v444, %v445
        %v447 = vand.u32 %v446, 4294901760
        %448 = vmatpush1.msra.mxu0 %v447
        %449 = vmatprep.subr.mxu0 0.0
        %v450 = vand.u32 %v242, 4294901760
        %v451 = vsub.f32 %v242, %v450
        %v452 = vand.u32 %v451, 4294901760
        %v453 = vsub.f32 %v451, %v452
        %v454 = vand.u32 %v453, 4294901760
        %455 = vmatpush1.msra.mxu0 %v454
        %456 = vmatprep.subr.mxu0 0.0
        %457 = vmatpush1.msra.mxu0 0.0
        %458 = vmatprep.subr.mxu0 0.0
        %459 = vmatpush1.msra.mxu0 0.0
        %460 = vmatprep.subr.mxu0 0.0
        %461 = vmatpush1.msra.mxu0 0.0
        %462 = vmatprep.subr.mxu0 0.0
        %463 = vmatpush1.msra.mxu0 0.0
        %464 = vmatprep.subr.mxu0 0.0
        %465 = vmatpush1.msra.mxu0 0.0
        %466 = vmatprep.subr.mxu0 0.0
        %467 = vmatpush1.msra.mxu0 0.0
        %468 = vmatprep.subr.mxu0 0.0
        %469 = vmatpush1.msra.mxu0 0.0
        %470 = vmatprep.subr.mxu0 0.0
        %471 = vmatpush1.msra.mxu0 0.0
        %472 = vmatprep.subr.mxu0 0.0
        %473 = vmatpush1.msra.mxu0 0.0
        %474 = vmatprep.subr.mxu0 0.0
        %475 = vmatpush1.msra.mxu0 0.0
        %476 = vmatprep.subr.mxu0 0.0
        %477 = vmatpush1.msra.mxu0 0.0
        %478 = vmatprep.subr.mxu0 0.0
        %479 = vmatpush1.msra.mxu0 0.0
        %480 = vmatprep.subr.mxu0 0.0
        %481 = vmatpush1.msra.mxu0 0.0
        %482 = vmatprep.subr.mxu0 0.0
        %483 = vmatpush1.msra.mxu0 0.0
        %484 = vmatprep.subr.mxu0 0.0
        %485 = vmatpush1.msra.mxu0 0.0
        %486 = vmatprep.subr.mxu0 0.0
        %487 = vmatpush1.msra.mxu0 0.0
        %488 = vmatprep.mubr.f32.mxu0 0.0
        %v489 = vand.u32 %v224, 4294901760
        %490 = vmatmul.mubr.f32.gmra.mrb[0].mxu0 %v489
        %v491 = vpop.f32.mrb[0].mxu0
        %v492 = vadd.f32 %v331, %v491
        %v493 = vpop.f32.mrb[0].mxu0
        %494 = vmatprep.mubr.f32.mxu0 0.0
        %v495 = vand.u32 %v225, 4294901760
        %496 = vmatmul.mubr.f32.gmra.mrb[0].mxu0 %v495
        %v497 = vpop.f32.mrb[0].mxu0
        %v498 = vadd.f32 %v341, %v497
        %v499 = vpop.f32.mrb[0].mxu0
        %500 = vdwg.mxu0
        %501 = vmatprep.subr.mxu0 0.0
        %v502 = vand.u32 %v227, 4294901760
        %v503 = vsub.f32 %v227, %v502
        %504 = vmatpush1.msra.mxu0 %v503
        %505 = vmatprep.subr.mxu0 0.0
        %v506 = vand.u32 %v228, 4294901760
        %v507 = vsub.f32 %v228, %v506
        %508 = vmatpush1.msra.mxu0 %v507
        %509 = vmatprep.subr.mxu0 0.0
        %v510 = vand.u32 %v229, 4294901760
        %v511 = vsub.f32 %v229, %v510
        %512 = vmatpush1.msra.mxu0 %v511
        %513 = vmatprep.subr.mxu0 0.0
        %v514 = vand.u32 %v230, 4294901760
        %v515 = vsub.f32 %v230, %v514
        %516 = vmatpush1.msra.mxu0 %v515
        %517 = vmatprep.subr.mxu0 0.0
        %v518 = vand.u32 %v231, 4294901760
        %v519 = vsub.f32 %v231, %v518
        %520 = vmatpush1.msra.mxu0 %v519
        %521 = vmatprep.subr.mxu0 0.0
        %v522 = vand.u32 %v232, 4294901760
        %v523 = vsub.f32 %v232, %v522
        %524 = vmatpush1.msra.mxu0 %v523
        %525 = vmatprep.subr.mxu0 0.0
        %v526 = vand.u32 %v233, 4294901760
        %v527 = vsub.f32 %v233, %v526
        %528 = vmatpush1.msra.mxu0 %v527
        %529 = vmatprep.subr.mxu0 0.0
        %v530 = vand.u32 %v234, 4294901760
        %v531 = vsub.f32 %v234, %v530
        %532 = vmatpush1.msra.mxu0 %v531
        %533 = vmatprep.subr.mxu0 0.0
        %v534 = vand.u32 %v235, 4294901760
        %v535 = vsub.f32 %v235, %v534
        %536 = vmatpush1.msra.mxu0 %v535
        %537 = vmatprep.subr.mxu0 0.0
        %v538 = vand.u32 %v236, 4294901760
        %v539 = vsub.f32 %v236, %v538
        %540 = vmatpush1.msra.mxu0 %v539
        %541 = vmatprep.subr.mxu0 0.0
        %v542 = vand.u32 %v237, 4294901760
        %v543 = vsub.f32 %v237, %v542
        %544 = vmatpush1.msra.mxu0 %v543
        %545 = vmatprep.subr.mxu0 0.0
        %v546 = vand.u32 %v238, 4294901760
        %v547 = vsub.f32 %v238, %v546
        %548 = vmatpush1.msra.mxu0 %v547
        %549 = vmatprep.subr.mxu0 0.0
        %v550 = vand.u32 %v239, 4294901760
        %v551 = vsub.f32 %v239, %v550
        %552 = vmatpush1.msra.mxu0 %v551
        %553 = vmatprep.subr.mxu0 0.0
        %v554 = vand.u32 %v240, 4294901760
        %v555 = vsub.f32 %v240, %v554
        %556 = vmatpush1.msra.mxu0 %v555
        %557 = vmatprep.subr.mxu0 0.0
        %v558 = vand.u32 %v241, 4294901760
        %v559 = vsub.f32 %v241, %v558
        %560 = vmatpush1.msra.mxu0 %v559
        %561 = vmatprep.subr.mxu0 0.0
        %v562 = vand.u32 %v242, 4294901760
        %v563 = vsub.f32 %v242, %v562
        %564 = vmatpush1.msra.mxu0 %v563
        %565 = vmatprep.subr.mxu0 0.0
        %566 = vmatpush1.msra.mxu0 0.0
        %567 = vmatprep.subr.mxu0 0.0
        %568 = vmatpush1.msra.mxu0 0.0
        %569 = vmatprep.subr.mxu0 0.0
        %570 = vmatpush1.msra.mxu0 0.0
        %571 = vmatprep.subr.mxu0 0.0
        %572 = vmatpush1.msra.mxu0 0.0
        %573 = vmatprep.subr.mxu0 0.0
        %574 = vmatpush1.msra.mxu0 0.0
        %575 = vmatprep.subr.mxu0 0.0
        %576 = vmatpush1.msra.mxu0 0.0
        %577 = vmatprep.subr.mxu0 0.0
        %578 = vmatpush1.msra.mxu0 0.0
        %579 = vmatprep.subr.mxu0 0.0
        %580 = vmatpush1.msra.mxu0 0.0
        %581 = vmatprep.subr.mxu0 0.0
        %582 = vmatpush1.msra.mxu0 0.0
        %583 = vmatprep.subr.mxu0 0.0
        %584 = vmatpush1.msra.mxu0 0.0
        %585 = vmatprep.subr.mxu0 0.0
        %586 = vmatpush1.msra.mxu0 0.0
        %587 = vmatprep.subr.mxu0 0.0
        %588 = vmatpush1.msra.mxu0 0.0
        %589 = vmatprep.subr.mxu0 0.0
        %590 = vmatpush1.msra.mxu0 0.0
        %591 = vmatprep.subr.mxu0 0.0
        %592 = vmatpush1.msra.mxu0 0.0
        %593 = vmatprep.subr.mxu0 0.0
        %594 = vmatpush1.msra.mxu0 0.0
        %595 = vmatprep.subr.mxu0 0.0
        %596 = vmatpush1.msra.mxu0 0.0
        %597 = vmatprep.mubr.f32.mxu0 0.0
        %v598 = vand.u32 %v224, 4294901760
        %v599 = vsub.f32 %v224, %v598
        %600 = vmatmul.mubr.f32.gmra.mrb[0].mxu0 %v599
        %v601 = vpop.f32.mrb[0].mxu0
        %v602 = vadd.f32 %v492, %v601
        %v603 = vpop.f32.mrb[0].mxu0
        %604 = vmatprep.mubr.f32.mxu0 0.0
        %v605 = vand.u32 %v225, 4294901760
        %v606 = vsub.f32 %v225, %v605
        %607 = vmatmul.mubr.f32.gmra.mrb[0].mxu0 %v606
        %v608 = vpop.f32.mrb[0].mxu0
        %v609 = vadd.f32 %v498, %v608
        %v610 = vpop.f32.mrb[0].mxu0
        %611 = vdwg.mxu0
        %612 = vmatprep.subr.mxu0 0.0
        %v613 = vand.u32 %v227, 4294901760
        %614 = vmatpush1.msra.mxu0 %v613
        %615 = vmatprep.subr.mxu0 0.0
        %v616 = vand.u32 %v228, 4294901760
        %617 = vmatpush1.msra.mxu0 %v616
        %618 = vmatprep.subr.mxu0 0.0
        %v619 = vand.u32 %v229, 4294901760
        %620 = vmatpush1.msra.mxu0 %v619
        %621 = vmatprep.subr.mxu0 0.0
        %v622 = vand.u32 %v230, 4294901760
        %623 = vmatpush1.msra.mxu0 %v622
        %624 = vmatprep.subr.mxu0 0.0
        %v625 = vand.u32 %v231, 4294901760
        %626 = vmatpush1.msra.mxu0 %v625
        %627 = vmatprep.subr.mxu0 0.0
        %v628 = vand.u32 %v232, 4294901760
        %629 = vmatpush1.msra.mxu0 %v628
        %630 = vmatprep.subr.mxu0 0.0
        %v631 = vand.u32 %v233, 4294901760
        %632 = vmatpush1.msra.mxu0 %v631
        %633 = vmatprep.subr.mxu0 0.0
        %v634 = vand.u32 %v234, 4294901760
        %635 = vmatpush1.msra.mxu0 %v634
        %636 = vmatprep.subr.mxu0 0.0
        %v637 = vand.u32 %v235, 4294901760
        %638 = vmatpush1.msra.mxu0 %v637
        %639 = vmatprep.subr.mxu0 0.0
        %v640 = vand.u32 %v236, 4294901760
        %641 = vmatpush1.msra.mxu0 %v640
        %642 = vmatprep.subr.mxu0 0.0
        %v643 = vand.u32 %v237, 4294901760
        %644 = vmatpush1.msra.mxu0 %v643
        %645 = vmatprep.subr.mxu0 0.0
        %v646 = vand.u32 %v238, 4294901760
        %647 = vmatpush1.msra.mxu0 %v646
        %648 = vmatprep.subr.mxu0 0.0
        %v649 = vand.u32 %v239, 4294901760
        %650 = vmatpush1.msra.mxu0 %v649
        %651 = vmatprep.subr.mxu0 0.0
        %v652 = vand.u32 %v240, 4294901760
        %653 = vmatpush1.msra.mxu0 %v652
        %654 = vmatprep.subr.mxu0 0.0
        %v655 = vand.u32 %v241, 4294901760
        %656 = vmatpush1.msra.mxu0 %v655
        %657 = vmatprep.subr.mxu0 0.0
        %v658 = vand.u32 %v242, 4294901760
        %659 = vmatpush1.msra.mxu0 %v658
        %660 = vmatprep.subr.mxu0 0.0
        %661 = vmatpush1.msra.mxu0 0.0
        %662 = vmatprep.subr.mxu0 0.0
        %663 = vmatpush1.msra.mxu0 0.0
        %664 = vmatprep.subr.mxu0 0.0
        %665 = vmatpush1.msra.mxu0 0.0
        %666 = vmatprep.subr.mxu0 0.0
        %667 = vmatpush1.msra.mxu0 0.0
        %668 = vmatprep.subr.mxu0 0.0
        %669 = vmatpush1.msra.mxu0 0.0
        %670 = vmatprep.subr.mxu0 0.0
        %671 = vmatpush1.msra.mxu0 0.0
        %672 = vmatprep.subr.mxu0 0.0
        %673 = vmatpush1.msra.mxu0 0.0
        %674 = vmatprep.subr.mxu0 0.0
        %675 = vmatpush1.msra.mxu0 0.0
        %676 = vmatprep.subr.mxu0 0.0
        %677 = vmatpush1.msra.mxu0 0.0
        %678 = vmatprep.subr.mxu0 0.0
        %679 = vmatpush1.msra.mxu0 0.0
        %680 = vmatprep.subr.mxu0 0.0
        %681 = vmatpush1.msra.mxu0 0.0
        %682 = vmatprep.subr.mxu0 0.0
        %683 = vmatpush1.msra.mxu0 0.0
        %684 = vmatprep.subr.mxu0 0.0
        %685 = vmatpush1.msra.mxu0 0.0
        %686 = vmatprep.subr.mxu0 0.0
        %687 = vmatpush1.msra.mxu0 0.0
        %688 = vmatprep.subr.mxu0 0.0
        %689 = vmatpush1.msra.mxu0 0.0
        %690 = vmatprep.subr.mxu0 0.0
        %691 = vmatpush1.msra.mxu0 0.0
        %692 = vmatprep.mubr.f32.mxu0 0.0
        %v693 = vand.u32 %v224, 4294901760
        %v694 = vsub.f32 %v224, %v693
        %v695 = vand.u32 %v694, 4294901760
        %696 = vmatmul.mubr.f32.gmra.mrb[0].mxu0 %v695
        %v697 = vpop.f32.mrb[0].mxu0
        %v698 = vadd.f32 %v602, %v697
        %v699 = vpop.f32.mrb[0].mxu0
        %700 = vmatprep.mubr.f32.mxu0 0.0
        %v701 = vand.u32 %v225, 4294901760
        %v702 = vsub.f32 %v225, %v701
        %v703 = vand.u32 %v702, 4294901760
        %704 = vmatmul.mubr.f32.gmra.mrb[0].mxu0 %v703
        %v705 = vpop.f32.mrb[0].mxu0
        %v706 = vadd.f32 %v609, %v705
        %v707 = vpop.f32.mrb[0].mxu0
        %708 = vdwg.mxu0
        %709 = vmatprep.subr.mxu0 0.0
        %v710 = vand.u32 %v227, 4294901760
        %v711 = vsub.f32 %v227, %v710
        %v712 = vand.u32 %v711, 4294901760
        %713 = vmatpush1.msra.mxu0 %v712
        %714 = vmatprep.subr.mxu0 0.0
        %v715 = vand.u32 %v228, 4294901760
        %v716 = vsub.f32 %v228, %v715
        %v717 = vand.u32 %v716, 4294901760
        %718 = vmatpush1.msra.mxu0 %v717
        %719 = vmatprep.subr.mxu0 0.0
        %v720 = vand.u32 %v229, 4294901760
        %v721 = vsub.f32 %v229, %v720
        %v722 = vand.u32 %v721, 4294901760
        %723 = vmatpush1.msra.mxu0 %v722
        %724 = vmatprep.subr.mxu0 0.0
        %v725 = vand.u32 %v230, 4294901760
        %v726 = vsub.f32 %v230, %v725
        %v727 = vand.u32 %v726, 4294901760
        %728 = vmatpush1.msra.mxu0 %v727
        %729 = vmatprep.subr.mxu0 0.0
        %v730 = vand.u32 %v231, 4294901760
        %v731 = vsub.f32 %v231, %v730
        %v732 = vand.u32 %v731, 4294901760
        %733 = vmatpush1.msra.mxu0 %v732
        %734 = vmatprep.subr.mxu0 0.0
        %v735 = vand.u32 %v232, 4294901760
        %v736 = vsub.f32 %v232, %v735
        %v737 = vand.u32 %v736, 4294901760
        %738 = vmatpush1.msra.mxu0 %v737
        %739 = vmatprep.subr.mxu0 0.0
        %v740 = vand.u32 %v233, 4294901760
        %v741 = vsub.f32 %v233, %v740
        %v742 = vand.u32 %v741, 4294901760
        %743 = vmatpush1.msra.mxu0 %v742
        %744 = vmatprep.subr.mxu0 0.0
        %v745 = vand.u32 %v234, 4294901760
        %v746 = vsub.f32 %v234, %v745
        %v747 = vand.u32 %v746, 4294901760
        %748 = vmatpush1.msra.mxu0 %v747
        %749 = vmatprep.subr.mxu0 0.0
        %v750 = vand.u32 %v235, 4294901760
        %v751 = vsub.f32 %v235, %v750
        %v752 = vand.u32 %v751, 4294901760
        %753 = vmatpush1.msra.mxu0 %v752
        %754 = vmatprep.subr.mxu0 0.0
        %v755 = vand.u32 %v236, 4294901760
        %v756 = vsub.f32 %v236, %v755
        %v757 = vand.u32 %v756, 4294901760
        %758 = vmatpush1.msra.mxu0 %v757
        %759 = vmatprep.subr.mxu0 0.0
        %v760 = vand.u32 %v237, 4294901760
        %v761 = vsub.f32 %v237, %v760
        %v762 = vand.u32 %v761, 4294901760
        %763 = vmatpush1.msra.mxu0 %v762
        %764 = vmatprep.subr.mxu0 0.0
        %v765 = vand.u32 %v238, 4294901760
        %v766 = vsub.f32 %v238, %v765
        %v767 = vand.u32 %v766, 4294901760
        %768 = vmatpush1.msra.mxu0 %v767
        %769 = vmatprep.subr.mxu0 0.0
        %v770 = vand.u32 %v239, 4294901760
        %v771 = vsub.f32 %v239, %v770
        %v772 = vand.u32 %v771, 4294901760
        %773 = vmatpush1.msra.mxu0 %v772
        %774 = vmatprep.subr.mxu0 0.0
        %v775 = vand.u32 %v240, 4294901760
        %v776 = vsub.f32 %v240, %v775
        %v777 = vand.u32 %v776, 4294901760
        %778 = vmatpush1.msra.mxu0 %v777
        %779 = vmatprep.subr.mxu0 0.0
        %v780 = vand.u32 %v241, 4294901760
        %v781 = vsub.f32 %v241, %v780
        %v782 = vand.u32 %v781, 4294901760
        %783 = vmatpush1.msra.mxu0 %v782
        %784 = vmatprep.subr.mxu0 0.0
        %v785 = vand.u32 %v242, 4294901760
        %v786 = vsub.f32 %v242, %v785
        %v787 = vand.u32 %v786, 4294901760
        %788 = vmatpush1.msra.mxu0 %v787
        %789 = vmatprep.subr.mxu0 0.0
        %790 = vmatpush1.msra.mxu0 0.0
        %791 = vmatprep.subr.mxu0 0.0
        %792 = vmatpush1.msra.mxu0 0.0
        %793 = vmatprep.subr.mxu0 0.0
        %794 = vmatpush1.msra.mxu0 0.0
        %795 = vmatprep.subr.mxu0 0.0
        %796 = vmatpush1.msra.mxu0 0.0
        %797 = vmatprep.subr.mxu0 0.0
        %798 = vmatpush1.msra.mxu0 0.0
        %799 = vmatprep.subr.mxu0 0.0
        %800 = vmatpush1.msra.mxu0 0.0
        %801 = vmatprep.subr.mxu0 0.0
        %802 = vmatpush1.msra.mxu0 0.0
        %803 = vmatprep.subr.mxu0 0.0
        %804 = vmatpush1.msra.mxu0 0.0
        %805 = vmatprep.subr.mxu0 0.0
        %806 = vmatpush1.msra.mxu0 0.0
        %807 = vmatprep.subr.mxu0 0.0
        %808 = vmatpush1.msra.mxu0 0.0
        %809 = vmatprep.subr.mxu0 0.0
        %810 = vmatpush1.msra.mxu0 0.0
        %811 = vmatprep.subr.mxu0 0.0
        %812 = vmatpush1.msra.mxu0 0.0
        %813 = vmatprep.subr.mxu0 0.0
        %814 = vmatpush1.msra.mxu0 0.0
        %815 = vmatprep.subr.mxu0 0.0
        %816 = vmatpush1.msra.mxu0 0.0
        %817 = vmatprep.subr.mxu0 0.0
        %818 = vmatpush1.msra.mxu0 0.0
        %819 = vmatprep.subr.mxu0 0.0
        %820 = vmatpush1.msra.mxu0 0.0
        %821 = vmatprep.mubr.f32.mxu0 0.0
        %v822 = vand.u32 %v224, 4294901760
        %823 = vmatmul.mubr.f32.gmra.mrb[0].mxu0 %v822
        %v824 = vpop.f32.mrb[0].mxu0
        %v825 = vadd.f32 %v698, %v824
        %v826 = vpop.f32.mrb[0].mxu0
        %827 = vmatprep.mubr.f32.mxu0 0.0
        %v828 = vand.u32 %v225, 4294901760
        %829 = vmatmul.mubr.f32.gmra.mrb[0].mxu0 %v828
        %v830 = vpop.f32.mrb[0].mxu0
        %v831 = vadd.f32 %v706, %v830
        %v832 = vpop.f32.mrb[0].mxu0
        %833 = vdwg.mxu0
        %834 = vmatprep.subr.mxu0 0.0
        %v835 = vand.u32 %v227, 4294901760
        %836 = vmatpush1.msra.mxu0 %v835
        %837 = vmatprep.subr.mxu0 0.0
        %v838 = vand.u32 %v228, 4294901760
        %839 = vmatpush1.msra.mxu0 %v838
        %840 = vmatprep.subr.mxu0 0.0
        %v841 = vand.u32 %v229, 4294901760
        %842 = vmatpush1.msra.mxu0 %v841
        %843 = vmatprep.subr.mxu0 0.0
        %v844 = vand.u32 %v230, 4294901760
        %845 = vmatpush1.msra.mxu0 %v844
        %846 = vmatprep.subr.mxu0 0.0
        %v847 = vand.u32 %v231, 4294901760
        %848 = vmatpush1.msra.mxu0 %v847
        %849 = vmatprep.subr.mxu0 0.0
        %v850 = vand.u32 %v232, 4294901760
        %851 = vmatpush1.msra.mxu0 %v850
        %852 = vmatprep.subr.mxu0 0.0
        %v853 = vand.u32 %v233, 4294901760
        %854 = vmatpush1.msra.mxu0 %v853
        %855 = vmatprep.subr.mxu0 0.0
        %v856 = vand.u32 %v234, 4294901760
        %857 = vmatpush1.msra.mxu0 %v856
        %858 = vmatprep.subr.mxu0 0.0
        %v859 = vand.u32 %v235, 4294901760
        %860 = vmatpush1.msra.mxu0 %v859
        %861 = vmatprep.subr.mxu0 0.0
        %v862 = vand.u32 %v236, 4294901760
        %863 = vmatpush1.msra.mxu0 %v862
        %864 = vmatprep.subr.mxu0 0.0
        %v865 = vand.u32 %v237, 4294901760
        %866 = vmatpush1.msra.mxu0 %v865
        %867 = vmatprep.subr.mxu0 0.0
        %v868 = vand.u32 %v238, 4294901760
        %869 = vmatpush1.msra.mxu0 %v868
        %870 = vmatprep.subr.mxu0 0.0
        %v871 = vand.u32 %v239, 4294901760
        %872 = vmatpush1.msra.mxu0 %v871
        %873 = vmatprep.subr.mxu0 0.0
        %v874 = vand.u32 %v240, 4294901760
        %875 = vmatpush1.msra.mxu0 %v874
        %876 = vmatprep.subr.mxu0 0.0
        %v877 = vand.u32 %v241, 4294901760
        %878 = vmatpush1.msra.mxu0 %v877
        %879 = vmatprep.subr.mxu0 0.0
        %v880 = vand.u32 %v242, 4294901760
        %881 = vmatpush1.msra.mxu0 %v880
        %882 = vmatprep.subr.mxu0 0.0
        %883 = vmatpush1.msra.mxu0 0.0
        %884 = vmatprep.subr.mxu0 0.0
        %885 = vmatpush1.msra.mxu0 0.0
        %886 = vmatprep.subr.mxu0 0.0
        %887 = vmatpush1.msra.mxu0 0.0
        %888 = vmatprep.subr.mxu0 0.0
        %889 = vmatpush1.msra.mxu0 0.0
        %890 = vmatprep.subr.mxu0 0.0
        %891 = vmatpush1.msra.mxu0 0.0
        %892 = vmatprep.subr.mxu0 0.0
        %893 = vmatpush1.msra.mxu0 0.0
        %894 = vmatprep.subr.mxu0 0.0
        %895 = vmatpush1.msra.mxu0 0.0
        %896 = vmatprep.subr.mxu0 0.0
        %897 = vmatpush1.msra.mxu0 0.0
        %898 = vmatprep.subr.mxu0 0.0
        %899 = vmatpush1.msra.mxu0 0.0
        %900 = vmatprep.subr.mxu0 0.0
        %901 = vmatpush1.msra.mxu0 0.0
        %902 = vmatprep.subr.mxu0 0.0
        %903 = vmatpush1.msra.mxu0 0.0
        %904 = vmatprep.subr.mxu0 0.0
        %905 = vmatpush1.msra.mxu0 0.0
        %906 = vmatprep.subr.mxu0 0.0
        %907 = vmatpush1.msra.mxu0 0.0
        %908 = vmatprep.subr.mxu0 0.0
        %909 = vmatpush1.msra.mxu0 0.0
        %910 = vmatprep.subr.mxu0 0.0
        %911 = vmatpush1.msra.mxu0 0.0
        %912 = vmatprep.subr.mxu0 0.0
        %913 = vmatpush1.msra.mxu0 0.0
        %914 = vmatprep.mubr.f32.mxu0 0.0
        %v915 = vand.u32 %v224, 4294901760
        %916 = vmatmul.mubr.f32.gmra.mrb[0].mxu0 %v915
        %v917 = vpop.f32.mrb[0].mxu0
        %v918 = vadd.f32 %v825, %v917
        %v919 = vpop.f32.mrb[0].mxu0
        %920 = vmatprep.mubr.f32.mxu0 0.0
        %v921 = vand.u32 %v225, 4294901760
        %922 = vmatmul.mubr.f32.gmra.mrb[0].mxu0 %v921
        %v923 = vpop.f32.mrb[0].mxu0
        %v924 = vadd.f32 %v831, %v923
        %v925 = vpop.f32.mrb[0].mxu0
        %926 = vdwg.mxu0
        %927 = vmatprep.subr.mxu0 0.0
        %v928 = vand.u32 %v208, 4294901760
        %929 = vmatpush1.msra.mxu0 %v928
        %930 = vmatprep.subr.mxu0 0.0
        %v931 = vand.u32 %v209, 4294901760
        %932 = vmatpush1.msra.mxu0 %v931
        %933 = vmatprep.subr.mxu0 0.0
        %v934 = vand.u32 %v210, 4294901760
        %935 = vmatpush1.msra.mxu0 %v934
        %936 = vmatprep.subr.mxu0 0.0
        %v937 = vand.u32 %v211, 4294901760
        %938 = vmatpush1.msra.mxu0 %v937
        %939 = vmatprep.subr.mxu0 0.0
        %v940 = vand.u32 %v212, 4294901760
        %941 = vmatpush1.msra.mxu0 %v940
        %942 = vmatprep.subr.mxu0 0.0
        %v943 = vand.u32 %v213, 4294901760
        %944 = vmatpush1.msra.mxu0 %v943
        %945 = vmatprep.subr.mxu0 0.0
        %v946 = vand.u32 %v214, 4294901760
        %947 = vmatpush1.msra.mxu0 %v946
        %948 = vmatprep.subr.mxu0 0.0
        %v949 = vand.u32 %v215, 4294901760
        %950 = vmatpush1.msra.mxu0 %v949
        %951 = vmatprep.subr.mxu0 0.0
        %v952 = vand.u32 %v216, 4294901760
        %953 = vmatpush1.msra.mxu0 %v952
        %954 = vmatprep.subr.mxu0 0.0
        %v955 = vand.u32 %v217, 4294901760
        %956 = vmatpush1.msra.mxu0 %v955
        %957 = vmatprep.subr.mxu0 0.0
        %v958 = vand.u32 %v218, 4294901760
        %959 = vmatpush1.msra.mxu0 %v958
        %960 = vmatprep.subr.mxu0 0.0
        %v961 = vand.u32 %v219, 4294901760
        %962 = vmatpush1.msra.mxu0 %v961
        %963 = vmatprep.subr.mxu0 0.0
        %v964 = vand.u32 %v220, 4294901760
        %965 = vmatpush1.msra.mxu0 %v964
        %966 = vmatprep.subr.mxu0 0.0
        %v967 = vand.u32 %v221, 4294901760
        %968 = vmatpush1.msra.mxu0 %v967
        %969 = vmatprep.subr.mxu0 0.0
        %v970 = vand.u32 %v222, 4294901760
        %971 = vmatpush1.msra.mxu0 %v970
        %972 = vmatprep.subr.mxu0 0.0
        %v973 = vand.u32 %v223, 4294901760
        %974 = vmatpush1.msra.mxu0 %v973
        %975 = vmatprep.subr.mxu0 0.0
        %976 = vmatpush1.msra.mxu0 0.0
        %977 = vmatprep.subr.mxu0 0.0
        %978 = vmatpush1.msra.mxu0 0.0
        %979 = vmatprep.subr.mxu0 0.0
        %980 = vmatpush1.msra.mxu0 0.0
        %981 = vmatprep.subr.mxu0 0.0
        %982 = vmatpush1.msra.mxu0 0.0
        %983 = vmatprep.subr.mxu0 0.0
        %984 = vmatpush1.msra.mxu0 0.0
        %985 = vmatprep.subr.mxu0 0.0
        %986 = vmatpush1.msra.mxu0 0.0
        %987 = vmatprep.subr.mxu0 0.0
        %988 = vmatpush1.msra.mxu0 0.0
        %989 = vmatprep.subr.mxu0 0.0
        %990 = vmatpush1.msra.mxu0 0.0
        %991 = vmatprep.subr.mxu0 0.0
        %992 = vmatpush1.msra.mxu0 0.0
        %993 = vmatprep.subr.mxu0 0.0
        %994 = vmatpush1.msra.mxu0 0.0
        %995 = vmatprep.subr.mxu0 0.0
        %996 = vmatpush1.msra.mxu0 0.0
        %997 = vmatprep.subr.mxu0 0.0
        %998 = vmatpush1.msra.mxu0 0.0
        %999 = vmatprep.subr.mxu0 0.0
        %1000 = vmatpush1.msra.mxu0 0.0
        %1001 = vmatprep.subr.mxu0 0.0
        %1002 = vmatpush1.msra.mxu0 0.0
        %1003 = vmatprep.subr.mxu0 0.0
        %1004 = vmatpush1.msra.mxu0 0.0
        %1005 = vmatprep.subr.mxu0 0.0
        %1006 = vmatpush1.msra.mxu0 0.0
        %1007 = vmatprep.mubr.f32.mxu0 0.0
        %v1008 = vand.u32 %v206, 4294901760
        %v1009 = vsub.f32 %v206, %v1008
        %v1010 = vand.u32 %v1009, 4294901760
        %v1011 = vsub.f32 %v1009, %v1010
        %v1012 = vand.u32 %v1011, 4294901760
        %1013 = vmatmul.mubr.f32.gmra.mrb[0].mxu0 %v1012
        %v1014 = vpop.f32.mrb[0].mxu0
        %v1015 = vadd.f32 %v918, %v1014
        %v1016 = vpop.f32.mrb[0].mxu0
        %1017 = vmatprep.mubr.f32.mxu0 0.0
        %v1018 = vand.u32 %v207, 4294901760
        %v1019 = vsub.f32 %v207, %v1018
        %v1020 = vand.u32 %v1019, 4294901760
        %v1021 = vsub.f32 %v1019, %v1020
        %v1022 = vand.u32 %v1021, 4294901760
        %1023 = vmatmul.mubr.f32.gmra.mrb[0].mxu0 %v1022
        %v1024 = vpop.f32.mrb[0].mxu0
        %v1025 = vadd.f32 %v924, %v1024
        %v1026 = vpop.f32.mrb[0].mxu0
        %1027 = vdwg.mxu0
        %1028 = vmatprep.subr.mxu0 0.0
        %v1029 = vand.u32 %v208, 4294901760
        %v1030 = vsub.f32 %v208, %v1029
        %v1031 = vand.u32 %v1030, 4294901760
        %v1032 = vsub.f32 %v1030, %v1031
        %v1033 = vand.u32 %v1032, 4294901760
        %1034 = vmatpush1.msra.mxu0 %v1033
        %1035 = vmatprep.subr.mxu0 0.0
        %v1036 = vand.u32 %v209, 4294901760
        %v1037 = vsub.f32 %v209, %v1036
        %v1038 = vand.u32 %v1037, 4294901760
        %v1039 = vsub.f32 %v1037, %v1038
        %v1040 = vand.u32 %v1039, 4294901760
        %1041 = vmatpush1.msra.mxu0 %v1040
        %1042 = vmatprep.subr.mxu0 0.0
        %v1043 = vand.u32 %v210, 4294901760
        %v1044 = vsub.f32 %v210, %v1043
        %v1045 = vand.u32 %v1044, 4294901760
        %v1046 = vsub.f32 %v1044, %v1045
        %v1047 = vand.u32 %v1046, 4294901760
        %1048 = vmatpush1.msra.mxu0 %v1047
        %1049 = vmatprep.subr.mxu0 0.0
        %v1050 = vand.u32 %v211, 4294901760
        %v1051 = vsub.f32 %v211, %v1050
        %v1052 = vand.u32 %v1051, 4294901760
        %v1053 = vsub.f32 %v1051, %v1052
        %v1054 = vand.u32 %v1053, 4294901760
        %1055 = vmatpush1.msra.mxu0 %v1054
        %1056 = vmatprep.subr.mxu0 0.0
        %v1057 = vand.u32 %v212, 4294901760
        %v1058 = vsub.f32 %v212, %v1057
        %v1059 = vand.u32 %v1058, 4294901760
        %v1060 = vsub.f32 %v1058, %v1059
        %v1061 = vand.u32 %v1060, 4294901760
        %1062 = vmatpush1.msra.mxu0 %v1061
        %1063 = vmatprep.subr.mxu0 0.0
        %v1064 = vand.u32 %v213, 4294901760
        %v1065 = vsub.f32 %v213, %v1064
        %v1066 = vand.u32 %v1065, 4294901760
        %v1067 = vsub.f32 %v1065, %v1066
        %v1068 = vand.u32 %v1067, 4294901760
        %1069 = vmatpush1.msra.mxu0 %v1068
        %1070 = vmatprep.subr.mxu0 0.0
        %v1071 = vand.u32 %v214, 4294901760
        %v1072 = vsub.f32 %v214, %v1071
        %v1073 = vand.u32 %v1072, 4294901760
        %v1074 = vsub.f32 %v1072, %v1073
        %v1075 = vand.u32 %v1074, 4294901760
        %1076 = vmatpush1.msra.mxu0 %v1075
        %1077 = vmatprep.subr.mxu0 0.0
        %v1078 = vand.u32 %v215, 4294901760
        %v1079 = vsub.f32 %v215, %v1078
        %v1080 = vand.u32 %v1079, 4294901760
        %v1081 = vsub.f32 %v1079, %v1080
        %v1082 = vand.u32 %v1081, 4294901760
        %1083 = vmatpush1.msra.mxu0 %v1082
        %1084 = vmatprep.subr.mxu0 0.0
        %v1085 = vand.u32 %v216, 4294901760
        %v1086 = vsub.f32 %v216, %v1085
        %v1087 = vand.u32 %v1086, 4294901760
        %v1088 = vsub.f32 %v1086, %v1087
        %v1089 = vand.u32 %v1088, 4294901760
        %1090 = vmatpush1.msra.mxu0 %v1089
        %1091 = vmatprep.subr.mxu0 0.0
        %v1092 = vand.u32 %v217, 4294901760
        %v1093 = vsub.f32 %v217, %v1092
        %v1094 = vand.u32 %v1093, 4294901760
        %v1095 = vsub.f32 %v1093, %v1094
        %v1096 = vand.u32 %v1095, 4294901760
        %1097 = vmatpush1.msra.mxu0 %v1096
        %1098 = vmatprep.subr.mxu0 0.0
        %v1099 = vand.u32 %v218, 4294901760
        %v1100 = vsub.f32 %v218, %v1099
        %v1101 = vand.u32 %v1100, 4294901760
        %v1102 = vsub.f32 %v1100, %v1101
        %v1103 = vand.u32 %v1102, 4294901760
        %1104 = vmatpush1.msra.mxu0 %v1103
        %1105 = vmatprep.subr.mxu0 0.0
        %v1106 = vand.u32 %v219, 4294901760
        %v1107 = vsub.f32 %v219, %v1106
        %v1108 = vand.u32 %v1107, 4294901760
        %v1109 = vsub.f32 %v1107, %v1108
        %v1110 = vand.u32 %v1109, 4294901760
        %1111 = vmatpush1.msra.mxu0 %v1110
        %1112 = vmatprep.subr.mxu0 0.0
        %v1113 = vand.u32 %v220, 4294901760
        %v1114 = vsub.f32 %v220, %v1113
        %v1115 = vand.u32 %v1114, 4294901760
        %v1116 = vsub.f32 %v1114, %v1115
        %v1117 = vand.u32 %v1116, 4294901760
        %1118 = vmatpush1.msra.mxu0 %v1117
        %1119 = vmatprep.subr.mxu0 0.0
        %v1120 = vand.u32 %v221, 4294901760
        %v1121 = vsub.f32 %v221, %v1120
        %v1122 = vand.u32 %v1121, 4294901760
        %v1123 = vsub.f32 %v1121, %v1122
        %v1124 = vand.u32 %v1123, 4294901760
        %1125 = vmatpush1.msra.mxu0 %v1124
        %1126 = vmatprep.subr.mxu0 0.0
        %v1127 = vand.u32 %v222, 4294901760
        %v1128 = vsub.f32 %v222, %v1127
        %v1129 = vand.u32 %v1128, 4294901760
        %v1130 = vsub.f32 %v1128, %v1129
        %v1131 = vand.u32 %v1130, 4294901760
        %1132 = vmatpush1.msra.mxu0 %v1131
        %1133 = vmatprep.subr.mxu0 0.0
        %v1134 = vand.u32 %v223, 4294901760
        %v1135 = vsub.f32 %v223, %v1134
        %v1136 = vand.u32 %v1135, 4294901760
        %v1137 = vsub.f32 %v1135, %v1136
        %v1138 = vand.u32 %v1137, 4294901760
        %1139 = vmatpush1.msra.mxu0 %v1138
        %1140 = vmatprep.subr.mxu0 0.0
        %1141 = vmatpush1.msra.mxu0 0.0
        %1142 = vmatprep.subr.mxu0 0.0
        %1143 = vmatpush1.msra.mxu0 0.0
        %1144 = vmatprep.subr.mxu0 0.0
        %1145 = vmatpush1.msra.mxu0 0.0
        %1146 = vmatprep.subr.mxu0 0.0
        %1147 = vmatpush1.msra.mxu0 0.0
        %1148 = vmatprep.subr.mxu0 0.0
        %1149 = vmatpush1.msra.mxu0 0.0
        %1150 = vmatprep.subr.mxu0 0.0
        %1151 = vmatpush1.msra.mxu0 0.0
        %1152 = vmatprep.subr.mxu0 0.0
        %1153 = vmatpush1.msra.mxu0 0.0
        %1154 = vmatprep.subr.mxu0 0.0
        %1155 = vmatpush1.msra.mxu0 0.0
        %1156 = vmatprep.subr.mxu0 0.0
        %1157 = vmatpush1.msra.mxu0 0.0
        %1158 = vmatprep.subr.mxu0 0.0
        %1159 = vmatpush1.msra.mxu0 0.0
        %1160 = vmatprep.subr.mxu0 0.0
        %1161 = vmatpush1.msra.mxu0 0.0
        %1162 = vmatprep.subr.mxu0 0.0
        %1163 = vmatpush1.msra.mxu0 0.0
        %1164 = vmatprep.subr.mxu0 0.0
        %1165 = vmatpush1.msra.mxu0 0.0
        %1166 = vmatprep.subr.mxu0 0.0
        %1167 = vmatpush1.msra.mxu0 0.0
        %1168 = vmatprep.subr.mxu0 0.0
        %1169 = vmatpush1.msra.mxu0 0.0
        %1170 = vmatprep.subr.mxu0 0.0
        %1171 = vmatpush1.msra.mxu0 0.0
        %1172 = vmatprep.mubr.f32.mxu0 0.0
        %v1173 = vand.u32 %v206, 4294901760
        %1174 = vmatmul.mubr.f32.gmra.mrb[0].mxu0 %v1173
        %v1175 = vpop.f32.mrb[0].mxu0
        %v1176 = vadd.f32 %v1015, %v1175
        %v1177 = vpop.f32.mrb[0].mxu0
        %1178 = vmatprep.mubr.f32.mxu0 0.0
        %v1179 = vand.u32 %v207, 4294901760
        %1180 = vmatmul.mubr.f32.gmra.mrb[0].mxu0 %v1179
        %v1181 = vpop.f32.mrb[0].mxu0
        %v1182 = vadd.f32 %v1025, %v1181
        %v1183 = vpop.f32.mrb[0].mxu0
        %1184 = vdwg.mxu0
        %1185 = vmatprep.subr.mxu0 0.0
        %v1186 = vand.u32 %v208, 4294901760
        %v1187 = vsub.f32 %v208, %v1186
        %1188 = vmatpush1.msra.mxu0 %v1187
        %1189 = vmatprep.subr.mxu0 0.0
        %v1190 = vand.u32 %v209, 4294901760
        %v1191 = vsub.f32 %v209, %v1190
        %1192 = vmatpush1.msra.mxu0 %v1191
        %1193 = vmatprep.subr.mxu0 0.0
        %v1194 = vand.u32 %v210, 4294901760
        %v1195 = vsub.f32 %v210, %v1194
        %1196 = vmatpush1.msra.mxu0 %v1195
        %1197 = vmatprep.subr.mxu0 0.0
        %v1198 = vand.u32 %v211, 4294901760
        %v1199 = vsub.f32 %v211, %v1198
        %1200 = vmatpush1.msra.mxu0 %v1199
        %1201 = vmatprep.subr.mxu0 0.0
        %v1202 = vand.u32 %v212, 4294901760
        %v1203 = vsub.f32 %v212, %v1202
        %1204 = vmatpush1.msra.mxu0 %v1203
        %1205 = vmatprep.subr.mxu0 0.0
        %v1206 = vand.u32 %v213, 4294901760
        %v1207 = vsub.f32 %v213, %v1206
        %1208 = vmatpush1.msra.mxu0 %v1207
        %1209 = vmatprep.subr.mxu0 0.0
        %v1210 = vand.u32 %v214, 4294901760
        %v1211 = vsub.f32 %v214, %v1210
        %1212 = vmatpush1.msra.mxu0 %v1211
        %1213 = vmatprep.subr.mxu0 0.0
        %v1214 = vand.u32 %v215, 4294901760
        %v1215 = vsub.f32 %v215, %v1214
        %1216 = vmatpush1.msra.mxu0 %v1215
        %1217 = vmatprep.subr.mxu0 0.0
        %v1218 = vand.u32 %v216, 4294901760
        %v1219 = vsub.f32 %v216, %v1218
        %1220 = vmatpush1.msra.mxu0 %v1219
        %1221 = vmatprep.subr.mxu0 0.0
        %v1222 = vand.u32 %v217, 4294901760
        %v1223 = vsub.f32 %v217, %v1222
        %1224 = vmatpush1.msra.mxu0 %v1223
        %1225 = vmatprep.subr.mxu0 0.0
        %v1226 = vand.u32 %v218, 4294901760
        %v1227 = vsub.f32 %v218, %v1226
        %1228 = vmatpush1.msra.mxu0 %v1227
        %1229 = vmatprep.subr.mxu0 0.0
        %v1230 = vand.u32 %v219, 4294901760
        %v1231 = vsub.f32 %v219, %v1230
        %1232 = vmatpush1.msra.mxu0 %v1231
        %1233 = vmatprep.subr.mxu0 0.0
        %v1234 = vand.u32 %v220, 4294901760
        %v1235 = vsub.f32 %v220, %v1234
        %1236 = vmatpush1.msra.mxu0 %v1235
        %1237 = vmatprep.subr.mxu0 0.0
        %v1238 = vand.u32 %v221, 4294901760
        %v1239 = vsub.f32 %v221, %v1238
        %1240 = vmatpush1.msra.mxu0 %v1239
        %1241 = vmatprep.subr.mxu0 0.0
        %v1242 = vand.u32 %v222, 4294901760
        %v1243 = vsub.f32 %v222, %v1242
        %1244 = vmatpush1.msra.mxu0 %v1243
        %1245 = vmatprep.subr.mxu0 0.0
        %v1246 = vand.u32 %v223, 4294901760
        %v1247 = vsub.f32 %v223, %v1246
        %1248 = vmatpush1.msra.mxu0 %v1247
        %1249 = vmatprep.subr.mxu0 0.0
        %1250 = vmatpush1.msra.mxu0 0.0
        %1251 = vmatprep.subr.mxu0 0.0
        %1252 = vmatpush1.msra.mxu0 0.0
        %1253 = vmatprep.subr.mxu0 0.0
        %1254 = vmatpush1.msra.mxu0 0.0
        %1255 = vmatprep.subr.mxu0 0.0
        %1256 = vmatpush1.msra.mxu0 0.0
        %1257 = vmatprep.subr.mxu0 0.0
        %1258 = vmatpush1.msra.mxu0 0.0
        %1259 = vmatprep.subr.mxu0 0.0
        %1260 = vmatpush1.msra.mxu0 0.0
        %1261 = vmatprep.subr.mxu0 0.0
        %1262 = vmatpush1.msra.mxu0 0.0
        %1263 = vmatprep.subr.mxu0 0.0
        %1264 = vmatpush1.msra.mxu0 0.0
        %1265 = vmatprep.subr.mxu0 0.0
        %1266 = vmatpush1.msra.mxu0 0.0
        %1267 = vmatprep.subr.mxu0 0.0
        %1268 = vmatpush1.msra.mxu0 0.0
        %1269 = vmatprep.subr.mxu0 0.0
        %1270 = vmatpush1.msra.mxu0 0.0
        %1271 = vmatprep.subr.mxu0 0.0
        %1272 = vmatpush1.msra.mxu0 0.0
        %1273 = vmatprep.subr.mxu0 0.0
        %1274 = vmatpush1.msra.mxu0 0.0
        %1275 = vmatprep.subr.mxu0 0.0
        %1276 = vmatpush1.msra.mxu0 0.0
        %1277 = vmatprep.subr.mxu0 0.0
        %1278 = vmatpush1.msra.mxu0 0.0
        %1279 = vmatprep.subr.mxu0 0.0
        %1280 = vmatpush1.msra.mxu0 0.0
        %1281 = vmatprep.mubr.f32.mxu0 0.0
        %v1282 = vand.u32 %v206, 4294901760
        %v1283 = vsub.f32 %v206, %v1282
        %1284 = vmatmul.mubr.f32.gmra.mrb[0].mxu0 %v1283
        %v1285 = vpop.f32.mrb[0].mxu0
        %v1286 = vadd.f32 %v1176, %v1285
        %v1287 = vpop.f32.mrb[0].mxu0
        %1288 = vmatprep.mubr.f32.mxu0 0.0
        %v1289 = vand.u32 %v207, 4294901760
        %v1290 = vsub.f32 %v207, %v1289
        %1291 = vmatmul.mubr.f32.gmra.mrb[0].mxu0 %v1290
        %v1292 = vpop.f32.mrb[0].mxu0
        %v1293 = vadd.f32 %v1182, %v1292
        %v1294 = vpop.f32.mrb[0].mxu0
        %1295 = vdwg.mxu0
        %1296 = vmatprep.subr.mxu0 0.0
        %v1297 = vand.u32 %v208, 4294901760
        %1298 = vmatpush1.msra.mxu0 %v1297
        %1299 = vmatprep.subr.mxu0 0.0
        %v1300 = vand.u32 %v209, 4294901760
        %1301 = vmatpush1.msra.mxu0 %v1300
        %1302 = vmatprep.subr.mxu0 0.0
        %v1303 = vand.u32 %v210, 4294901760
        %1304 = vmatpush1.msra.mxu0 %v1303
        %1305 = vmatprep.subr.mxu0 0.0
        %v1306 = vand.u32 %v211, 4294901760
        %1307 = vmatpush1.msra.mxu0 %v1306
        %1308 = vmatprep.subr.mxu0 0.0
        %v1309 = vand.u32 %v212, 4294901760
        %1310 = vmatpush1.msra.mxu0 %v1309
        %1311 = vmatprep.subr.mxu0 0.0
        %v1312 = vand.u32 %v213, 4294901760
        %1313 = vmatpush1.msra.mxu0 %v1312
        %1314 = vmatprep.subr.mxu0 0.0
        %v1315 = vand.u32 %v214, 4294901760
        %1316 = vmatpush1.msra.mxu0 %v1315
        %1317 = vmatprep.subr.mxu0 0.0
        %v1318 = vand.u32 %v215, 4294901760
        %1319 = vmatpush1.msra.mxu0 %v1318
        %1320 = vmatprep.subr.mxu0 0.0
        %v1321 = vand.u32 %v216, 4294901760
        %1322 = vmatpush1.msra.mxu0 %v1321
        %1323 = vmatprep.subr.mxu0 0.0
        %v1324 = vand.u32 %v217, 4294901760
        %1325 = vmatpush1.msra.mxu0 %v1324
        %1326 = vmatprep.subr.mxu0 0.0
        %v1327 = vand.u32 %v218, 4294901760
        %1328 = vmatpush1.msra.mxu0 %v1327
        %1329 = vmatprep.subr.mxu0 0.0
        %v1330 = vand.u32 %v219, 4294901760
        %1331 = vmatpush1.msra.mxu0 %v1330
        %1332 = vmatprep.subr.mxu0 0.0
        %v1333 = vand.u32 %v220, 4294901760
        %1334 = vmatpush1.msra.mxu0 %v1333
        %1335 = vmatprep.subr.mxu0 0.0
        %v1336 = vand.u32 %v221, 4294901760
        %1337 = vmatpush1.msra.mxu0 %v1336
        %1338 = vmatprep.subr.mxu0 0.0
        %v1339 = vand.u32 %v222, 4294901760
        %1340 = vmatpush1.msra.mxu0 %v1339
        %1341 = vmatprep.subr.mxu0 0.0
        %v1342 = vand.u32 %v223, 4294901760
        %1343 = vmatpush1.msra.mxu0 %v1342
        %1344 = vmatprep.subr.mxu0 0.0
        %1345 = vmatpush1.msra.mxu0 0.0
        %1346 = vmatprep.subr.mxu0 0.0
        %1347 = vmatpush1.msra.mxu0 0.0
        %1348 = vmatprep.subr.mxu0 0.0
        %1349 = vmatpush1.msra.mxu0 0.0
        %1350 = vmatprep.subr.mxu0 0.0
        %1351 = vmatpush1.msra.mxu0 0.0
        %1352 = vmatprep.subr.mxu0 0.0
        %1353 = vmatpush1.msra.mxu0 0.0
        %1354 = vmatprep.subr.mxu0 0.0
        %1355 = vmatpush1.msra.mxu0 0.0
        %1356 = vmatprep.subr.mxu0 0.0
        %1357 = vmatpush1.msra.mxu0 0.0
        %1358 = vmatprep.subr.mxu0 0.0
        %1359 = vmatpush1.msra.mxu0 0.0
        %1360 = vmatprep.subr.mxu0 0.0
        %1361 = vmatpush1.msra.mxu0 0.0
        %1362 = vmatprep.subr.mxu0 0.0
        %1363 = vmatpush1.msra.mxu0 0.0
        %1364 = vmatprep.subr.mxu0 0.0
        %1365 = vmatpush1.msra.mxu0 0.0
        %1366 = vmatprep.subr.mxu0 0.0
        %1367 = vmatpush1.msra.mxu0 0.0
        %1368 = vmatprep.subr.mxu0 0.0
        %1369 = vmatpush1.msra.mxu0 0.0
        %1370 = vmatprep.subr.mxu0 0.0
        %1371 = vmatpush1.msra.mxu0 0.0
        %1372 = vmatprep.subr.mxu0 0.0
        %1373 = vmatpush1.msra.mxu0 0.0
        %1374 = vmatprep.subr.mxu0 0.0
        %1375 = vmatpush1.msra.mxu0 0.0
        %1376 = vmatprep.mubr.f32.mxu0 0.0
        %v1377 = vand.u32 %v206, 4294901760
        %v1378 = vsub.f32 %v206, %v1377
        %v1379 = vand.u32 %v1378, 4294901760
        %1380 = vmatmul.mubr.f32.gmra.mrb[0].mxu0 %v1379
        %v1381 = vpop.f32.mrb[0].mxu0
        %v1382 = vadd.f32 %v1286, %v1381
        %v1383 = vpop.f32.mrb[0].mxu0
        %1384 = vmatprep.mubr.f32.mxu0 0.0
        %v1385 = vand.u32 %v207, 4294901760
        %v1386 = vsub.f32 %v207, %v1385
        %v1387 = vand.u32 %v1386, 4294901760
        %1388 = vmatmul.mubr.f32.gmra.mrb[0].mxu0 %v1387
        %v1389 = vpop.f32.mrb[0].mxu0
        %v1390 = vadd.f32 %v1293, %v1389
        %v1391 = vpop.f32.mrb[0].mxu0
        %1392 = vdwg.mxu0
        %1393 = vmatprep.subr.mxu0 0.0
        %v1394 = vand.u32 %v208, 4294901760
        %v1395 = vsub.f32 %v208, %v1394
        %v1396 = vand.u32 %v1395, 4294901760
        %1397 = vmatpush1.msra.mxu0 %v1396
        %1398 = vmatprep.subr.mxu0 0.0
        %v1399 = vand.u32 %v209, 4294901760
        %v1400 = vsub.f32 %v209, %v1399
        %v1401 = vand.u32 %v1400, 4294901760
        %1402 = vmatpush1.msra.mxu0 %v1401
        %1403 = vmatprep.subr.mxu0 0.0
        %v1404 = vand.u32 %v210, 4294901760
        %v1405 = vsub.f32 %v210, %v1404
        %v1406 = vand.u32 %v1405, 4294901760
        %1407 = vmatpush1.msra.mxu0 %v1406
        %1408 = vmatprep.subr.mxu0 0.0
        %v1409 = vand.u32 %v211, 4294901760
        %v1410 = vsub.f32 %v211, %v1409
        %v1411 = vand.u32 %v1410, 4294901760
        %1412 = vmatpush1.msra.mxu0 %v1411
        %1413 = vmatprep.subr.mxu0 0.0
        %v1414 = vand.u32 %v212, 4294901760
        %v1415 = vsub.f32 %v212, %v1414
        %v1416 = vand.u32 %v1415, 4294901760
        %1417 = vmatpush1.msra.mxu0 %v1416
        %1418 = vmatprep.subr.mxu0 0.0
        %v1419 = vand.u32 %v213, 4294901760
        %v1420 = vsub.f32 %v213, %v1419
        %v1421 = vand.u32 %v1420, 4294901760
        %1422 = vmatpush1.msra.mxu0 %v1421
        %1423 = vmatprep.subr.mxu0 0.0
        %v1424 = vand.u32 %v214, 4294901760
        %v1425 = vsub.f32 %v214, %v1424
        %v1426 = vand.u32 %v1425, 4294901760
        %1427 = vmatpush1.msra.mxu0 %v1426
        %1428 = vmatprep.subr.mxu0 0.0
        %v1429 = vand.u32 %v215, 4294901760
        %v1430 = vsub.f32 %v215, %v1429
        %v1431 = vand.u32 %v1430, 4294901760
        %1432 = vmatpush1.msra.mxu0 %v1431
        %1433 = vmatprep.subr.mxu0 0.0
        %v1434 = vand.u32 %v216, 4294901760
        %v1435 = vsub.f32 %v216, %v1434
        %v1436 = vand.u32 %v1435, 4294901760
        %1437 = vmatpush1.msra.mxu0 %v1436
        %1438 = vmatprep.subr.mxu0 0.0
        %v1439 = vand.u32 %v217, 4294901760
        %v1440 = vsub.f32 %v217, %v1439
        %v1441 = vand.u32 %v1440, 4294901760
        %1442 = vmatpush1.msra.mxu0 %v1441
        %1443 = vmatprep.subr.mxu0 0.0
        %v1444 = vand.u32 %v218, 4294901760
        %v1445 = vsub.f32 %v218, %v1444
        %v1446 = vand.u32 %v1445, 4294901760
        %1447 = vmatpush1.msra.mxu0 %v1446
        %1448 = vmatprep.subr.mxu0 0.0
        %v1449 = vand.u32 %v219, 4294901760
        %v1450 = vsub.f32 %v219, %v1449
        %v1451 = vand.u32 %v1450, 4294901760
        %1452 = vmatpush1.msra.mxu0 %v1451
        %1453 = vmatprep.subr.mxu0 0.0
        %v1454 = vand.u32 %v220, 4294901760
        %v1455 = vsub.f32 %v220, %v1454
        %v1456 = vand.u32 %v1455, 4294901760
        %1457 = vmatpush1.msra.mxu0 %v1456
        %1458 = vmatprep.subr.mxu0 0.0
        %v1459 = vand.u32 %v221, 4294901760
        %v1460 = vsub.f32 %v221, %v1459
        %v1461 = vand.u32 %v1460, 4294901760
        %1462 = vmatpush1.msra.mxu0 %v1461
        %1463 = vmatprep.subr.mxu0 0.0
        %v1464 = vand.u32 %v222, 4294901760
        %v1465 = vsub.f32 %v222, %v1464
        %v1466 = vand.u32 %v1465, 4294901760
        %1467 = vmatpush1.msra.mxu0 %v1466
        %1468 = vmatprep.subr.mxu0 0.0
        %v1469 = vand.u32 %v223, 4294901760
        %v1470 = vsub.f32 %v223, %v1469
        %v1471 = vand.u32 %v1470, 4294901760
        %1472 = vmatpush1.msra.mxu0 %v1471
        %1473 = vmatprep.subr.mxu0 0.0
        %1474 = vmatpush1.msra.mxu0 0.0
        %1475 = vmatprep.subr.mxu0 0.0
        %1476 = vmatpush1.msra.mxu0 0.0
        %1477 = vmatprep.subr.mxu0 0.0
        %1478 = vmatpush1.msra.mxu0 0.0
        %1479 = vmatprep.subr.mxu0 0.0
        %1480 = vmatpush1.msra.mxu0 0.0
        %1481 = vmatprep.subr.mxu0 0.0
        %1482 = vmatpush1.msra.mxu0 0.0
        %1483 = vmatprep.subr.mxu0 0.0
        %1484 = vmatpush1.msra.mxu0 0.0
        %1485 = vmatprep.subr.mxu0 0.0
        %1486 = vmatpush1.msra.mxu0 0.0
        %1487 = vmatprep.subr.mxu0 0.0
        %1488 = vmatpush1.msra.mxu0 0.0
        %1489 = vmatprep.subr.mxu0 0.0
        %1490 = vmatpush1.msra.mxu0 0.0
        %1491 = vmatprep.subr.mxu0 0.0
        %1492 = vmatpush1.msra.mxu0 0.0
        %1493 = vmatprep.subr.mxu0 0.0
        %1494 = vmatpush1.msra.mxu0 0.0
        %1495 = vmatprep.subr.mxu0 0.0
        %1496 = vmatpush1.msra.mxu0 0.0
        %1497 = vmatprep.subr.mxu0 0.0
        %1498 = vmatpush1.msra.mxu0 0.0
        %1499 = vmatprep.subr.mxu0 0.0
        %1500 = vmatpush1.msra.mxu0 0.0
        %1501 = vmatprep.subr.mxu0 0.0
        %1502 = vmatpush1.msra.mxu0 0.0
        %1503 = vmatprep.subr.mxu0 0.0
        %1504 = vmatpush1.msra.mxu0 0.0
        %1505 = vmatprep.mubr.f32.mxu0 0.0
        %v1506 = vand.u32 %v206, 4294901760
        %1507 = vmatmul.mubr.f32.gmra.mrb[0].mxu0 %v1506
        %v1508 = vpop.f32.mrb[0].mxu0
        %v1509 = vadd.f32 %v1382, %v1508
        %v1510 = vpop.f32.mrb[0].mxu0
        %1511 = vmatprep.mubr.f32.mxu0 0.0
        %v1512 = vand.u32 %v207, 4294901760
        %1513 = vmatmul.mubr.f32.gmra.mrb[0].mxu0 %v1512
        %v1514 = vpop.f32.mrb[0].mxu0
        %v1515 = vadd.f32 %v1390, %v1514
        %v1516 = vpop.f32.mrb[0].mxu0
        %1517 = vdwg.mxu0
        %1518 = vmatprep.subr.mxu0 0.0
        %v1519 = vand.u32 %v208, 4294901760
        %1520 = vmatpush1.msra.mxu0 %v1519
        %1521 = vmatprep.subr.mxu0 0.0
        %v1522 = vand.u32 %v209, 4294901760
        %1523 = vmatpush1.msra.mxu0 %v1522
        %1524 = vmatprep.subr.mxu0 0.0
        %v1525 = vand.u32 %v210, 4294901760
        %1526 = vmatpush1.msra.mxu0 %v1525
        %1527 = vmatprep.subr.mxu0 0.0
        %v1528 = vand.u32 %v211, 4294901760
        %1529 = vmatpush1.msra.mxu0 %v1528
        %1530 = vmatprep.subr.mxu0 0.0
        %v1531 = vand.u32 %v212, 4294901760
        %1532 = vmatpush1.msra.mxu0 %v1531
        %1533 = vmatprep.subr.mxu0 0.0
        %v1534 = vand.u32 %v213, 4294901760
        %1535 = vmatpush1.msra.mxu0 %v1534
        %1536 = vmatprep.subr.mxu0 0.0
        %v1537 = vand.u32 %v214, 4294901760
        %1538 = vmatpush1.msra.mxu0 %v1537
        %1539 = vmatprep.subr.mxu0 0.0
        %v1540 = vand.u32 %v215, 4294901760
        %1541 = vmatpush1.msra.mxu0 %v1540
        %1542 = vmatprep.subr.mxu0 0.0
        %v1543 = vand.u32 %v216, 4294901760
        %1544 = vmatpush1.msra.mxu0 %v1543
        %1545 = vmatprep.subr.mxu0 0.0
        %v1546 = vand.u32 %v217, 4294901760
        %1547 = vmatpush1.msra.mxu0 %v1546
        %1548 = vmatprep.subr.mxu0 0.0
        %v1549 = vand.u32 %v218, 4294901760
        %1550 = vmatpush1.msra.mxu0 %v1549
        %1551 = vmatprep.subr.mxu0 0.0
        %v1552 = vand.u32 %v219, 4294901760
        %1553 = vmatpush1.msra.mxu0 %v1552
        %1554 = vmatprep.subr.mxu0 0.0
        %v1555 = vand.u32 %v220, 4294901760
        %1556 = vmatpush1.msra.mxu0 %v1555
        %1557 = vmatprep.subr.mxu0 0.0
        %v1558 = vand.u32 %v221, 4294901760
        %1559 = vmatpush1.msra.mxu0 %v1558
        %1560 = vmatprep.subr.mxu0 0.0
        %v1561 = vand.u32 %v222, 4294901760
        %1562 = vmatpush1.msra.mxu0 %v1561
        %1563 = vmatprep.subr.mxu0 0.0
        %v1564 = vand.u32 %v223, 4294901760
        %1565 = vmatpush1.msra.mxu0 %v1564
        %1566 = vmatprep.subr.mxu0 0.0
        %1567 = vmatpush1.msra.mxu0 0.0
        %1568 = vmatprep.subr.mxu0 0.0
        %1569 = vmatpush1.msra.mxu0 0.0
        %1570 = vmatprep.subr.mxu0 0.0
        %1571 = vmatpush1.msra.mxu0 0.0
        %1572 = vmatprep.subr.mxu0 0.0
        %1573 = vmatpush1.msra.mxu0 0.0
        %1574 = vmatprep.subr.mxu0 0.0
        %1575 = vmatpush1.msra.mxu0 0.0
        %1576 = vmatprep.subr.mxu0 0.0
        %1577 = vmatpush1.msra.mxu0 0.0
        %1578 = vmatprep.subr.mxu0 0.0
        %1579 = vmatpush1.msra.mxu0 0.0
        %1580 = vmatprep.subr.mxu0 0.0
        %1581 = vmatpush1.msra.mxu0 0.0
        %1582 = vmatprep.subr.mxu0 0.0
        %1583 = vmatpush1.msra.mxu0 0.0
        %1584 = vmatprep.subr.mxu0 0.0
        %1585 = vmatpush1.msra.mxu0 0.0
        %1586 = vmatprep.subr.mxu0 0.0
        %1587 = vmatpush1.msra.mxu0 0.0
        %1588 = vmatprep.subr.mxu0 0.0
        %1589 = vmatpush1.msra.mxu0 0.0
        %1590 = vmatprep.subr.mxu0 0.0
        %1591 = vmatpush1.msra.mxu0 0.0
        %1592 = vmatprep.subr.mxu0 0.0
        %1593 = vmatpush1.msra.mxu0 0.0
        %1594 = vmatprep.subr.mxu0 0.0
        %1595 = vmatpush1.msra.mxu0 0.0
        %1596 = vmatprep.subr.mxu0 0.0
        %1597 = vmatpush1.msra.mxu0 0.0
        %1598 = vmatprep.mubr.f32.mxu0 0.0
        %v1599 = vand.u32 %v206, 4294901760
        %1600 = vmatmul.mubr.f32.gmra.mrb[0].mxu0 %v1599
        %v1601 = vpop.f32.mrb[0].mxu0
        %v1602 = vadd.f32 %v1509, %v1601
        %v1603 = vpop.f32.mrb[0].mxu0
        %1604 = vmatprep.mubr.f32.mxu0 0.0
        %v1605 = vand.u32 %v207, 4294901760
        %1606 = vmatmul.mubr.f32.gmra.mrb[0].mxu0 %v1605
        %v1607 = vpop.f32.mrb[0].mxu0
        %v1608 = vadd.f32 %v1515, %v1607
        %v1609 = vpop.f32.mrb[0].mxu0
        %1610 = vdwg.mxu0
        %v1611 = vld [vmem:[#allocation2 + $0x2] sm:$0xff]
        %v1612 = vld [vmem:[#allocation2 + $0xa] sm:$0xff]
        %s1613 = scalar_lea.vmem %s1, 256
        %v1614 = vld [vmem:[%s1613] sm:$0xff]
        %v1615 = vld [vmem:[%s1613 + $0x8] sm:$0xff]
        %v1616 = vld [vmem:[%s1613 + $0x10] sm:$0xff]
        %v1617 = vld [vmem:[%s1613 + $0x18] sm:$0xff]
        %v1618 = vld [vmem:[%s1613 + $0x20] sm:$0xff]
        %v1619 = vld [vmem:[%s1613 + $0x28] sm:$0xff]
        %v1620 = vld [vmem:[%s1613 + $0x30] sm:$0xff]
        %v1621 = vld [vmem:[%s1613 + $0x38] sm:$0xff]
        %v1622 = vld [vmem:[%s1613 + $0x40] sm:$0xff]
        %v1623 = vld [vmem:[%s1613 + $0x48] sm:$0xff]
        %v1624 = vld [vmem:[%s1613 + $0x50] sm:$0xff]
        %v1625 = vld [vmem:[%s1613 + $0x58] sm:$0xff]
        %v1626 = vld [vmem:[%s1613 + $0x60] sm:$0xff]
        %v1627 = vld [vmem:[%s1613 + $0x68] sm:$0xff]
        %v1628 = vld [vmem:[%s1613 + $0x70] sm:$0xff]
        %v1629 = vld [vmem:[%s1613 + $0x78] sm:$0xff]
        %1630 = vmatprep.subr.mxu0 0.0
        %v1631 = vand.u32 %v1614, 4294901760
        %1632 = vmatpush1.msra.mxu0 %v1631
        %1633 = vmatprep.subr.mxu0 0.0
        %v1634 = vand.u32 %v1615, 4294901760
        %1635 = vmatpush1.msra.mxu0 %v1634
        %1636 = vmatprep.subr.mxu0 0.0
        %v1637 = vand.u32 %v1616, 4294901760
        %1638 = vmatpush1.msra.mxu0 %v1637
        %1639 = vmatprep.subr.mxu0 0.0
        %v1640 = vand.u32 %v1617, 4294901760
        %1641 = vmatpush1.msra.mxu0 %v1640
        %1642 = vmatprep.subr.mxu0 0.0
        %v1643 = vand.u32 %v1618, 4294901760
        %1644 = vmatpush1.msra.mxu0 %v1643
        %1645 = vmatprep.subr.mxu0 0.0
        %v1646 = vand.u32 %v1619, 4294901760
        %1647 = vmatpush1.msra.mxu0 %v1646
        %1648 = vmatprep.subr.mxu0 0.0
        %v1649 = vand.u32 %v1620, 4294901760
        %1650 = vmatpush1.msra.mxu0 %v1649
        %1651 = vmatprep.subr.mxu0 0.0
        %v1652 = vand.u32 %v1621, 4294901760
        %1653 = vmatpush1.msra.mxu0 %v1652
        %1654 = vmatprep.subr.mxu0 0.0
        %v1655 = vand.u32 %v1622, 4294901760
        %1656 = vmatpush1.msra.mxu0 %v1655
        %1657 = vmatprep.subr.mxu0 0.0
        %v1658 = vand.u32 %v1623, 4294901760
        %1659 = vmatpush1.msra.mxu0 %v1658
        %1660 = vmatprep.subr.mxu0 0.0
        %v1661 = vand.u32 %v1624, 4294901760
        %1662 = vmatpush1.msra.mxu0 %v1661
        %1663 = vmatprep.subr.mxu0 0.0
        %v1664 = vand.u32 %v1625, 4294901760
        %1665 = vmatpush1.msra.mxu0 %v1664
        %1666 = vmatprep.subr.mxu0 0.0
        %v1667 = vand.u32 %v1626, 4294901760
        %1668 = vmatpush1.msra.mxu0 %v1667
        %1669 = vmatprep.subr.mxu0 0.0
        %v1670 = vand.u32 %v1627, 4294901760
        %1671 = vmatpush1.msra.mxu0 %v1670
        %1672 = vmatprep.subr.mxu0 0.0
        %v1673 = vand.u32 %v1628, 4294901760
        %1674 = vmatpush1.msra.mxu0 %v1673
        %1675 = vmatprep.subr.mxu0 0.0
        %v1676 = vand.u32 %v1629, 4294901760
        %1677 = vmatpush1.msra.mxu0 %v1676
        %1678 = vmatprep.subr.mxu0 0.0
        %1679 = vmatpush1.msra.mxu0 0.0
        %1680 = vmatprep.subr.mxu0 0.0
        %1681 = vmatpush1.msra.mxu0 0.0
        %1682 = vmatprep.subr.mxu0 0.0
        %1683 = vmatpush1.msra.mxu0 0.0
        %1684 = vmatprep.subr.mxu0 0.0
        %1685 = vmatpush1.msra.mxu0 0.0
        %1686 = vmatprep.subr.mxu0 0.0
        %1687 = vmatpush1.msra.mxu0 0.0
        %1688 = vmatprep.subr.mxu0 0.0
        %1689 = vmatpush1.msra.mxu0 0.0
        %1690 = vmatprep.subr.mxu0 0.0
        %1691 = vmatpush1.msra.mxu0 0.0
        %1692 = vmatprep.subr.mxu0 0.0
        %1693 = vmatpush1.msra.mxu0 0.0
        %1694 = vmatprep.subr.mxu0 0.0
        %1695 = vmatpush1.msra.mxu0 0.0
        %1696 = vmatprep.subr.mxu0 0.0
        %1697 = vmatpush1.msra.mxu0 0.0
        %1698 = vmatprep.subr.mxu0 0.0
        %1699 = vmatpush1.msra.mxu0 0.0
        %1700 = vmatprep.subr.mxu0 0.0
        %1701 = vmatpush1.msra.mxu0 0.0
        %1702 = vmatprep.subr.mxu0 0.0
        %1703 = vmatpush1.msra.mxu0 0.0
        %1704 = vmatprep.subr.mxu0 0.0
        %1705 = vmatpush1.msra.mxu0 0.0
        %1706 = vmatprep.subr.mxu0 0.0
        %1707 = vmatpush1.msra.mxu0 0.0
        %1708 = vmatprep.subr.mxu0 0.0
        %1709 = vmatpush1.msra.mxu0 0.0
        %1710 = vmatprep.mubr.f32.mxu0 0.0
        %v1711 = vand.u32 %v1611, 4294901760
        %v1712 = vsub.f32 %v1611, %v1711
        %v1713 = vand.u32 %v1712, 4294901760
        %v1714 = vsub.f32 %v1712, %v1713
        %v1715 = vand.u32 %v1714, 4294901760
        %1716 = vmatmul.mubr.f32.gmra.mrb[0].mxu0 %v1715
        %v1717 = vpop.f32.mrb[0].mxu0
        %v1718 = vadd.f32 0.0, %v1717
        %v1719 = vpop.f32.mrb[0].mxu0
        %1720 = vmatprep.mubr.f32.mxu0 0.0
        %v1721 = vand.u32 %v1612, 4294901760
        %v1722 = vsub.f32 %v1612, %v1721
        %v1723 = vand.u32 %v1722, 4294901760
        %v1724 = vsub.f32 %v1722, %v1723
        %v1725 = vand.u32 %v1724, 4294901760
        %1726 = vmatmul.mubr.f32.gmra.mrb[0].mxu0 %v1725
        %v1727 = vpop.f32.mrb[0].mxu0
        %v1728 = vadd.f32 0.0, %v1727
        %v1729 = vpop.f32.mrb[0].mxu0
        %1730 = vdwg.mxu0
        %1731 = vmatprep.subr.mxu0 0.0
        %v1732 = vand.u32 %v1614, 4294901760
        %v1733 = vsub.f32 %v1614, %v1732
        %v1734 = vand.u32 %v1733, 4294901760
        %v1735 = vsub.f32 %v1733, %v1734
        %v1736 = vand.u32 %v1735, 4294901760
        %1737 = vmatpush1.msra.mxu0 %v1736
        %1738 = vmatprep.subr.mxu0 0.0
        %v1739 = vand.u32 %v1615, 4294901760
        %v1740 = vsub.f32 %v1615, %v1739
        %v1741 = vand.u32 %v1740, 4294901760
        %v1742 = vsub.f32 %v1740, %v1741
        %v1743 = vand.u32 %v1742, 4294901760
        %1744 = vmatpush1.msra.mxu0 %v1743
        %1745 = vmatprep.subr.mxu0 0.0
        %v1746 = vand.u32 %v1616, 4294901760
        %v1747 = vsub.f32 %v1616, %v1746
        %v1748 = vand.u32 %v1747, 4294901760
        %v1749 = vsub.f32 %v1747, %v1748
        %v1750 = vand.u32 %v1749, 4294901760
        %1751 = vmatpush1.msra.mxu0 %v1750
        %1752 = vmatprep.subr.mxu0 0.0
        %v1753 = vand.u32 %v1617, 4294901760
        %v1754 = vsub.f32 %v1617, %v1753
        %v1755 = vand.u32 %v1754, 4294901760
        %v1756 = vsub.f32 %v1754, %v1755
        %v1757 = vand.u32 %v1756, 4294901760
        %1758 = vmatpush1.msra.mxu0 %v1757
        %1759 = vmatprep.subr.mxu0 0.0
        %v1760 = vand.u32 %v1618, 4294901760
        %v1761 = vsub.f32 %v1618, %v1760
        %v1762 = vand.u32 %v1761, 4294901760
        %v1763 = vsub.f32 %v1761, %v1762
        %v1764 = vand.u32 %v1763, 4294901760
        %1765 = vmatpush1.msra.mxu0 %v1764
        %1766 = vmatprep.subr.mxu0 0.0
        %v1767 = vand.u32 %v1619, 4294901760
        %v1768 = vsub.f32 %v1619, %v1767
        %v1769 = vand.u32 %v1768, 4294901760
        %v1770 = vsub.f32 %v1768, %v1769
        %v1771 = vand.u32 %v1770, 4294901760
        %1772 = vmatpush1.msra.mxu0 %v1771
        %1773 = vmatprep.subr.mxu0 0.0
        %v1774 = vand.u32 %v1620, 4294901760
        %v1775 = vsub.f32 %v1620, %v1774
        %v1776 = vand.u32 %v1775, 4294901760
        %v1777 = vsub.f32 %v1775, %v1776
        %v1778 = vand.u32 %v1777, 4294901760
        %1779 = vmatpush1.msra.mxu0 %v1778
        %1780 = vmatprep.subr.mxu0 0.0
        %v1781 = vand.u32 %v1621, 4294901760
        %v1782 = vsub.f32 %v1621, %v1781
        %v1783 = vand.u32 %v1782, 4294901760
        %v1784 = vsub.f32 %v1782, %v1783
        %v1785 = vand.u32 %v1784, 4294901760
        %1786 = vmatpush1.msra.mxu0 %v1785
        %1787 = vmatprep.subr.mxu0 0.0
        %v1788 = vand.u32 %v1622, 4294901760
        %v1789 = vsub.f32 %v1622, %v1788
        %v1790 = vand.u32 %v1789, 4294901760
        %v1791 = vsub.f32 %v1789, %v1790
        %v1792 = vand.u32 %v1791, 4294901760
        %1793 = vmatpush1.msra.mxu0 %v1792
        %1794 = vmatprep.subr.mxu0 0.0
        %v1795 = vand.u32 %v1623, 4294901760
        %v1796 = vsub.f32 %v1623, %v1795
        %v1797 = vand.u32 %v1796, 4294901760
        %v1798 = vsub.f32 %v1796, %v1797
        %v1799 = vand.u32 %v1798, 4294901760
        %1800 = vmatpush1.msra.mxu0 %v1799
        %1801 = vmatprep.subr.mxu0 0.0
        %v1802 = vand.u32 %v1624, 4294901760
        %v1803 = vsub.f32 %v1624, %v1802
        %v1804 = vand.u32 %v1803, 4294901760
        %v1805 = vsub.f32 %v1803, %v1804
        %v1806 = vand.u32 %v1805, 4294901760
        %1807 = vmatpush1.msra.mxu0 %v1806
        %1808 = vmatprep.subr.mxu0 0.0
        %v1809 = vand.u32 %v1625, 4294901760
        %v1810 = vsub.f32 %v1625, %v1809
        %v1811 = vand.u32 %v1810, 4294901760
        %v1812 = vsub.f32 %v1810, %v1811
        %v1813 = vand.u32 %v1812, 4294901760
        %1814 = vmatpush1.msra.mxu0 %v1813
        %1815 = vmatprep.subr.mxu0 0.0
        %v1816 = vand.u32 %v1626, 4294901760
        %v1817 = vsub.f32 %v1626, %v1816
        %v1818 = vand.u32 %v1817, 4294901760
        %v1819 = vsub.f32 %v1817, %v1818
        %v1820 = vand.u32 %v1819, 4294901760
        %1821 = vmatpush1.msra.mxu0 %v1820
        %1822 = vmatprep.subr.mxu0 0.0
        %v1823 = vand.u32 %v1627, 4294901760
        %v1824 = vsub.f32 %v1627, %v1823
        %v1825 = vand.u32 %v1824, 4294901760
        %v1826 = vsub.f32 %v1824, %v1825
        %v1827 = vand.u32 %v1826, 4294901760
        %1828 = vmatpush1.msra.mxu0 %v1827
        %1829 = vmatprep.subr.mxu0 0.0
        %v1830 = vand.u32 %v1628, 4294901760
        %v1831 = vsub.f32 %v1628, %v1830
        %v1832 = vand.u32 %v1831, 4294901760
        %v1833 = vsub.f32 %v1831, %v1832
        %v1834 = vand.u32 %v1833, 4294901760
        %1835 = vmatpush1.msra.mxu0 %v1834
        %1836 = vmatprep.subr.mxu0 0.0
        %v1837 = vand.u32 %v1629, 4294901760
        %v1838 = vsub.f32 %v1629, %v1837
        %v1839 = vand.u32 %v1838, 4294901760
        %v1840 = vsub.f32 %v1838, %v1839
        %v1841 = vand.u32 %v1840, 4294901760
        %1842 = vmatpush1.msra.mxu0 %v1841
        %1843 = vmatprep.subr.mxu0 0.0
        %1844 = vmatpush1.msra.mxu0 0.0
        %1845 = vmatprep.subr.mxu0 0.0
        %1846 = vmatpush1.msra.mxu0 0.0
        %1847 = vmatprep.subr.mxu0 0.0
        %1848 = vmatpush1.msra.mxu0 0.0
        %1849 = vmatprep.subr.mxu0 0.0
        %1850 = vmatpush1.msra.mxu0 0.0
        %1851 = vmatprep.subr.mxu0 0.0
        %1852 = vmatpush1.msra.mxu0 0.0
        %1853 = vmatprep.subr.mxu0 0.0
        %1854 = vmatpush1.msra.mxu0 0.0
        %1855 = vmatprep.subr.mxu0 0.0
        %1856 = vmatpush1.msra.mxu0 0.0
        %1857 = vmatprep.subr.mxu0 0.0
        %1858 = vmatpush1.msra.mxu0 0.0
        %1859 = vmatprep.subr.mxu0 0.0
        %1860 = vmatpush1.msra.mxu0 0.0
        %1861 = vmatprep.subr.mxu0 0.0
        %1862 = vmatpush1.msra.mxu0 0.0
        %1863 = vmatprep.subr.mxu0 0.0
        %1864 = vmatpush1.msra.mxu0 0.0
        %1865 = vmatprep.subr.mxu0 0.0
        %1866 = vmatpush1.msra.mxu0 0.0
        %1867 = vmatprep.subr.mxu0 0.0
        %1868 = vmatpush1.msra.mxu0 0.0
        %1869 = vmatprep.subr.mxu0 0.0
        %1870 = vmatpush1.msra.mxu0 0.0
        %1871 = vmatprep.subr.mxu0 0.0
        %1872 = vmatpush1.msra.mxu0 0.0
        %1873 = vmatprep.subr.mxu0 0.0
        %1874 = vmatpush1.msra.mxu0 0.0
        %1875 = vmatprep.mubr.f32.mxu0 0.0
        %v1876 = vand.u32 %v1611, 4294901760
        %1877 = vmatmul.mubr.f32.gmra.mrb[0].mxu0 %v1876
        %v1878 = vpop.f32.mrb[0].mxu0
        %v1879 = vadd.f32 %v1718, %v1878
        %v1880 = vpop.f32.mrb[0].mxu0
        %1881 = vmatprep.mubr.f32.mxu0 0.0
        %v1882 = vand.u32 %v1612, 4294901760
        %1883 = vmatmul.mubr.f32.gmra.mrb[0].mxu0 %v1882
        %v1884 = vpop.f32.mrb[0].mxu0
        %v1885 = vadd.f32 %v1728, %v1884
        %v1886 = vpop.f32.mrb[0].mxu0
        %1887 = vdwg.mxu0
        %1888 = vmatprep.subr.mxu0 0.0
        %v1889 = vand.u32 %v1614, 4294901760
        %v1890 = vsub.f32 %v1614, %v1889
        %1891 = vmatpush1.msra.mxu0 %v1890
        %1892 = vmatprep.subr.mxu0 0.0
        %v1893 = vand.u32 %v1615, 4294901760
        %v1894 = vsub.f32 %v1615, %v1893
        %1895 = vmatpush1.msra.mxu0 %v1894
        %1896 = vmatprep.subr.mxu0 0.0
        %v1897 = vand.u32 %v1616, 4294901760
        %v1898 = vsub.f32 %v1616, %v1897
        %1899 = vmatpush1.msra.mxu0 %v1898
        %1900 = vmatprep.subr.mxu0 0.0
        %v1901 = vand.u32 %v1617, 4294901760
        %v1902 = vsub.f32 %v1617, %v1901
        %1903 = vmatpush1.msra.mxu0 %v1902
        %1904 = vmatprep.subr.mxu0 0.0
        %v1905 = vand.u32 %v1618, 4294901760
        %v1906 = vsub.f32 %v1618, %v1905
        %1907 = vmatpush1.msra.mxu0 %v1906
        %1908 = vmatprep.subr.mxu0 0.0
        %v1909 = vand.u32 %v1619, 4294901760
        %v1910 = vsub.f32 %v1619, %v1909
        %1911 = vmatpush1.msra.mxu0 %v1910
        %1912 = vmatprep.subr.mxu0 0.0
        %v1913 = vand.u32 %v1620, 4294901760
        %v1914 = vsub.f32 %v1620, %v1913
        %1915 = vmatpush1.msra.mxu0 %v1914
        %1916 = vmatprep.subr.mxu0 0.0
        %v1917 = vand.u32 %v1621, 4294901760
        %v1918 = vsub.f32 %v1621, %v1917
        %1919 = vmatpush1.msra.mxu0 %v1918
        %1920 = vmatprep.subr.mxu0 0.0
        %v1921 = vand.u32 %v1622, 4294901760
        %v1922 = vsub.f32 %v1622, %v1921
        %1923 = vmatpush1.msra.mxu0 %v1922
        %1924 = vmatprep.subr.mxu0 0.0
        %v1925 = vand.u32 %v1623, 4294901760
        %v1926 = vsub.f32 %v1623, %v1925
        %1927 = vmatpush1.msra.mxu0 %v1926
        %1928 = vmatprep.subr.mxu0 0.0
        %v1929 = vand.u32 %v1624, 4294901760
        %v1930 = vsub.f32 %v1624, %v1929
        %1931 = vmatpush1.msra.mxu0 %v1930
        %1932 = vmatprep.subr.mxu0 0.0
        %v1933 = vand.u32 %v1625, 4294901760
        %v1934 = vsub.f32 %v1625, %v1933
        %1935 = vmatpush1.msra.mxu0 %v1934
        %1936 = vmatprep.subr.mxu0 0.0
        %v1937 = vand.u32 %v1626, 4294901760
        %v1938 = vsub.f32 %v1626, %v1937
        %1939 = vmatpush1.msra.mxu0 %v1938
        %1940 = vmatprep.subr.mxu0 0.0
        %v1941 = vand.u32 %v1627, 4294901760
        %v1942 = vsub.f32 %v1627, %v1941
        %1943 = vmatpush1.msra.mxu0 %v1942
        %1944 = vmatprep.subr.mxu0 0.0
        %v1945 = vand.u32 %v1628, 4294901760
        %v1946 = vsub.f32 %v1628, %v1945
        %1947 = vmatpush1.msra.mxu0 %v1946
        %1948 = vmatprep.subr.mxu0 0.0
        %v1949 = vand.u32 %v1629, 4294901760
        %v1950 = vsub.f32 %v1629, %v1949
        %1951 = vmatpush1.msra.mxu0 %v1950
        %1952 = vmatprep.subr.mxu0 0.0
        %1953 = vmatpush1.msra.mxu0 0.0
        %1954 = vmatprep.subr.mxu0 0.0
        %1955 = vmatpush1.msra.mxu0 0.0
        %1956 = vmatprep.subr.mxu0 0.0
        %1957 = vmatpush1.msra.mxu0 0.0
        %1958 = vmatprep.subr.mxu0 0.0
        %1959 = vmatpush1.msra.mxu0 0.0
        %1960 = vmatprep.subr.mxu0 0.0
        %1961 = vmatpush1.msra.mxu0 0.0
        %1962 = vmatprep.subr.mxu0 0.0
        %1963 = vmatpush1.msra.mxu0 0.0
        %1964 = vmatprep.subr.mxu0 0.0
        %1965 = vmatpush1.msra.mxu0 0.0
        %1966 = vmatprep.subr.mxu0 0.0
        %1967 = vmatpush1.msra.mxu0 0.0
        %1968 = vmatprep.subr.mxu0 0.0
        %1969 = vmatpush1.msra.mxu0 0.0
        %1970 = vmatprep.subr.mxu0 0.0
        %1971 = vmatpush1.msra.mxu0 0.0
        %1972 = vmatprep.subr.mxu0 0.0
        %1973 = vmatpush1.msra.mxu0 0.0
        %1974 = vmatprep.subr.mxu0 0.0
        %1975 = vmatpush1.msra.mxu0 0.0
        %1976 = vmatprep.subr.mxu0 0.0
        %1977 = vmatpush1.msra.mxu0 0.0
        %1978 = vmatprep.subr.mxu0 0.0
        %1979 = vmatpush1.msra.mxu0 0.0
        %1980 = vmatprep.subr.mxu0 0.0
        %1981 = vmatpush1.msra.mxu0 0.0
        %1982 = vmatprep.subr.mxu0 0.0
        %1983 = vmatpush1.msra.mxu0 0.0
        %1984 = vmatprep.mubr.f32.mxu0 0.0
        %v1985 = vand.u32 %v1611, 4294901760
        %v1986 = vsub.f32 %v1611, %v1985
        %1987 = vmatmul.mubr.f32.gmra.mrb[0].mxu0 %v1986
        %v1988 = vpop.f32.mrb[0].mxu0
        %v1989 = vadd.f32 %v1879, %v1988
        %v1990 = vpop.f32.mrb[0].mxu0
        %1991 = vmatprep.mubr.f32.mxu0 0.0
        %v1992 = vand.u32 %v1612, 4294901760
        %v1993 = vsub.f32 %v1612, %v1992
        %1994 = vmatmul.mubr.f32.gmra.mrb[0].mxu0 %v1993
        %v1995 = vpop.f32.mrb[0].mxu0
        %v1996 = vadd.f32 %v1885, %v1995
        %v1997 = vpop.f32.mrb[0].mxu0
        %1998 = vdwg.mxu0
        %1999 = vmatprep.subr.mxu0 0.0
        %v2000 = vand.u32 %v1614, 4294901760
        %2001 = vmatpush1.msra.mxu0 %v2000
        %2002 = vmatprep.subr.mxu0 0.0
        %v2003 = vand.u32 %v1615, 4294901760
        %2004 = vmatpush1.msra.mxu0 %v2003
        %2005 = vmatprep.subr.mxu0 0.0
        %v2006 = vand.u32 %v1616, 4294901760
        %2007 = vmatpush1.msra.mxu0 %v2006
        %2008 = vmatprep.subr.mxu0 0.0
        %v2009 = vand.u32 %v1617, 4294901760
        %2010 = vmatpush1.msra.mxu0 %v2009
        %2011 = vmatprep.subr.mxu0 0.0
        %v2012 = vand.u32 %v1618, 4294901760
        %2013 = vmatpush1.msra.mxu0 %v2012
        %2014 = vmatprep.subr.mxu0 0.0
        %v2015 = vand.u32 %v1619, 4294901760
        %2016 = vmatpush1.msra.mxu0 %v2015
        %2017 = vmatprep.subr.mxu0 0.0
        %v2018 = vand.u32 %v1620, 4294901760
        %2019 = vmatpush1.msra.mxu0 %v2018
        %2020 = vmatprep.subr.mxu0 0.0
        %v2021 = vand.u32 %v1621, 4294901760
        %2022 = vmatpush1.msra.mxu0 %v2021
        %2023 = vmatprep.subr.mxu0 0.0
        %v2024 = vand.u32 %v1622, 4294901760
        %2025 = vmatpush1.msra.mxu0 %v2024
        %2026 = vmatprep.subr.mxu0 0.0
        %v2027 = vand.u32 %v1623, 4294901760
        %2028 = vmatpush1.msra.mxu0 %v2027
        %2029 = vmatprep.subr.mxu0 0.0
        %v2030 = vand.u32 %v1624, 4294901760
        %2031 = vmatpush1.msra.mxu0 %v2030
        %2032 = vmatprep.subr.mxu0 0.0
        %v2033 = vand.u32 %v1625, 4294901760
        %2034 = vmatpush1.msra.mxu0 %v2033
        %2035 = vmatprep.subr.mxu0 0.0
        %v2036 = vand.u32 %v1626, 4294901760
        %2037 = vmatpush1.msra.mxu0 %v2036
        %2038 = vmatprep.subr.mxu0 0.0
        %v2039 = vand.u32 %v1627, 4294901760
        %2040 = vmatpush1.msra.mxu0 %v2039
        %2041 = vmatprep.subr.mxu0 0.0
        %v2042 = vand.u32 %v1628, 4294901760
        %2043 = vmatpush1.msra.mxu0 %v2042
        %2044 = vmatprep.subr.mxu0 0.0
        %v2045 = vand.u32 %v1629, 4294901760
        %2046 = vmatpush1.msra.mxu0 %v2045
        %2047 = vmatprep.subr.mxu0 0.0
        %2048 = vmatpush1.msra.mxu0 0.0
        %2049 = vmatprep.subr.mxu0 0.0
        %2050 = vmatpush1.msra.mxu0 0.0
        %2051 = vmatprep.subr.mxu0 0.0
        %2052 = vmatpush1.msra.mxu0 0.0
        %2053 = vmatprep.subr.mxu0 0.0
        %2054 = vmatpush1.msra.mxu0 0.0
        %2055 = vmatprep.subr.mxu0 0.0
        %2056 = vmatpush1.msra.mxu0 0.0
        %2057 = vmatprep.subr.mxu0 0.0
        %2058 = vmatpush1.msra.mxu0 0.0
        %2059 = vmatprep.subr.mxu0 0.0
        %2060 = vmatpush1.msra.mxu0 0.0
        %2061 = vmatprep.subr.mxu0 0.0
        %2062 = vmatpush1.msra.mxu0 0.0
        %2063 = vmatprep.subr.mxu0 0.0
        %2064 = vmatpush1.msra.mxu0 0.0
        %2065 = vmatprep.subr.mxu0 0.0
        %2066 = vmatpush1.msra.mxu0 0.0
        %2067 = vmatprep.subr.mxu0 0.0
        %2068 = vmatpush1.msra.mxu0 0.0
        %2069 = vmatprep.subr.mxu0 0.0
        %2070 = vmatpush1.msra.mxu0 0.0
        %2071 = vmatprep.subr.mxu0 0.0
        %2072 = vmatpush1.msra.mxu0 0.0
        %2073 = vmatprep.subr.mxu0 0.0
        %2074 = vmatpush1.msra.mxu0 0.0
        %2075 = vmatprep.subr.mxu0 0.0
        %2076 = vmatpush1.msra.mxu0 0.0
        %2077 = vmatprep.subr.mxu0 0.0
        %2078 = vmatpush1.msra.mxu0 0.0
        %2079 = vmatprep.mubr.f32.mxu0 0.0
        %v2080 = vand.u32 %v1611, 4294901760
        %v2081 = vsub.f32 %v1611, %v2080
        %v2082 = vand.u32 %v2081, 4294901760
        %2083 = vmatmul.mubr.f32.gmra.mrb[0].mxu0 %v2082
        %v2084 = vpop.f32.mrb[0].mxu0
        %v2085 = vadd.f32 %v1989, %v2084
        %v2086 = vpop.f32.mrb[0].mxu0
        %2087 = vmatprep.mubr.f32.mxu0 0.0
        %v2088 = vand.u32 %v1612, 4294901760
        %v2089 = vsub.f32 %v1612, %v2088
        %v2090 = vand.u32 %v2089, 4294901760
        %2091 = vmatmul.mubr.f32.gmra.mrb[0].mxu0 %v2090
        %v2092 = vpop.f32.mrb[0].mxu0
        %v2093 = vadd.f32 %v1996, %v2092
        %v2094 = vpop.f32.mrb[0].mxu0
        %2095 = vdwg.mxu0
        %2096 = vmatprep.subr.mxu0 0.0
        %v2097 = vand.u32 %v1614, 4294901760
        %v2098 = vsub.f32 %v1614, %v2097
        %v2099 = vand.u32 %v2098, 4294901760
        %2100 = vmatpush1.msra.mxu0 %v2099
        %2101 = vmatprep.subr.mxu0 0.0
        %v2102 = vand.u32 %v1615, 4294901760
        %v2103 = vsub.f32 %v1615, %v2102
        %v2104 = vand.u32 %v2103, 4294901760
        %2105 = vmatpush1.msra.mxu0 %v2104
        %2106 = vmatprep.subr.mxu0 0.0
        %v2107 = vand.u32 %v1616, 4294901760
        %v2108 = vsub.f32 %v1616, %v2107
        %v2109 = vand.u32 %v2108, 4294901760
        %2110 = vmatpush1.msra.mxu0 %v2109
        %2111 = vmatprep.subr.mxu0 0.0
        %v2112 = vand.u32 %v1617, 4294901760
        %v2113 = vsub.f32 %v1617, %v2112
        %v2114 = vand.u32 %v2113, 4294901760
        %2115 = vmatpush1.msra.mxu0 %v2114
        %2116 = vmatprep.subr.mxu0 0.0
        %v2117 = vand.u32 %v1618, 4294901760
        %v2118 = vsub.f32 %v1618, %v2117
        %v2119 = vand.u32 %v2118, 4294901760
        %2120 = vmatpush1.msra.mxu0 %v2119
        %2121 = vmatprep.subr.mxu0 0.0
        %v2122 = vand.u32 %v1619, 4294901760
        %v2123 = vsub.f32 %v1619, %v2122
        %v2124 = vand.u32 %v2123, 4294901760
        %2125 = vmatpush1.msra.mxu0 %v2124
        %2126 = vmatprep.subr.mxu0 0.0
        %v2127 = vand.u32 %v1620, 4294901760
        %v2128 = vsub.f32 %v1620, %v2127
        %v2129 = vand.u32 %v2128, 4294901760
        %2130 = vmatpush1.msra.mxu0 %v2129
        %2131 = vmatprep.subr.mxu0 0.0
        %v2132 = vand.u32 %v1621, 4294901760
        %v2133 = vsub.f32 %v1621, %v2132
        %v2134 = vand.u32 %v2133, 4294901760
        %2135 = vmatpush1.msra.mxu0 %v2134
        %2136 = vmatprep.subr.mxu0 0.0
        %v2137 = vand.u32 %v1622, 4294901760
        %v2138 = vsub.f32 %v1622, %v2137
        %v2139 = vand.u32 %v2138, 4294901760
        %2140 = vmatpush1.msra.mxu0 %v2139
        %2141 = vmatprep.subr.mxu0 0.0
        %v2142 = vand.u32 %v1623, 4294901760
        %v2143 = vsub.f32 %v1623, %v2142
        %v2144 = vand.u32 %v2143, 4294901760
        %2145 = vmatpush1.msra.mxu0 %v2144
        %2146 = vmatprep.subr.mxu0 0.0
        %v2147 = vand.u32 %v1624, 4294901760
        %v2148 = vsub.f32 %v1624, %v2147
        %v2149 = vand.u32 %v2148, 4294901760
        %2150 = vmatpush1.msra.mxu0 %v2149
        %2151 = vmatprep.subr.mxu0 0.0
        %v2152 = vand.u32 %v1625, 4294901760
        %v2153 = vsub.f32 %v1625, %v2152
        %v2154 = vand.u32 %v2153, 4294901760
        %2155 = vmatpush1.msra.mxu0 %v2154
        %2156 = vmatprep.subr.mxu0 0.0
        %v2157 = vand.u32 %v1626, 4294901760
        %v2158 = vsub.f32 %v1626, %v2157
        %v2159 = vand.u32 %v2158, 4294901760
        %2160 = vmatpush1.msra.mxu0 %v2159
        %2161 = vmatprep.subr.mxu0 0.0
        %v2162 = vand.u32 %v1627, 4294901760
        %v2163 = vsub.f32 %v1627, %v2162
        %v2164 = vand.u32 %v2163, 4294901760
        %2165 = vmatpush1.msra.mxu0 %v2164
        %2166 = vmatprep.subr.mxu0 0.0
        %v2167 = vand.u32 %v1628, 4294901760
        %v2168 = vsub.f32 %v1628, %v2167
        %v2169 = vand.u32 %v2168, 4294901760
        %2170 = vmatpush1.msra.mxu0 %v2169
        %2171 = vmatprep.subr.mxu0 0.0
        %v2172 = vand.u32 %v1629, 4294901760
        %v2173 = vsub.f32 %v1629, %v2172
        %v2174 = vand.u32 %v2173, 4294901760
        %2175 = vmatpush1.msra.mxu0 %v2174
        %2176 = vmatprep.subr.mxu0 0.0
        %2177 = vmatpush1.msra.mxu0 0.0
        %2178 = vmatprep.subr.mxu0 0.0
        %2179 = vmatpush1.msra.mxu0 0.0
        %2180 = vmatprep.subr.mxu0 0.0
        %2181 = vmatpush1.msra.mxu0 0.0
        %2182 = vmatprep.subr.mxu0 0.0
        %2183 = vmatpush1.msra.mxu0 0.0
        %2184 = vmatprep.subr.mxu0 0.0
        %2185 = vmatpush1.msra.mxu0 0.0
        %2186 = vmatprep.subr.mxu0 0.0
        %2187 = vmatpush1.msra.mxu0 0.0
        %2188 = vmatprep.subr.mxu0 0.0
        %2189 = vmatpush1.msra.mxu0 0.0
        %2190 = vmatprep.subr.mxu0 0.0
        %2191 = vmatpush1.msra.mxu0 0.0
        %2192 = vmatprep.subr.mxu0 0.0
        %2193 = vmatpush1.msra.mxu0 0.0
        %2194 = vmatprep.subr.mxu0 0.0
        %2195 = vmatpush1.msra.mxu0 0.0
        %2196 = vmatprep.subr.mxu0 0.0
        %2197 = vmatpush1.msra.mxu0 0.0
        %2198 = vmatprep.subr.mxu0 0.0
        %2199 = vmatpush1.msra.mxu0 0.0
        %2200 = vmatprep.subr.mxu0 0.0
        %2201 = vmatpush1.msra.mxu0 0.0
        %2202 = vmatprep.subr.mxu0 0.0
        %2203 = vmatpush1.msra.mxu0 0.0
        %2204 = vmatprep.subr.mxu0 0.0
        %2205 = vmatpush1.msra.mxu0 0.0
        %2206 = vmatprep.subr.mxu0 0.0
        %2207 = vmatpush1.msra.mxu0 0.0
        %2208 = vmatprep.mubr.f32.mxu0 0.0
        %v2209 = vand.u32 %v1611, 4294901760
        %2210 = vmatmul.mubr.f32.gmra.mrb[0].mxu0 %v2209
        %v2211 = vpop.f32.mrb[0].mxu0
        %v2212 = vadd.f32 %v2085, %v2211
        %v2213 = vpop.f32.mrb[0].mxu0
        %2214 = vmatprep.mubr.f32.mxu0 0.0
        %v2215 = vand.u32 %v1612, 4294901760
        %2216 = vmatmul.mubr.f32.gmra.mrb[0].mxu0 %v2215
        %v2217 = vpop.f32.mrb[0].mxu0
        %v2218 = vadd.f32 %v2093, %v2217
        %v2219 = vpop.f32.mrb[0].mxu0
        %2220 = vdwg.mxu0
        %2221 = vmatprep.subr.mxu0 0.0
        %v2222 = vand.u32 %v1614, 4294901760
        %2223 = vmatpush1.msra.mxu0 %v2222
        %2224 = vmatprep.subr.mxu0 0.0
        %v2225 = vand.u32 %v1615, 4294901760
        %2226 = vmatpush1.msra.mxu0 %v2225
        %2227 = vmatprep.subr.mxu0 0.0
        %v2228 = vand.u32 %v1616, 4294901760
        %2229 = vmatpush1.msra.mxu0 %v2228
        %2230 = vmatprep.subr.mxu0 0.0
        %v2231 = vand.u32 %v1617, 4294901760
        %2232 = vmatpush1.msra.mxu0 %v2231
        %2233 = vmatprep.subr.mxu0 0.0
        %v2234 = vand.u32 %v1618, 4294901760
        %2235 = vmatpush1.msra.mxu0 %v2234
        %2236 = vmatprep.subr.mxu0 0.0
        %v2237 = vand.u32 %v1619, 4294901760
        %2238 = vmatpush1.msra.mxu0 %v2237
        %2239 = vmatprep.subr.mxu0 0.0
        %v2240 = vand.u32 %v1620, 4294901760
        %2241 = vmatpush1.msra.mxu0 %v2240
        %2242 = vmatprep.subr.mxu0 0.0
        %v2243 = vand.u32 %v1621, 4294901760
        %2244 = vmatpush1.msra.mxu0 %v2243
        %2245 = vmatprep.subr.mxu0 0.0
        %v2246 = vand.u32 %v1622, 4294901760
        %2247 = vmatpush1.msra.mxu0 %v2246
        %2248 = vmatprep.subr.mxu0 0.0
        %v2249 = vand.u32 %v1623, 4294901760
        %2250 = vmatpush1.msra.mxu0 %v2249
        %2251 = vmatprep.subr.mxu0 0.0
        %v2252 = vand.u32 %v1624, 4294901760
        %2253 = vmatpush1.msra.mxu0 %v2252
        %2254 = vmatprep.subr.mxu0 0.0
        %v2255 = vand.u32 %v1625, 4294901760
        %2256 = vmatpush1.msra.mxu0 %v2255
        %2257 = vmatprep.subr.mxu0 0.0
        %v2258 = vand.u32 %v1626, 4294901760
        %2259 = vmatpush1.msra.mxu0 %v2258
        %2260 = vmatprep.subr.mxu0 0.0
        %v2261 = vand.u32 %v1627, 4294901760
        %2262 = vmatpush1.msra.mxu0 %v2261
        %2263 = vmatprep.subr.mxu0 0.0
        %v2264 = vand.u32 %v1628, 4294901760
        %2265 = vmatpush1.msra.mxu0 %v2264
        %2266 = vmatprep.subr.mxu0 0.0
        %v2267 = vand.u32 %v1629, 4294901760
        %2268 = vmatpush1.msra.mxu0 %v2267
        %2269 = vmatprep.subr.mxu0 0.0
        %2270 = vmatpush1.msra.mxu0 0.0
        %2271 = vmatprep.subr.mxu0 0.0
        %2272 = vmatpush1.msra.mxu0 0.0
        %2273 = vmatprep.subr.mxu0 0.0
        %2274 = vmatpush1.msra.mxu0 0.0
        %2275 = vmatprep.subr.mxu0 0.0
        %2276 = vmatpush1.msra.mxu0 0.0
        %2277 = vmatprep.subr.mxu0 0.0
        %2278 = vmatpush1.msra.mxu0 0.0
        %2279 = vmatprep.subr.mxu0 0.0
        %2280 = vmatpush1.msra.mxu0 0.0
        %2281 = vmatprep.subr.mxu0 0.0
        %2282 = vmatpush1.msra.mxu0 0.0
        %2283 = vmatprep.subr.mxu0 0.0
        %2284 = vmatpush1.msra.mxu0 0.0
        %2285 = vmatprep.subr.mxu0 0.0
        %2286 = vmatpush1.msra.mxu0 0.0
        %2287 = vmatprep.subr.mxu0 0.0
        %2288 = vmatpush1.msra.mxu0 0.0
        %2289 = vmatprep.subr.mxu0 0.0
        %2290 = vmatpush1.msra.mxu0 0.0
        %2291 = vmatprep.subr.mxu0 0.0
        %2292 = vmatpush1.msra.mxu0 0.0
        %2293 = vmatprep.subr.mxu0 0.0
        %2294 = vmatpush1.msra.mxu0 0.0
        %2295 = vmatprep.subr.mxu0 0.0
        %2296 = vmatpush1.msra.mxu0 0.0
        %2297 = vmatprep.subr.mxu0 0.0
        %2298 = vmatpush1.msra.mxu0 0.0
        %2299 = vmatprep.subr.mxu0 0.0
        %2300 = vmatpush1.msra.mxu0 0.0
        %2301 = vmatprep.mubr.f32.mxu0 0.0
        %v2302 = vand.u32 %v1611, 4294901760
        %2303 = vmatmul.mubr.f32.gmra.mrb[0].mxu0 %v2302
        %v2304 = vpop.f32.mrb[0].mxu0
        %v2305 = vadd.f32 %v2212, %v2304
        %v2306 = vpop.f32.mrb[0].mxu0
        %2307 = vmatprep.mubr.f32.mxu0 0.0
        %v2308 = vand.u32 %v1612, 4294901760
        %2309 = vmatmul.mubr.f32.gmra.mrb[0].mxu0 %v2308
        %v2310 = vpop.f32.mrb[0].mxu0
        %v2311 = vadd.f32 %v2218, %v2310
        %v2312 = vpop.f32.mrb[0].mxu0
        %2313 = vdwg.mxu0
        %v2314 = vadd.f32 %v1602, %v2305
        %v2315 = vadd.f32 %v1608, %v2311
        %v2316 = vld [vmem:[#allocation2 + $0x3] sm:$0xff]
        %v2317 = vld [vmem:[#allocation2 + $0xb] sm:$0xff]
        %s2318 = scalar_lea.vmem %s1, 384
        %v2319 = vld [vmem:[%s2318] sm:$0xff]
        %v2320 = vld [vmem:[%s2318 + $0x8] sm:$0xff]
        %v2321 = vld [vmem:[%s2318 + $0x10] sm:$0xff]
        %v2322 = vld [vmem:[%s2318 + $0x18] sm:$0xff]
        %v2323 = vld [vmem:[%s2318 + $0x20] sm:$0xff]
        %v2324 = vld [vmem:[%s2318 + $0x28] sm:$0xff]
        %v2325 = vld [vmem:[%s2318 + $0x30] sm:$0xff]
        %v2326 = vld [vmem:[%s2318 + $0x38] sm:$0xff]
        %v2327 = vld [vmem:[%s2318 + $0x40] sm:$0xff]
        %v2328 = vld [vmem:[%s2318 + $0x48] sm:$0xff]
        %v2329 = vld [vmem:[%s2318 + $0x50] sm:$0xff]
        %v2330 = vld [vmem:[%s2318 + $0x58] sm:$0xff]
        %v2331 = vld [vmem:[%s2318 + $0x60] sm:$0xff]
        %v2332 = vld [vmem:[%s2318 + $0x68] sm:$0xff]
        %v2333 = vld [vmem:[%s2318 + $0x70] sm:$0xff]
        %v2334 = vld [vmem:[%s2318 + $0x78] sm:$0xff]
        %2335 = vmatprep.subr.mxu0 0.0
        %v2336 = vand.u32 %v2319, 4294901760
        %2337 = vmatpush1.msra.mxu0 %v2336
        %2338 = vmatprep.subr.mxu0 0.0
        %v2339 = vand.u32 %v2320, 4294901760
        %2340 = vmatpush1.msra.mxu0 %v2339
        %2341 = vmatprep.subr.mxu0 0.0
        %v2342 = vand.u32 %v2321, 4294901760
        %2343 = vmatpush1.msra.mxu0 %v2342
        %2344 = vmatprep.subr.mxu0 0.0
        %v2345 = vand.u32 %v2322, 4294901760
        %2346 = vmatpush1.msra.mxu0 %v2345
        %2347 = vmatprep.subr.mxu0 0.0
        %v2348 = vand.u32 %v2323, 4294901760
        %2349 = vmatpush1.msra.mxu0 %v2348
        %2350 = vmatprep.subr.mxu0 0.0
        %v2351 = vand.u32 %v2324, 4294901760
        %2352 = vmatpush1.msra.mxu0 %v2351
        %2353 = vmatprep.subr.mxu0 0.0
        %v2354 = vand.u32 %v2325, 4294901760
        %2355 = vmatpush1.msra.mxu0 %v2354
        %2356 = vmatprep.subr.mxu0 0.0
        %v2357 = vand.u32 %v2326, 4294901760
        %2358 = vmatpush1.msra.mxu0 %v2357
        %2359 = vmatprep.subr.mxu0 0.0
        %v2360 = vand.u32 %v2327, 4294901760
        %2361 = vmatpush1.msra.mxu0 %v2360
        %2362 = vmatprep.subr.mxu0 0.0
        %v2363 = vand.u32 %v2328, 4294901760
        %2364 = vmatpush1.msra.mxu0 %v2363
        %2365 = vmatprep.subr.mxu0 0.0
        %v2366 = vand.u32 %v2329, 4294901760
        %2367 = vmatpush1.msra.mxu0 %v2366
        %2368 = vmatprep.subr.mxu0 0.0
        %v2369 = vand.u32 %v2330, 4294901760
        %2370 = vmatpush1.msra.mxu0 %v2369
        %2371 = vmatprep.subr.mxu0 0.0
        %v2372 = vand.u32 %v2331, 4294901760
        %2373 = vmatpush1.msra.mxu0 %v2372
        %2374 = vmatprep.subr.mxu0 0.0
        %v2375 = vand.u32 %v2332, 4294901760
        %2376 = vmatpush1.msra.mxu0 %v2375
        %2377 = vmatprep.subr.mxu0 0.0
        %v2378 = vand.u32 %v2333, 4294901760
        %2379 = vmatpush1.msra.mxu0 %v2378
        %2380 = vmatprep.subr.mxu0 0.0
        %v2381 = vand.u32 %v2334, 4294901760
        %2382 = vmatpush1.msra.mxu0 %v2381
        %2383 = vmatprep.subr.mxu0 0.0
        %2384 = vmatpush1.msra.mxu0 0.0
        %2385 = vmatprep.subr.mxu0 0.0
        %2386 = vmatpush1.msra.mxu0 0.0
        %2387 = vmatprep.subr.mxu0 0.0
        %2388 = vmatpush1.msra.mxu0 0.0
        %2389 = vmatprep.subr.mxu0 0.0
        %2390 = vmatpush1.msra.mxu0 0.0
        %2391 = vmatprep.subr.mxu0 0.0
        %2392 = vmatpush1.msra.mxu0 0.0
        %2393 = vmatprep.subr.mxu0 0.0
        %2394 = vmatpush1.msra.mxu0 0.0
        %2395 = vmatprep.subr.mxu0 0.0
        %2396 = vmatpush1.msra.mxu0 0.0
        %2397 = vmatprep.subr.mxu0 0.0
        %2398 = vmatpush1.msra.mxu0 0.0
        %2399 = vmatprep.subr.mxu0 0.0
        %2400 = vmatpush1.msra.mxu0 0.0
        %2401 = vmatprep.subr.mxu0 0.0
        %2402 = vmatpush1.msra.mxu0 0.0
        %2403 = vmatprep.subr.mxu0 0.0
        %2404 = vmatpush1.msra.mxu0 0.0
        %2405 = vmatprep.subr.mxu0 0.0
        %2406 = vmatpush1.msra.mxu0 0.0
        %2407 = vmatprep.subr.mxu0 0.0
        %2408 = vmatpush1.msra.mxu0 0.0
        %2409 = vmatprep.subr.mxu0 0.0
        %2410 = vmatpush1.msra.mxu0 0.0
        %2411 = vmatprep.subr.mxu0 0.0
        %2412 = vmatpush1.msra.mxu0 0.0
        %2413 = vmatprep.subr.mxu0 0.0
        %2414 = vmatpush1.msra.mxu0 0.0
        %2415 = vmatprep.mubr.f32.mxu0 0.0
        %v2416 = vand.u32 %v2316, 4294901760
        %v2417 = vsub.f32 %v2316, %v2416
        %v2418 = vand.u32 %v2417, 4294901760
        %v2419 = vsub.f32 %v2417, %v2418
        %v2420 = vand.u32 %v2419, 4294901760
        %2421 = vmatmul.mubr.f32.gmra.mrb[0].mxu0 %v2420
        %v2422 = vpop.f32.mrb[0].mxu0
        %v2423 = vadd.f32 0.0, %v2422
        %v2424 = vpop.f32.mrb[0].mxu0
        %2425 = vmatprep.mubr.f32.mxu0 0.0
        %v2426 = vand.u32 %v2317, 4294901760
        %v2427 = vsub.f32 %v2317, %v2426
        %v2428 = vand.u32 %v2427, 4294901760
        %v2429 = vsub.f32 %v2427, %v2428
        %v2430 = vand.u32 %v2429, 4294901760
        %2431 = vmatmul.mubr.f32.gmra.mrb[0].mxu0 %v2430
        %v2432 = vpop.f32.mrb[0].mxu0
        %v2433 = vadd.f32 0.0, %v2432
        %v2434 = vpop.f32.mrb[0].mxu0
        %2435 = vdwg.mxu0
        %2436 = vmatprep.subr.mxu0 0.0
        %v2437 = vand.u32 %v2319, 4294901760
        %v2438 = vsub.f32 %v2319, %v2437
        %v2439 = vand.u32 %v2438, 4294901760
        %v2440 = vsub.f32 %v2438, %v2439
        %v2441 = vand.u32 %v2440, 4294901760
        %2442 = vmatpush1.msra.mxu0 %v2441
        %2443 = vmatprep.subr.mxu0 0.0
        %v2444 = vand.u32 %v2320, 4294901760
        %v2445 = vsub.f32 %v2320, %v2444
        %v2446 = vand.u32 %v2445, 4294901760
        %v2447 = vsub.f32 %v2445, %v2446
        %v2448 = vand.u32 %v2447, 4294901760
        %2449 = vmatpush1.msra.mxu0 %v2448
        %2450 = vmatprep.subr.mxu0 0.0
        %v2451 = vand.u32 %v2321, 4294901760
        %v2452 = vsub.f32 %v2321, %v2451
        %v2453 = vand.u32 %v2452, 4294901760
        %v2454 = vsub.f32 %v2452, %v2453
        %v2455 = vand.u32 %v2454, 4294901760
        %2456 = vmatpush1.msra.mxu0 %v2455
        %2457 = vmatprep.subr.mxu0 0.0
        %v2458 = vand.u32 %v2322, 4294901760
        %v2459 = vsub.f32 %v2322, %v2458
        %v2460 = vand.u32 %v2459, 4294901760
        %v2461 = vsub.f32 %v2459, %v2460
        %v2462 = vand.u32 %v2461, 4294901760
        %2463 = vmatpush1.msra.mxu0 %v2462
        %2464 = vmatprep.subr.mxu0 0.0
        %v2465 = vand.u32 %v2323, 4294901760
        %v2466 = vsub.f32 %v2323, %v2465
        %v2467 = vand.u32 %v2466, 4294901760
        %v2468 = vsub.f32 %v2466, %v2467
        %v2469 = vand.u32 %v2468, 4294901760
        %2470 = vmatpush1.msra.mxu0 %v2469
        %2471 = vmatprep.subr.mxu0 0.0
        %v2472 = vand.u32 %v2324, 4294901760
        %v2473 = vsub.f32 %v2324, %v2472
        %v2474 = vand.u32 %v2473, 4294901760
        %v2475 = vsub.f32 %v2473, %v2474
        %v2476 = vand.u32 %v2475, 4294901760
        %2477 = vmatpush1.msra.mxu0 %v2476
        %2478 = vmatprep.subr.mxu0 0.0
        %v2479 = vand.u32 %v2325, 4294901760
        %v2480 = vsub.f32 %v2325, %v2479
        %v2481 = vand.u32 %v2480, 4294901760
        %v2482 = vsub.f32 %v2480, %v2481
        %v2483 = vand.u32 %v2482, 4294901760
        %2484 = vmatpush1.msra.mxu0 %v2483
        %2485 = vmatprep.subr.mxu0 0.0
        %v2486 = vand.u32 %v2326, 4294901760
        %v2487 = vsub.f32 %v2326, %v2486
        %v2488 = vand.u32 %v2487, 4294901760
        %v2489 = vsub.f32 %v2487, %v2488
        %v2490 = vand.u32 %v2489, 4294901760
        %2491 = vmatpush1.msra.mxu0 %v2490
        %2492 = vmatprep.subr.mxu0 0.0
        %v2493 = vand.u32 %v2327, 4294901760
        %v2494 = vsub.f32 %v2327, %v2493
        %v2495 = vand.u32 %v2494, 4294901760
        %v2496 = vsub.f32 %v2494, %v2495
        %v2497 = vand.u32 %v2496, 4294901760
        %2498 = vmatpush1.msra.mxu0 %v2497
        %2499 = vmatprep.subr.mxu0 0.0
        %v2500 = vand.u32 %v2328, 4294901760
        %v2501 = vsub.f32 %v2328, %v2500
        %v2502 = vand.u32 %v2501, 4294901760
        %v2503 = vsub.f32 %v2501, %v2502
        %v2504 = vand.u32 %v2503, 4294901760
        %2505 = vmatpush1.msra.mxu0 %v2504
        %2506 = vmatprep.subr.mxu0 0.0
        %v2507 = vand.u32 %v2329, 4294901760
        %v2508 = vsub.f32 %v2329, %v2507
        %v2509 = vand.u32 %v2508, 4294901760
        %v2510 = vsub.f32 %v2508, %v2509
        %v2511 = vand.u32 %v2510, 4294901760
        %2512 = vmatpush1.msra.mxu0 %v2511
        %2513 = vmatprep.subr.mxu0 0.0
        %v2514 = vand.u32 %v2330, 4294901760
        %v2515 = vsub.f32 %v2330, %v2514
        %v2516 = vand.u32 %v2515, 4294901760
        %v2517 = vsub.f32 %v2515, %v2516
        %v2518 = vand.u32 %v2517, 4294901760
        %2519 = vmatpush1.msra.mxu0 %v2518
        %2520 = vmatprep.subr.mxu0 0.0
        %v2521 = vand.u32 %v2331, 4294901760
        %v2522 = vsub.f32 %v2331, %v2521
        %v2523 = vand.u32 %v2522, 4294901760
        %v2524 = vsub.f32 %v2522, %v2523
        %v2525 = vand.u32 %v2524, 4294901760
        %2526 = vmatpush1.msra.mxu0 %v2525
        %2527 = vmatprep.subr.mxu0 0.0
        %v2528 = vand.u32 %v2332, 4294901760
        %v2529 = vsub.f32 %v2332, %v2528
        %v2530 = vand.u32 %v2529, 4294901760
        %v2531 = vsub.f32 %v2529, %v2530
        %v2532 = vand.u32 %v2531, 4294901760
        %2533 = vmatpush1.msra.mxu0 %v2532
        %2534 = vmatprep.subr.mxu0 0.0
        %v2535 = vand.u32 %v2333, 4294901760
        %v2536 = vsub.f32 %v2333, %v2535
        %v2537 = vand.u32 %v2536, 4294901760
        %v2538 = vsub.f32 %v2536, %v2537
        %v2539 = vand.u32 %v2538, 4294901760
        %2540 = vmatpush1.msra.mxu0 %v2539
        %2541 = vmatprep.subr.mxu0 0.0
        %v2542 = vand.u32 %v2334, 4294901760
        %v2543 = vsub.f32 %v2334, %v2542
        %v2544 = vand.u32 %v2543, 4294901760
        %v2545 = vsub.f32 %v2543, %v2544
        %v2546 = vand.u32 %v2545, 4294901760
        %2547 = vmatpush1.msra.mxu0 %v2546
        %2548 = vmatprep.subr.mxu0 0.0
        %2549 = vmatpush1.msra.mxu0 0.0
        %2550 = vmatprep.subr.mxu0 0.0
        %2551 = vmatpush1.msra.mxu0 0.0
        %2552 = vmatprep.subr.mxu0 0.0
        %2553 = vmatpush1.msra.mxu0 0.0
        %2554 = vmatprep.subr.mxu0 0.0
        %2555 = vmatpush1.msra.mxu0 0.0
        %2556 = vmatprep.subr.mxu0 0.0
        %2557 = vmatpush1.msra.mxu0 0.0
        %2558 = vmatprep.subr.mxu0 0.0
        %2559 = vmatpush1.msra.mxu0 0.0
        %2560 = vmatprep.subr.mxu0 0.0
        %2561 = vmatpush1.msra.mxu0 0.0
        %2562 = vmatprep.subr.mxu0 0.0
        %2563 = vmatpush1.msra.mxu0 0.0
        %2564 = vmatprep.subr.mxu0 0.0
        %2565 = vmatpush1.msra.mxu0 0.0
        %2566 = vmatprep.subr.mxu0 0.0
        %2567 = vmatpush1.msra.mxu0 0.0
        %2568 = vmatprep.subr.mxu0 0.0
        %2569 = vmatpush1.msra.mxu0 0.0
        %2570 = vmatprep.subr.mxu0 0.0
        %2571 = vmatpush1.msra.mxu0 0.0
        %2572 = vmatprep.subr.mxu0 0.0
        %2573 = vmatpush1.msra.mxu0 0.0
        %2574 = vmatprep.subr.mxu0 0.0
        %2575 = vmatpush1.msra.mxu0 0.0
        %2576 = vmatprep.subr.mxu0 0.0
        %2577 = vmatpush1.msra.mxu0 0.0
        %2578 = vmatprep.subr.mxu0 0.0
        %2579 = vmatpush1.msra.mxu0 0.0
        %2580 = vmatprep.mubr.f32.mxu0 0.0
        %v2581 = vand.u32 %v2316, 4294901760
        %2582 = vmatmul.mubr.f32.gmra.mrb[0].mxu0 %v2581
        %v2583 = vpop.f32.mrb[0].mxu0
        %v2584 = vadd.f32 %v2423, %v2583
        %v2585 = vpop.f32.mrb[0].mxu0
        %2586 = vmatprep.mubr.f32.mxu0 0.0
        %v2587 = vand.u32 %v2317, 4294901760
        %2588 = vmatmul.mubr.f32.gmra.mrb[0].mxu0 %v2587
        %v2589 = vpop.f32.mrb[0].mxu0
        %v2590 = vadd.f32 %v2433, %v2589
        %v2591 = vpop.f32.mrb[0].mxu0
        %2592 = vdwg.mxu0
        %2593 = vmatprep.subr.mxu0 0.0
        %v2594 = vand.u32 %v2319, 4294901760
        %v2595 = vsub.f32 %v2319, %v2594
        %2596 = vmatpush1.msra.mxu0 %v2595
        %2597 = vmatprep.subr.mxu0 0.0
        %v2598 = vand.u32 %v2320, 4294901760
        %v2599 = vsub.f32 %v2320, %v2598
        %2600 = vmatpush1.msra.mxu0 %v2599
        %2601 = vmatprep.subr.mxu0 0.0
        %v2602 = vand.u32 %v2321, 4294901760
        %v2603 = vsub.f32 %v2321, %v2602
        %2604 = vmatpush1.msra.mxu0 %v2603
        %2605 = vmatprep.subr.mxu0 0.0
        %v2606 = vand.u32 %v2322, 4294901760
        %v2607 = vsub.f32 %v2322, %v2606
        %2608 = vmatpush1.msra.mxu0 %v2607
        %2609 = vmatprep.subr.mxu0 0.0
        %v2610 = vand.u32 %v2323, 4294901760
        %v2611 = vsub.f32 %v2323, %v2610
        %2612 = vmatpush1.msra.mxu0 %v2611
        %2613 = vmatprep.subr.mxu0 0.0
        %v2614 = vand.u32 %v2324, 4294901760
        %v2615 = vsub.f32 %v2324, %v2614
        %2616 = vmatpush1.msra.mxu0 %v2615
        %2617 = vmatprep.subr.mxu0 0.0
        %v2618 = vand.u32 %v2325, 4294901760
        %v2619 = vsub.f32 %v2325, %v2618
        %2620 = vmatpush1.msra.mxu0 %v2619
        %2621 = vmatprep.subr.mxu0 0.0
        %v2622 = vand.u32 %v2326, 4294901760
        %v2623 = vsub.f32 %v2326, %v2622
        %2624 = vmatpush1.msra.mxu0 %v2623
        %2625 = vmatprep.subr.mxu0 0.0
        %v2626 = vand.u32 %v2327, 4294901760
        %v2627 = vsub.f32 %v2327, %v2626
        %2628 = vmatpush1.msra.mxu0 %v2627
        %2629 = vmatprep.subr.mxu0 0.0
        %v2630 = vand.u32 %v2328, 4294901760
        %v2631 = vsub.f32 %v2328, %v2630
        %2632 = vmatpush1.msra.mxu0 %v2631
        %2633 = vmatprep.subr.mxu0 0.0
        %v2634 = vand.u32 %v2329, 4294901760
        %v2635 = vsub.f32 %v2329, %v2634
        %2636 = vmatpush1.msra.mxu0 %v2635
        %2637 = vmatprep.subr.mxu0 0.0
        %v2638 = vand.u32 %v2330, 4294901760
        %v2639 = vsub.f32 %v2330, %v2638
        %2640 = vmatpush1.msra.mxu0 %v2639
        %2641 = vmatprep.subr.mxu0 0.0
        %v2642 = vand.u32 %v2331, 4294901760
        %v2643 = vsub.f32 %v2331, %v2642
        %2644 = vmatpush1.msra.mxu0 %v2643
        %2645 = vmatprep.subr.mxu0 0.0
        %v2646 = vand.u32 %v2332, 4294901760
        %v2647 = vsub.f32 %v2332, %v2646
        %2648 = vmatpush1.msra.mxu0 %v2647
        %2649 = vmatprep.subr.mxu0 0.0
        %v2650 = vand.u32 %v2333, 4294901760
        %v2651 = vsub.f32 %v2333, %v2650
        %2652 = vmatpush1.msra.mxu0 %v2651
        %2653 = vmatprep.subr.mxu0 0.0
        %v2654 = vand.u32 %v2334, 4294901760
        %v2655 = vsub.f32 %v2334, %v2654
        %2656 = vmatpush1.msra.mxu0 %v2655
        %2657 = vmatprep.subr.mxu0 0.0
        %2658 = vmatpush1.msra.mxu0 0.0
        %2659 = vmatprep.subr.mxu0 0.0
        %2660 = vmatpush1.msra.mxu0 0.0
        %2661 = vmatprep.subr.mxu0 0.0
        %2662 = vmatpush1.msra.mxu0 0.0
        %2663 = vmatprep.subr.mxu0 0.0
        %2664 = vmatpush1.msra.mxu0 0.0
        %2665 = vmatprep.subr.mxu0 0.0
        %2666 = vmatpush1.msra.mxu0 0.0
        %2667 = vmatprep.subr.mxu0 0.0
        %2668 = vmatpush1.msra.mxu0 0.0
        %2669 = vmatprep.subr.mxu0 0.0
        %2670 = vmatpush1.msra.mxu0 0.0
        %2671 = vmatprep.subr.mxu0 0.0
        %2672 = vmatpush1.msra.mxu0 0.0
        %2673 = vmatprep.subr.mxu0 0.0
        %2674 = vmatpush1.msra.mxu0 0.0
        %2675 = vmatprep.subr.mxu0 0.0
        %2676 = vmatpush1.msra.mxu0 0.0
        %2677 = vmatprep.subr.mxu0 0.0
        %2678 = vmatpush1.msra.mxu0 0.0
        %2679 = vmatprep.subr.mxu0 0.0
        %2680 = vmatpush1.msra.mxu0 0.0
        %2681 = vmatprep.subr.mxu0 0.0
        %2682 = vmatpush1.msra.mxu0 0.0
        %2683 = vmatprep.subr.mxu0 0.0
        %2684 = vmatpush1.msra.mxu0 0.0
        %2685 = vmatprep.subr.mxu0 0.0
        %2686 = vmatpush1.msra.mxu0 0.0
        %2687 = vmatprep.subr.mxu0 0.0
        %2688 = vmatpush1.msra.mxu0 0.0
        %2689 = vmatprep.mubr.f32.mxu0 0.0
        %v2690 = vand.u32 %v2316, 4294901760
        %v2691 = vsub.f32 %v2316, %v2690
        %2692 = vmatmul.mubr.f32.gmra.mrb[0].mxu0 %v2691
        %v2693 = vpop.f32.mrb[0].mxu0
        %v2694 = vadd.f32 %v2584, %v2693
        %v2695 = vpop.f32.mrb[0].mxu0
        %2696 = vmatprep.mubr.f32.mxu0 0.0
        %v2697 = vand.u32 %v2317, 4294901760
        %v2698 = vsub.f32 %v2317, %v2697
        %2699 = vmatmul.mubr.f32.gmra.mrb[0].mxu0 %v2698
        %v2700 = vpop.f32.mrb[0].mxu0
        %v2701 = vadd.f32 %v2590, %v2700
        %v2702 = vpop.f32.mrb[0].mxu0
        %2703 = vdwg.mxu0
        %2704 = vmatprep.subr.mxu0 0.0
        %v2705 = vand.u32 %v2319, 4294901760
        %2706 = vmatpush1.msra.mxu0 %v2705
        %2707 = vmatprep.subr.mxu0 0.0
        %v2708 = vand.u32 %v2320, 4294901760
        %2709 = vmatpush1.msra.mxu0 %v2708
        %2710 = vmatprep.subr.mxu0 0.0
        %v2711 = vand.u32 %v2321, 4294901760
        %2712 = vmatpush1.msra.mxu0 %v2711
        %2713 = vmatprep.subr.mxu0 0.0
        %v2714 = vand.u32 %v2322, 4294901760
        %2715 = vmatpush1.msra.mxu0 %v2714
        %2716 = vmatprep.subr.mxu0 0.0
        %v2717 = vand.u32 %v2323, 4294901760
        %2718 = vmatpush1.msra.mxu0 %v2717
        %2719 = vmatprep.subr.mxu0 0.0
        %v2720 = vand.u32 %v2324, 4294901760
        %2721 = vmatpush1.msra.mxu0 %v2720
        %2722 = vmatprep.subr.mxu0 0.0
        %v2723 = vand.u32 %v2325, 4294901760
        %2724 = vmatpush1.msra.mxu0 %v2723
        %2725 = vmatprep.subr.mxu0 0.0
        %v2726 = vand.u32 %v2326, 4294901760
        %2727 = vmatpush1.msra.mxu0 %v2726
        %2728 = vmatprep.subr.mxu0 0.0
        %v2729 = vand.u32 %v2327, 4294901760
        %2730 = vmatpush1.msra.mxu0 %v2729
        %2731 = vmatprep.subr.mxu0 0.0
        %v2732 = vand.u32 %v2328, 4294901760
        %2733 = vmatpush1.msra.mxu0 %v2732
        %2734 = vmatprep.subr.mxu0 0.0
        %v2735 = vand.u32 %v2329, 4294901760
        %2736 = vmatpush1.msra.mxu0 %v2735
        %2737 = vmatprep.subr.mxu0 0.0
        %v2738 = vand.u32 %v2330, 4294901760
        %2739 = vmatpush1.msra.mxu0 %v2738
        %2740 = vmatprep.subr.mxu0 0.0
        %v2741 = vand.u32 %v2331, 4294901760
        %2742 = vmatpush1.msra.mxu0 %v2741
        %2743 = vmatprep.subr.mxu0 0.0
        %v2744 = vand.u32 %v2332, 4294901760
        %2745 = vmatpush1.msra.mxu0 %v2744
        %2746 = vmatprep.subr.mxu0 0.0
        %v2747 = vand.u32 %v2333, 4294901760
        %2748 = vmatpush1.msra.mxu0 %v2747
        %2749 = vmatprep.subr.mxu0 0.0
        %v2750 = vand.u32 %v2334, 4294901760
        %2751 = vmatpush1.msra.mxu0 %v2750
        %2752 = vmatprep.subr.mxu0 0.0
        %2753 = vmatpush1.msra.mxu0 0.0
        %2754 = vmatprep.subr.mxu0 0.0
        %2755 = vmatpush1.msra.mxu0 0.0
        %2756 = vmatprep.subr.mxu0 0.0
        %2757 = vmatpush1.msra.mxu0 0.0
        %2758 = vmatprep.subr.mxu0 0.0
        %2759 = vmatpush1.msra.mxu0 0.0
        %2760 = vmatprep.subr.mxu0 0.0
        %2761 = vmatpush1.msra.mxu0 0.0
        %2762 = vmatprep.subr.mxu0 0.0
        %2763 = vmatpush1.msra.mxu0 0.0
        %2764 = vmatprep.subr.mxu0 0.0
        %2765 = vmatpush1.msra.mxu0 0.0
        %2766 = vmatprep.subr.mxu0 0.0
        %2767 = vmatpush1.msra.mxu0 0.0
        %2768 = vmatprep.subr.mxu0 0.0
        %2769 = vmatpush1.msra.mxu0 0.0
        %2770 = vmatprep.subr.mxu0 0.0
        %2771 = vmatpush1.msra.mxu0 0.0
        %2772 = vmatprep.subr.mxu0 0.0
        %2773 = vmatpush1.msra.mxu0 0.0
        %2774 = vmatprep.subr.mxu0 0.0
        %2775 = vmatpush1.msra.mxu0 0.0
        %2776 = vmatprep.subr.mxu0 0.0
        %2777 = vmatpush1.msra.mxu0 0.0
        %2778 = vmatprep.subr.mxu0 0.0
        %2779 = vmatpush1.msra.mxu0 0.0
        %2780 = vmatprep.subr.mxu0 0.0
        %2781 = vmatpush1.msra.mxu0 0.0
        %2782 = vmatprep.subr.mxu0 0.0
        %2783 = vmatpush1.msra.mxu0 0.0
        %2784 = vmatprep.mubr.f32.mxu0 0.0
        %v2785 = vand.u32 %v2316, 4294901760
        %v2786 = vsub.f32 %v2316, %v2785
        %v2787 = vand.u32 %v2786, 4294901760
        %2788 = vmatmul.mubr.f32.gmra.mrb[0].mxu0 %v2787
        %v2789 = vpop.f32.mrb[0].mxu0
        %v2790 = vadd.f32 %v2694, %v2789
        %v2791 = vpop.f32.mrb[0].mxu0
        %2792 = vmatprep.mubr.f32.mxu0 0.0
        %v2793 = vand.u32 %v2317, 4294901760
        %v2794 = vsub.f32 %v2317, %v2793
        %v2795 = vand.u32 %v2794, 4294901760
        %2796 = vmatmul.mubr.f32.gmra.mrb[0].mxu0 %v2795
        %v2797 = vpop.f32.mrb[0].mxu0
        %v2798 = vadd.f32 %v2701, %v2797
        %v2799 = vpop.f32.mrb[0].mxu0
        %2800 = vdwg.mxu0
        %2801 = vmatprep.subr.mxu0 0.0
        %v2802 = vand.u32 %v2319, 4294901760
        %v2803 = vsub.f32 %v2319, %v2802
        %v2804 = vand.u32 %v2803, 4294901760
        %2805 = vmatpush1.msra.mxu0 %v2804
        %2806 = vmatprep.subr.mxu0 0.0
        %v2807 = vand.u32 %v2320, 4294901760
        %v2808 = vsub.f32 %v2320, %v2807
        %v2809 = vand.u32 %v2808, 4294901760
        %2810 = vmatpush1.msra.mxu0 %v2809
        %2811 = vmatprep.subr.mxu0 0.0
        %v2812 = vand.u32 %v2321, 4294901760
        %v2813 = vsub.f32 %v2321, %v2812
        %v2814 = vand.u32 %v2813, 4294901760
        %2815 = vmatpush1.msra.mxu0 %v2814
        %2816 = vmatprep.subr.mxu0 0.0
        %v2817 = vand.u32 %v2322, 4294901760
        %v2818 = vsub.f32 %v2322, %v2817
        %v2819 = vand.u32 %v2818, 4294901760
        %2820 = vmatpush1.msra.mxu0 %v2819
        %2821 = vmatprep.subr.mxu0 0.0
        %v2822 = vand.u32 %v2323, 4294901760
        %v2823 = vsub.f32 %v2323, %v2822
        %v2824 = vand.u32 %v2823, 4294901760
        %2825 = vmatpush1.msra.mxu0 %v2824
        %2826 = vmatprep.subr.mxu0 0.0
        %v2827 = vand.u32 %v2324, 4294901760
        %v2828 = vsub.f32 %v2324, %v2827
        %v2829 = vand.u32 %v2828, 4294901760
        %2830 = vmatpush1.msra.mxu0 %v2829
        %2831 = vmatprep.subr.mxu0 0.0
        %v2832 = vand.u32 %v2325, 4294901760
        %v2833 = vsub.f32 %v2325, %v2832
        %v2834 = vand.u32 %v2833, 4294901760
        %2835 = vmatpush1.msra.mxu0 %v2834
        %2836 = vmatprep.subr.mxu0 0.0
        %v2837 = vand.u32 %v2326, 4294901760
        %v2838 = vsub.f32 %v2326, %v2837
        %v2839 = vand.u32 %v2838, 4294901760
        %2840 = vmatpush1.msra.mxu0 %v2839
        %2841 = vmatprep.subr.mxu0 0.0
        %v2842 = vand.u32 %v2327, 4294901760
        %v2843 = vsub.f32 %v2327, %v2842
        %v2844 = vand.u32 %v2843, 4294901760
        %2845 = vmatpush1.msra.mxu0 %v2844
        %2846 = vmatprep.subr.mxu0 0.0
        %v2847 = vand.u32 %v2328, 4294901760
        %v2848 = vsub.f32 %v2328, %v2847
        %v2849 = vand.u32 %v2848, 4294901760
        %2850 = vmatpush1.msra.mxu0 %v2849
        %2851 = vmatprep.subr.mxu0 0.0
        %v2852 = vand.u32 %v2329, 4294901760
        %v2853 = vsub.f32 %v2329, %v2852
        %v2854 = vand.u32 %v2853, 4294901760
        %2855 = vmatpush1.msra.mxu0 %v2854
        %2856 = vmatprep.subr.mxu0 0.0
        %v2857 = vand.u32 %v2330, 4294901760
        %v2858 = vsub.f32 %v2330, %v2857
        %v2859 = vand.u32 %v2858, 4294901760
        %2860 = vmatpush1.msra.mxu0 %v2859
        %2861 = vmatprep.subr.mxu0 0.0
        %v2862 = vand.u32 %v2331, 4294901760
        %v2863 = vsub.f32 %v2331, %v2862
        %v2864 = vand.u32 %v2863, 4294901760
        %2865 = vmatpush1.msra.mxu0 %v2864
        %2866 = vmatprep.subr.mxu0 0.0
        %v2867 = vand.u32 %v2332, 4294901760
        %v2868 = vsub.f32 %v2332, %v2867
        %v2869 = vand.u32 %v2868, 4294901760
        %2870 = vmatpush1.msra.mxu0 %v2869
        %2871 = vmatprep.subr.mxu0 0.0
        %v2872 = vand.u32 %v2333, 4294901760
        %v2873 = vsub.f32 %v2333, %v2872
        %v2874 = vand.u32 %v2873, 4294901760
        %2875 = vmatpush1.msra.mxu0 %v2874
        %2876 = vmatprep.subr.mxu0 0.0
        %v2877 = vand.u32 %v2334, 4294901760
        %v2878 = vsub.f32 %v2334, %v2877
        %v2879 = vand.u32 %v2878, 4294901760
        %2880 = vmatpush1.msra.mxu0 %v2879
        %2881 = vmatprep.subr.mxu0 0.0
        %2882 = vmatpush1.msra.mxu0 0.0
        %2883 = vmatprep.subr.mxu0 0.0
        %2884 = vmatpush1.msra.mxu0 0.0
        %2885 = vmatprep.subr.mxu0 0.0
        %2886 = vmatpush1.msra.mxu0 0.0
        %2887 = vmatprep.subr.mxu0 0.0
        %2888 = vmatpush1.msra.mxu0 0.0
        %2889 = vmatprep.subr.mxu0 0.0
        %2890 = vmatpush1.msra.mxu0 0.0
        %2891 = vmatprep.subr.mxu0 0.0
        %2892 = vmatpush1.msra.mxu0 0.0
        %2893 = vmatprep.subr.mxu0 0.0
        %2894 = vmatpush1.msra.mxu0 0.0
        %2895 = vmatprep.subr.mxu0 0.0
        %2896 = vmatpush1.msra.mxu0 0.0
        %2897 = vmatprep.subr.mxu0 0.0
        %2898 = vmatpush1.msra.mxu0 0.0
        %2899 = vmatprep.subr.mxu0 0.0
        %2900 = vmatpush1.msra.mxu0 0.0
        %2901 = vmatprep.subr.mxu0 0.0
        %2902 = vmatpush1.msra.mxu0 0.0
        %2903 = vmatprep.subr.mxu0 0.0
        %2904 = vmatpush1.msra.mxu0 0.0
        %2905 = vmatprep.subr.mxu0 0.0
        %2906 = vmatpush1.msra.mxu0 0.0
        %2907 = vmatprep.subr.mxu0 0.0
        %2908 = vmatpush1.msra.mxu0 0.0
        %2909 = vmatprep.subr.mxu0 0.0
        %2910 = vmatpush1.msra.mxu0 0.0
        %2911 = vmatprep.subr.mxu0 0.0
        %2912 = vmatpush1.msra.mxu0 0.0
        %2913 = vmatprep.mubr.f32.mxu0 0.0
        %v2914 = vand.u32 %v2316, 4294901760
        %2915 = vmatmul.mubr.f32.gmra.mrb[0].mxu0 %v2914
        %v2916 = vpop.f32.mrb[0].mxu0
        %v2917 = vadd.f32 %v2790, %v2916
        %v2918 = vpop.f32.mrb[0].mxu0
        %2919 = vmatprep.mubr.f32.mxu0 0.0
        %v2920 = vand.u32 %v2317, 4294901760
        %2921 = vmatmul.mubr.f32.gmra.mrb[0].mxu0 %v2920
        %v2922 = vpop.f32.mrb[0].mxu0
        %v2923 = vadd.f32 %v2798, %v2922
        %v2924 = vpop.f32.mrb[0].mxu0
        %2925 = vdwg.mxu0
        %2926 = vmatprep.subr.mxu0 0.0
        %v2927 = vand.u32 %v2319, 4294901760
        %2928 = vmatpush1.msra.mxu0 %v2927
        %2929 = vmatprep.subr.mxu0 0.0
        %v2930 = vand.u32 %v2320, 4294901760
        %2931 = vmatpush1.msra.mxu0 %v2930
        %2932 = vmatprep.subr.mxu0 0.0
        %v2933 = vand.u32 %v2321, 4294901760
        %2934 = vmatpush1.msra.mxu0 %v2933
        %2935 = vmatprep.subr.mxu0 0.0
        %v2936 = vand.u32 %v2322, 4294901760
        %2937 = vmatpush1.msra.mxu0 %v2936
        %2938 = vmatprep.subr.mxu0 0.0
        %v2939 = vand.u32 %v2323, 4294901760
        %2940 = vmatpush1.msra.mxu0 %v2939
        %2941 = vmatprep.subr.mxu0 0.0
        %v2942 = vand.u32 %v2324, 4294901760
        %2943 = vmatpush1.msra.mxu0 %v2942
        %2944 = vmatprep.subr.mxu0 0.0
        %v2945 = vand.u32 %v2325, 4294901760
        %2946 = vmatpush1.msra.mxu0 %v2945
        %2947 = vmatprep.subr.mxu0 0.0
        %v2948 = vand.u32 %v2326, 4294901760
        %2949 = vmatpush1.msra.mxu0 %v2948
        %2950 = vmatprep.subr.mxu0 0.0
        %v2951 = vand.u32 %v2327, 4294901760
        %2952 = vmatpush1.msra.mxu0 %v2951
        %2953 = vmatprep.subr.mxu0 0.0
        %v2954 = vand.u32 %v2328, 4294901760
        %2955 = vmatpush1.msra.mxu0 %v2954
        %2956 = vmatprep.subr.mxu0 0.0
        %v2957 = vand.u32 %v2329, 4294901760
        %2958 = vmatpush1.msra.mxu0 %v2957
        %2959 = vmatprep.subr.mxu0 0.0
        %v2960 = vand.u32 %v2330, 4294901760
        %2961 = vmatpush1.msra.mxu0 %v2960
        %2962 = vmatprep.subr.mxu0 0.0
        %v2963 = vand.u32 %v2331, 4294901760
        %2964 = vmatpush1.msra.mxu0 %v2963
        %2965 = vmatprep.subr.mxu0 0.0
        %v2966 = vand.u32 %v2332, 4294901760
        %2967 = vmatpush1.msra.mxu0 %v2966
        %2968 = vmatprep.subr.mxu0 0.0
        %v2969 = vand.u32 %v2333, 4294901760
        %2970 = vmatpush1.msra.mxu0 %v2969
        %2971 = vmatprep.subr.mxu0 0.0
        %v2972 = vand.u32 %v2334, 4294901760
        %2973 = vmatpush1.msra.mxu0 %v2972
        %2974 = vmatprep.subr.mxu0 0.0
        %2975 = vmatpush1.msra.mxu0 0.0
        %2976 = vmatprep.subr.mxu0 0.0
        %2977 = vmatpush1.msra.mxu0 0.0
        %2978 = vmatprep.subr.mxu0 0.0
        %2979 = vmatpush1.msra.mxu0 0.0
        %2980 = vmatprep.subr.mxu0 0.0
        %2981 = vmatpush1.msra.mxu0 0.0
        %2982 = vmatprep.subr.mxu0 0.0
        %2983 = vmatpush1.msra.mxu0 0.0
        %2984 = vmatprep.subr.mxu0 0.0
        %2985 = vmatpush1.msra.mxu0 0.0
        %2986 = vmatprep.subr.mxu0 0.0
        %2987 = vmatpush1.msra.mxu0 0.0
        %2988 = vmatprep.subr.mxu0 0.0
        %2989 = vmatpush1.msra.mxu0 0.0
        %2990 = vmatprep.subr.mxu0 0.0
        %2991 = vmatpush1.msra.mxu0 0.0
        %2992 = vmatprep.subr.mxu0 0.0
        %2993 = vmatpush1.msra.mxu0 0.0
        %2994 = vmatprep.subr.mxu0 0.0
        %2995 = vmatpush1.msra.mxu0 0.0
        %2996 = vmatprep.subr.mxu0 0.0
        %2997 = vmatpush1.msra.mxu0 0.0
        %2998 = vmatprep.subr.mxu0 0.0
        %2999 = vmatpush1.msra.mxu0 0.0
        %3000 = vmatprep.subr.mxu0 0.0
        %3001 = vmatpush1.msra.mxu0 0.0
        %3002 = vmatprep.subr.mxu0 0.0
        %3003 = vmatpush1.msra.mxu0 0.0
        %3004 = vmatprep.subr.mxu0 0.0
        %3005 = vmatpush1.msra.mxu0 0.0
        %3006 = vmatprep.mubr.f32.mxu0 0.0
        %v3007 = vand.u32 %v2316, 4294901760
        %3008 = vmatmul.mubr.f32.gmra.mrb[0].mxu0 %v3007
        %v3009 = vpop.f32.mrb[0].mxu0
        %v3010 = vadd.f32 %v2917, %v3009
        %v3011 = vpop.f32.mrb[0].mxu0
        %3012 = vmatprep.mubr.f32.mxu0 0.0
        %v3013 = vand.u32 %v2317, 4294901760
        %3014 = vmatmul.mubr.f32.gmra.mrb[0].mxu0 %v3013
        %v3015 = vpop.f32.mrb[0].mxu0
        %v3016 = vadd.f32 %v2923, %v3015
        %v3017 = vpop.f32.mrb[0].mxu0
        %3018 = vdwg.mxu0
        %v3019 = vadd.f32 %v2314, %v3010
        %v3020 = vadd.f32 %v2315, %v3016
        %v3021 = vld [vmem:[#allocation2 + $0x4] sm:$0xff]
        %v3022 = vld [vmem:[#allocation2 + $0xc] sm:$0xff]
        %s3023 = scalar_lea.vmem %s1, 512
        %v3024 = vld [vmem:[%s3023] sm:$0xff]
        %v3025 = vld [vmem:[%s3023 + $0x8] sm:$0xff]
        %v3026 = vld [vmem:[%s3023 + $0x10] sm:$0xff]
        %v3027 = vld [vmem:[%s3023 + $0x18] sm:$0xff]
        %v3028 = vld [vmem:[%s3023 + $0x20] sm:$0xff]
        %v3029 = vld [vmem:[%s3023 + $0x28] sm:$0xff]
        %v3030 = vld [vmem:[%s3023 + $0x30] sm:$0xff]
        %v3031 = vld [vmem:[%s3023 + $0x38] sm:$0xff]
        %v3032 = vld [vmem:[%s3023 + $0x40] sm:$0xff]
        %v3033 = vld [vmem:[%s3023 + $0x48] sm:$0xff]
        %v3034 = vld [vmem:[%s3023 + $0x50] sm:$0xff]
        %v3035 = vld [vmem:[%s3023 + $0x58] sm:$0xff]
        %v3036 = vld [vmem:[%s3023 + $0x60] sm:$0xff]
        %v3037 = vld [vmem:[%s3023 + $0x68] sm:$0xff]
        %v3038 = vld [vmem:[%s3023 + $0x70] sm:$0xff]
        %v3039 = vld [vmem:[%s3023 + $0x78] sm:$0xff]
        %3040 = vmatprep.subr.mxu0 0.0
        %v3041 = vand.u32 %v3024, 4294901760
        %3042 = vmatpush1.msra.mxu0 %v3041
        %3043 = vmatprep.subr.mxu0 0.0
        %v3044 = vand.u32 %v3025, 4294901760
        %3045 = vmatpush1.msra.mxu0 %v3044
        %3046 = vmatprep.subr.mxu0 0.0
        %v3047 = vand.u32 %v3026, 4294901760
        %3048 = vmatpush1.msra.mxu0 %v3047
        %3049 = vmatprep.subr.mxu0 0.0
        %v3050 = vand.u32 %v3027, 4294901760
        %3051 = vmatpush1.msra.mxu0 %v3050
        %3052 = vmatprep.subr.mxu0 0.0
        %v3053 = vand.u32 %v3028, 4294901760
        %3054 = vmatpush1.msra.mxu0 %v3053
        %3055 = vmatprep.subr.mxu0 0.0
        %v3056 = vand.u32 %v3029, 4294901760
        %3057 = vmatpush1.msra.mxu0 %v3056
        %3058 = vmatprep.subr.mxu0 0.0
        %v3059 = vand.u32 %v3030, 4294901760
        %3060 = vmatpush1.msra.mxu0 %v3059
        %3061 = vmatprep.subr.mxu0 0.0
        %v3062 = vand.u32 %v3031, 4294901760
        %3063 = vmatpush1.msra.mxu0 %v3062
        %3064 = vmatprep.subr.mxu0 0.0
        %v3065 = vand.u32 %v3032, 4294901760
        %3066 = vmatpush1.msra.mxu0 %v3065
        %3067 = vmatprep.subr.mxu0 0.0
        %v3068 = vand.u32 %v3033, 4294901760
        %3069 = vmatpush1.msra.mxu0 %v3068
        %3070 = vmatprep.subr.mxu0 0.0
        %v3071 = vand.u32 %v3034, 4294901760
        %3072 = vmatpush1.msra.mxu0 %v3071
        %3073 = vmatprep.subr.mxu0 0.0
        %v3074 = vand.u32 %v3035, 4294901760
        %3075 = vmatpush1.msra.mxu0 %v3074
        %3076 = vmatprep.subr.mxu0 0.0
        %v3077 = vand.u32 %v3036, 4294901760
        %3078 = vmatpush1.msra.mxu0 %v3077
        %3079 = vmatprep.subr.mxu0 0.0
        %v3080 = vand.u32 %v3037, 4294901760
        %3081 = vmatpush1.msra.mxu0 %v3080
        %3082 = vmatprep.subr.mxu0 0.0
        %v3083 = vand.u32 %v3038, 4294901760
        %3084 = vmatpush1.msra.mxu0 %v3083
        %3085 = vmatprep.subr.mxu0 0.0
        %v3086 = vand.u32 %v3039, 4294901760
        %3087 = vmatpush1.msra.mxu0 %v3086
        %3088 = vmatprep.subr.mxu0 0.0
        %3089 = vmatpush1.msra.mxu0 0.0
        %3090 = vmatprep.subr.mxu0 0.0
        %3091 = vmatpush1.msra.mxu0 0.0
        %3092 = vmatprep.subr.mxu0 0.0
        %3093 = vmatpush1.msra.mxu0 0.0
        %3094 = vmatprep.subr.mxu0 0.0
        %3095 = vmatpush1.msra.mxu0 0.0
        %3096 = vmatprep.subr.mxu0 0.0
        %3097 = vmatpush1.msra.mxu0 0.0
        %3098 = vmatprep.subr.mxu0 0.0
        %3099 = vmatpush1.msra.mxu0 0.0
        %3100 = vmatprep.subr.mxu0 0.0
        %3101 = vmatpush1.msra.mxu0 0.0
        %3102 = vmatprep.subr.mxu0 0.0
        %3103 = vmatpush1.msra.mxu0 0.0
        %3104 = vmatprep.subr.mxu0 0.0
        %3105 = vmatpush1.msra.mxu0 0.0
        %3106 = vmatprep.subr.mxu0 0.0
        %3107 = vmatpush1.msra.mxu0 0.0
        %3108 = vmatprep.subr.mxu0 0.0
        %3109 = vmatpush1.msra.mxu0 0.0
        %3110 = vmatprep.subr.mxu0 0.0
        %3111 = vmatpush1.msra.mxu0 0.0
        %3112 = vmatprep.subr.mxu0 0.0
        %3113 = vmatpush1.msra.mxu0 0.0
        %3114 = vmatprep.subr.mxu0 0.0
        %3115 = vmatpush1.msra.mxu0 0.0
        %3116 = vmatprep.subr.mxu0 0.0
        %3117 = vmatpush1.msra.mxu0 0.0
        %3118 = vmatprep.subr.mxu0 0.0
        %3119 = vmatpush1.msra.mxu0 0.0
        %3120 = vmatprep.mubr.f32.mxu0 0.0
        %v3121 = vand.u32 %v3021, 4294901760
        %v3122 = vsub.f32 %v3021, %v3121
        %v3123 = vand.u32 %v3122, 4294901760
        %v3124 = vsub.f32 %v3122, %v3123
        %v3125 = vand.u32 %v3124, 4294901760
        %3126 = vmatmul.mubr.f32.gmra.mrb[0].mxu0 %v3125
        %v3127 = vpop.f32.mrb[0].mxu0
        %v3128 = vadd.f32 0.0, %v3127
        %v3129 = vpop.f32.mrb[0].mxu0
        %3130 = vmatprep.mubr.f32.mxu0 0.0
        %v3131 = vand.u32 %v3022, 4294901760
        %v3132 = vsub.f32 %v3022, %v3131
        %v3133 = vand.u32 %v3132, 4294901760
        %v3134 = vsub.f32 %v3132, %v3133
        %v3135 = vand.u32 %v3134, 4294901760
        %3136 = vmatmul.mubr.f32.gmra.mrb[0].mxu0 %v3135
        %v3137 = vpop.f32.mrb[0].mxu0
        %v3138 = vadd.f32 0.0, %v3137
        %v3139 = vpop.f32.mrb[0].mxu0
        %3140 = vdwg.mxu0
        %3141 = vmatprep.subr.mxu0 0.0
        %v3142 = vand.u32 %v3024, 4294901760
        %v3143 = vsub.f32 %v3024, %v3142
        %v3144 = vand.u32 %v3143, 4294901760
        %v3145 = vsub.f32 %v3143, %v3144
        %v3146 = vand.u32 %v3145, 4294901760
        %3147 = vmatpush1.msra.mxu0 %v3146
        %3148 = vmatprep.subr.mxu0 0.0
        %v3149 = vand.u32 %v3025, 4294901760
        %v3150 = vsub.f32 %v3025, %v3149
        %v3151 = vand.u32 %v3150, 4294901760
        %v3152 = vsub.f32 %v3150, %v3151
        %v3153 = vand.u32 %v3152, 4294901760
        %3154 = vmatpush1.msra.mxu0 %v3153
        %3155 = vmatprep.subr.mxu0 0.0
        %v3156 = vand.u32 %v3026, 4294901760
        %v3157 = vsub.f32 %v3026, %v3156
        %v3158 = vand.u32 %v3157, 4294901760
        %v3159 = vsub.f32 %v3157, %v3158
        %v3160 = vand.u32 %v3159, 4294901760
        %3161 = vmatpush1.msra.mxu0 %v3160
        %3162 = vmatprep.subr.mxu0 0.0
        %v3163 = vand.u32 %v3027, 4294901760
        %v3164 = vsub.f32 %v3027, %v3163
        %v3165 = vand.u32 %v3164, 4294901760
        %v3166 = vsub.f32 %v3164, %v3165
        %v3167 = vand.u32 %v3166, 4294901760
        %3168 = vmatpush1.msra.mxu0 %v3167
        %3169 = vmatprep.subr.mxu0 0.0
        %v3170 = vand.u32 %v3028, 4294901760
        %v3171 = vsub.f32 %v3028, %v3170
        %v3172 = vand.u32 %v3171, 4294901760
        %v3173 = vsub.f32 %v3171, %v3172
        %v3174 = vand.u32 %v3173, 4294901760
        %3175 = vmatpush1.msra.mxu0 %v3174
        %3176 = vmatprep.subr.mxu0 0.0
        %v3177 = vand.u32 %v3029, 4294901760
        %v3178 = vsub.f32 %v3029, %v3177
        %v3179 = vand.u32 %v3178, 4294901760
        %v3180 = vsub.f32 %v3178, %v3179
        %v3181 = vand.u32 %v3180, 4294901760
        %3182 = vmatpush1.msra.mxu0 %v3181
        %3183 = vmatprep.subr.mxu0 0.0
        %v3184 = vand.u32 %v3030, 4294901760
        %v3185 = vsub.f32 %v3030, %v3184
        %v3186 = vand.u32 %v3185, 4294901760
        %v3187 = vsub.f32 %v3185, %v3186
        %v3188 = vand.u32 %v3187, 4294901760
        %3189 = vmatpush1.msra.mxu0 %v3188
        %3190 = vmatprep.subr.mxu0 0.0
        %v3191 = vand.u32 %v3031, 4294901760
        %v3192 = vsub.f32 %v3031, %v3191
        %v3193 = vand.u32 %v3192, 4294901760
        %v3194 = vsub.f32 %v3192, %v3193
        %v3195 = vand.u32 %v3194, 4294901760
        %3196 = vmatpush1.msra.mxu0 %v3195
        %3197 = vmatprep.subr.mxu0 0.0
        %v3198 = vand.u32 %v3032, 4294901760
        %v3199 = vsub.f32 %v3032, %v3198
        %v3200 = vand.u32 %v3199, 4294901760
        %v3201 = vsub.f32 %v3199, %v3200
        %v3202 = vand.u32 %v3201, 4294901760
        %3203 = vmatpush1.msra.mxu0 %v3202
        %3204 = vmatprep.subr.mxu0 0.0
        %v3205 = vand.u32 %v3033, 4294901760
        %v3206 = vsub.f32 %v3033, %v3205
        %v3207 = vand.u32 %v3206, 4294901760
        %v3208 = vsub.f32 %v3206, %v3207
        %v3209 = vand.u32 %v3208, 4294901760
        %3210 = vmatpush1.msra.mxu0 %v3209
        %3211 = vmatprep.subr.mxu0 0.0
        %v3212 = vand.u32 %v3034, 4294901760
        %v3213 = vsub.f32 %v3034, %v3212
        %v3214 = vand.u32 %v3213, 4294901760
        %v3215 = vsub.f32 %v3213, %v3214
        %v3216 = vand.u32 %v3215, 4294901760
        %3217 = vmatpush1.msra.mxu0 %v3216
        %3218 = vmatprep.subr.mxu0 0.0
        %v3219 = vand.u32 %v3035, 4294901760
        %v3220 = vsub.f32 %v3035, %v3219
        %v3221 = vand.u32 %v3220, 4294901760
        %v3222 = vsub.f32 %v3220, %v3221
        %v3223 = vand.u32 %v3222, 4294901760
        %3224 = vmatpush1.msra.mxu0 %v3223
        %3225 = vmatprep.subr.mxu0 0.0
        %v3226 = vand.u32 %v3036, 4294901760
        %v3227 = vsub.f32 %v3036, %v3226
        %v3228 = vand.u32 %v3227, 4294901760
        %v3229 = vsub.f32 %v3227, %v3228
        %v3230 = vand.u32 %v3229, 4294901760
        %3231 = vmatpush1.msra.mxu0 %v3230
        %3232 = vmatprep.subr.mxu0 0.0
        %v3233 = vand.u32 %v3037, 4294901760
        %v3234 = vsub.f32 %v3037, %v3233
        %v3235 = vand.u32 %v3234, 4294901760
        %v3236 = vsub.f32 %v3234, %v3235
        %v3237 = vand.u32 %v3236, 4294901760
        %3238 = vmatpush1.msra.mxu0 %v3237
        %3239 = vmatprep.subr.mxu0 0.0
        %v3240 = vand.u32 %v3038, 4294901760
        %v3241 = vsub.f32 %v3038, %v3240
        %v3242 = vand.u32 %v3241, 4294901760
        %v3243 = vsub.f32 %v3241, %v3242
        %v3244 = vand.u32 %v3243, 4294901760
        %3245 = vmatpush1.msra.mxu0 %v3244
        %3246 = vmatprep.subr.mxu0 0.0
        %v3247 = vand.u32 %v3039, 4294901760
        %v3248 = vsub.f32 %v3039, %v3247
        %v3249 = vand.u32 %v3248, 4294901760
        %v3250 = vsub.f32 %v3248, %v3249
        %v3251 = vand.u32 %v3250, 4294901760
        %3252 = vmatpush1.msra.mxu0 %v3251
        %3253 = vmatprep.subr.mxu0 0.0
        %3254 = vmatpush1.msra.mxu0 0.0
        %3255 = vmatprep.subr.mxu0 0.0
        %3256 = vmatpush1.msra.mxu0 0.0
        %3257 = vmatprep.subr.mxu0 0.0
        %3258 = vmatpush1.msra.mxu0 0.0
        %3259 = vmatprep.subr.mxu0 0.0
        %3260 = vmatpush1.msra.mxu0 0.0
        %3261 = vmatprep.subr.mxu0 0.0
        %3262 = vmatpush1.msra.mxu0 0.0
        %3263 = vmatprep.subr.mxu0 0.0
        %3264 = vmatpush1.msra.mxu0 0.0
        %3265 = vmatprep.subr.mxu0 0.0
        %3266 = vmatpush1.msra.mxu0 0.0
        %3267 = vmatprep.subr.mxu0 0.0
        %3268 = vmatpush1.msra.mxu0 0.0
        %3269 = vmatprep.subr.mxu0 0.0
        %3270 = vmatpush1.msra.mxu0 0.0
        %3271 = vmatprep.subr.mxu0 0.0
        %3272 = vmatpush1.msra.mxu0 0.0
        %3273 = vmatprep.subr.mxu0 0.0
        %3274 = vmatpush1.msra.mxu0 0.0
        %3275 = vmatprep.subr.mxu0 0.0
        %3276 = vmatpush1.msra.mxu0 0.0
        %3277 = vmatprep.subr.mxu0 0.0
        %3278 = vmatpush1.msra.mxu0 0.0
        %3279 = vmatprep.subr.mxu0 0.0
        %3280 = vmatpush1.msra.mxu0 0.0
        %3281 = vmatprep.subr.mxu0 0.0
        %3282 = vmatpush1.msra.mxu0 0.0
        %3283 = vmatprep.subr.mxu0 0.0
        %3284 = vmatpush1.msra.mxu0 0.0
        %3285 = vmatprep.mubr.f32.mxu0 0.0
        %v3286 = vand.u32 %v3021, 4294901760
        %3287 = vmatmul.mubr.f32.gmra.mrb[0].mxu0 %v3286
        %v3288 = vpop.f32.mrb[0].mxu0
        %v3289 = vadd.f32 %v3128, %v3288
        %v3290 = vpop.f32.mrb[0].mxu0
        %3291 = vmatprep.mubr.f32.mxu0 0.0
        %v3292 = vand.u32 %v3022, 4294901760
        %3293 = vmatmul.mubr.f32.gmra.mrb[0].mxu0 %v3292
        %v3294 = vpop.f32.mrb[0].mxu0
        %v3295 = vadd.f32 %v3138, %v3294
        %v3296 = vpop.f32.mrb[0].mxu0
        %3297 = vdwg.mxu0
        %3298 = vmatprep.subr.mxu0 0.0
        %v3299 = vand.u32 %v3024, 4294901760
        %v3300 = vsub.f32 %v3024, %v3299
        %3301 = vmatpush1.msra.mxu0 %v3300
        %3302 = vmatprep.subr.mxu0 0.0
        %v3303 = vand.u32 %v3025, 4294901760
        %v3304 = vsub.f32 %v3025, %v3303
        %3305 = vmatpush1.msra.mxu0 %v3304
        %3306 = vmatprep.subr.mxu0 0.0
        %v3307 = vand.u32 %v3026, 4294901760
        %v3308 = vsub.f32 %v3026, %v3307
        %3309 = vmatpush1.msra.mxu0 %v3308
        %3310 = vmatprep.subr.mxu0 0.0
        %v3311 = vand.u32 %v3027, 4294901760
        %v3312 = vsub.f32 %v3027, %v3311
        %3313 = vmatpush1.msra.mxu0 %v3312
        %3314 = vmatprep.subr.mxu0 0.0
        %v3315 = vand.u32 %v3028, 4294901760
        %v3316 = vsub.f32 %v3028, %v3315
        %3317 = vmatpush1.msra.mxu0 %v3316
        %3318 = vmatprep.subr.mxu0 0.0
        %v3319 = vand.u32 %v3029, 4294901760
        %v3320 = vsub.f32 %v3029, %v3319
        %3321 = vmatpush1.msra.mxu0 %v3320
        %3322 = vmatprep.subr.mxu0 0.0
        %v3323 = vand.u32 %v3030, 4294901760
        %v3324 = vsub.f32 %v3030, %v3323
        %3325 = vmatpush1.msra.mxu0 %v3324
        %3326 = vmatprep.subr.mxu0 0.0
        %v3327 = vand.u32 %v3031, 4294901760
        %v3328 = vsub.f32 %v3031, %v3327
        %3329 = vmatpush1.msra.mxu0 %v3328
        %3330 = vmatprep.subr.mxu0 0.0
        %v3331 = vand.u32 %v3032, 4294901760
        %v3332 = vsub.f32 %v3032, %v3331
        %3333 = vmatpush1.msra.mxu0 %v3332
        %3334 = vmatprep.subr.mxu0 0.0
        %v3335 = vand.u32 %v3033, 4294901760
        %v3336 = vsub.f32 %v3033, %v3335
        %3337 = vmatpush1.msra.mxu0 %v3336
        %3338 = vmatprep.subr.mxu0 0.0
        %v3339 = vand.u32 %v3034, 4294901760
        %v3340 = vsub.f32 %v3034, %v3339
        %3341 = vmatpush1.msra.mxu0 %v3340
        %3342 = vmatprep.subr.mxu0 0.0
        %v3343 = vand.u32 %v3035, 4294901760
        %v3344 = vsub.f32 %v3035, %v3343
        %3345 = vmatpush1.msra.mxu0 %v3344
        %3346 = vmatprep.subr.mxu0 0.0
        %v3347 = vand.u32 %v3036, 4294901760
        %v3348 = vsub.f32 %v3036, %v3347
        %3349 = vmatpush1.msra.mxu0 %v3348
        %3350 = vmatprep.subr.mxu0 0.0
        %v3351 = vand.u32 %v3037, 4294901760
        %v3352 = vsub.f32 %v3037, %v3351
        %3353 = vmatpush1.msra.mxu0 %v3352
        %3354 = vmatprep.subr.mxu0 0.0
        %v3355 = vand.u32 %v3038, 4294901760
        %v3356 = vsub.f32 %v3038, %v3355
        %3357 = vmatpush1.msra.mxu0 %v3356
        %3358 = vmatprep.subr.mxu0 0.0
        %v3359 = vand.u32 %v3039, 4294901760
        %v3360 = vsub.f32 %v3039, %v3359
        %3361 = vmatpush1.msra.mxu0 %v3360
        %3362 = vmatprep.subr.mxu0 0.0
        %3363 = vmatpush1.msra.mxu0 0.0
        %3364 = vmatprep.subr.mxu0 0.0
        %3365 = vmatpush1.msra.mxu0 0.0
        %3366 = vmatprep.subr.mxu0 0.0
        %3367 = vmatpush1.msra.mxu0 0.0
        %3368 = vmatprep.subr.mxu0 0.0
        %3369 = vmatpush1.msra.mxu0 0.0
        %3370 = vmatprep.subr.mxu0 0.0
        %3371 = vmatpush1.msra.mxu0 0.0
        %3372 = vmatprep.subr.mxu0 0.0
        %3373 = vmatpush1.msra.mxu0 0.0
        %3374 = vmatprep.subr.mxu0 0.0
        %3375 = vmatpush1.msra.mxu0 0.0
        %3376 = vmatprep.subr.mxu0 0.0
        %3377 = vmatpush1.msra.mxu0 0.0
        %3378 = vmatprep.subr.mxu0 0.0
        %3379 = vmatpush1.msra.mxu0 0.0
        %3380 = vmatprep.subr.mxu0 0.0
        %3381 = vmatpush1.msra.mxu0 0.0
        %3382 = vmatprep.subr.mxu0 0.0
        %3383 = vmatpush1.msra.mxu0 0.0
        %3384 = vmatprep.subr.mxu0 0.0
        %3385 = vmatpush1.msra.mxu0 0.0
        %3386 = vmatprep.subr.mxu0 0.0
        %3387 = vmatpush1.msra.mxu0 0.0
        %3388 = vmatprep.subr.mxu0 0.0
        %3389 = vmatpush1.msra.mxu0 0.0
        %3390 = vmatprep.subr.mxu0 0.0
        %3391 = vmatpush1.msra.mxu0 0.0
        %3392 = vmatprep.subr.mxu0 0.0
        %3393 = vmatpush1.msra.mxu0 0.0
        %3394 = vmatprep.mubr.f32.mxu0 0.0
        %v3395 = vand.u32 %v3021, 4294901760
        %v3396 = vsub.f32 %v3021, %v3395
        %3397 = vmatmul.mubr.f32.gmra.mrb[0].mxu0 %v3396
        %v3398 = vpop.f32.mrb[0].mxu0
        %v3399 = vadd.f32 %v3289, %v3398
        %v3400 = vpop.f32.mrb[0].mxu0
        %3401 = vmatprep.mubr.f32.mxu0 0.0
        %v3402 = vand.u32 %v3022, 4294901760
        %v3403 = vsub.f32 %v3022, %v3402
        %3404 = vmatmul.mubr.f32.gmra.mrb[0].mxu0 %v3403
        %v3405 = vpop.f32.mrb[0].mxu0
        %v3406 = vadd.f32 %v3295, %v3405
        %v3407 = vpop.f32.mrb[0].mxu0
        %3408 = vdwg.mxu0
        %3409 = vmatprep.subr.mxu0 0.0
        %v3410 = vand.u32 %v3024, 4294901760
        %3411 = vmatpush1.msra.mxu0 %v3410
        %3412 = vmatprep.subr.mxu0 0.0
        %v3413 = vand.u32 %v3025, 4294901760
        %3414 = vmatpush1.msra.mxu0 %v3413
        %3415 = vmatprep.subr.mxu0 0.0
        %v3416 = vand.u32 %v3026, 4294901760
        %3417 = vmatpush1.msra.mxu0 %v3416
        %3418 = vmatprep.subr.mxu0 0.0
        %v3419 = vand.u32 %v3027, 4294901760
        %3420 = vmatpush1.msra.mxu0 %v3419
        %3421 = vmatprep.subr.mxu0 0.0
        %v3422 = vand.u32 %v3028, 4294901760
        %3423 = vmatpush1.msra.mxu0 %v3422
        %3424 = vmatprep.subr.mxu0 0.0
        %v3425 = vand.u32 %v3029, 4294901760
        %3426 = vmatpush1.msra.mxu0 %v3425
        %3427 = vmatprep.subr.mxu0 0.0
        %v3428 = vand.u32 %v3030, 4294901760
        %3429 = vmatpush1.msra.mxu0 %v3428
        %3430 = vmatprep.subr.mxu0 0.0
        %v3431 = vand.u32 %v3031, 4294901760
        %3432 = vmatpush1.msra.mxu0 %v3431
        %3433 = vmatprep.subr.mxu0 0.0
        %v3434 = vand.u32 %v3032, 4294901760
        %3435 = vmatpush1.msra.mxu0 %v3434
        %3436 = vmatprep.subr.mxu0 0.0
        %v3437 = vand.u32 %v3033, 4294901760
        %3438 = vmatpush1.msra.mxu0 %v3437
        %3439 = vmatprep.subr.mxu0 0.0
        %v3440 = vand.u32 %v3034, 4294901760
        %3441 = vmatpush1.msra.mxu0 %v3440
        %3442 = vmatprep.subr.mxu0 0.0
        %v3443 = vand.u32 %v3035, 4294901760
        %3444 = vmatpush1.msra.mxu0 %v3443
        %3445 = vmatprep.subr.mxu0 0.0
        %v3446 = vand.u32 %v3036, 4294901760
        %3447 = vmatpush1.msra.mxu0 %v3446
        %3448 = vmatprep.subr.mxu0 0.0
        %v3449 = vand.u32 %v3037, 4294901760
        %3450 = vmatpush1.msra.mxu0 %v3449
        %3451 = vmatprep.subr.mxu0 0.0
        %v3452 = vand.u32 %v3038, 4294901760
        %3453 = vmatpush1.msra.mxu0 %v3452
        %3454 = vmatprep.subr.mxu0 0.0
        %v3455 = vand.u32 %v3039, 4294901760
        %3456 = vmatpush1.msra.mxu0 %v3455
        %3457 = vmatprep.subr.mxu0 0.0
        %3458 = vmatpush1.msra.mxu0 0.0
        %3459 = vmatprep.subr.mxu0 0.0
        %3460 = vmatpush1.msra.mxu0 0.0
        %3461 = vmatprep.subr.mxu0 0.0
        %3462 = vmatpush1.msra.mxu0 0.0
        %3463 = vmatprep.subr.mxu0 0.0
        %3464 = vmatpush1.msra.mxu0 0.0
        %3465 = vmatprep.subr.mxu0 0.0
        %3466 = vmatpush1.msra.mxu0 0.0
        %3467 = vmatprep.subr.mxu0 0.0
        %3468 = vmatpush1.msra.mxu0 0.0
        %3469 = vmatprep.subr.mxu0 0.0
        %3470 = vmatpush1.msra.mxu0 0.0
        %3471 = vmatprep.subr.mxu0 0.0
        %3472 = vmatpush1.msra.mxu0 0.0
        %3473 = vmatprep.subr.mxu0 0.0
        %3474 = vmatpush1.msra.mxu0 0.0
        %3475 = vmatprep.subr.mxu0 0.0
        %3476 = vmatpush1.msra.mxu0 0.0
        %3477 = vmatprep.subr.mxu0 0.0
        %3478 = vmatpush1.msra.mxu0 0.0
        %3479 = vmatprep.subr.mxu0 0.0
        %3480 = vmatpush1.msra.mxu0 0.0
        %3481 = vmatprep.subr.mxu0 0.0
        %3482 = vmatpush1.msra.mxu0 0.0
        %3483 = vmatprep.subr.mxu0 0.0
        %3484 = vmatpush1.msra.mxu0 0.0
        %3485 = vmatprep.subr.mxu0 0.0
        %3486 = vmatpush1.msra.mxu0 0.0
        %3487 = vmatprep.subr.mxu0 0.0
        %3488 = vmatpush1.msra.mxu0 0.0
        %3489 = vmatprep.mubr.f32.mxu0 0.0
        %v3490 = vand.u32 %v3021, 4294901760
        %v3491 = vsub.f32 %v3021, %v3490
        %v3492 = vand.u32 %v3491, 4294901760
        %3493 = vmatmul.mubr.f32.gmra.mrb[0].mxu0 %v3492
        %v3494 = vpop.f32.mrb[0].mxu0
        %v3495 = vadd.f32 %v3399, %v3494
        %v3496 = vpop.f32.mrb[0].mxu0
        %3497 = vmatprep.mubr.f32.mxu0 0.0
        %v3498 = vand.u32 %v3022, 4294901760
        %v3499 = vsub.f32 %v3022, %v3498
        %v3500 = vand.u32 %v3499, 4294901760
        %3501 = vmatmul.mubr.f32.gmra.mrb[0].mxu0 %v3500
        %v3502 = vpop.f32.mrb[0].mxu0
        %v3503 = vadd.f32 %v3406, %v3502
        %v3504 = vpop.f32.mrb[0].mxu0
        %3505 = vdwg.mxu0
        %3506 = vmatprep.subr.mxu0 0.0
        %v3507 = vand.u32 %v3024, 4294901760
        %v3508 = vsub.f32 %v3024, %v3507
        %v3509 = vand.u32 %v3508, 4294901760
        %3510 = vmatpush1.msra.mxu0 %v3509
        %3511 = vmatprep.subr.mxu0 0.0
        %v3512 = vand.u32 %v3025, 4294901760
        %v3513 = vsub.f32 %v3025, %v3512
        %v3514 = vand.u32 %v3513, 4294901760
        %3515 = vmatpush1.msra.mxu0 %v3514
        %3516 = vmatprep.subr.mxu0 0.0
        %v3517 = vand.u32 %v3026, 4294901760
        %v3518 = vsub.f32 %v3026, %v3517
        %v3519 = vand.u32 %v3518, 4294901760
        %3520 = vmatpush1.msra.mxu0 %v3519
        %3521 = vmatprep.subr.mxu0 0.0
        %v3522 = vand.u32 %v3027, 4294901760
        %v3523 = vsub.f32 %v3027, %v3522
        %v3524 = vand.u32 %v3523, 4294901760
        %3525 = vmatpush1.msra.mxu0 %v3524
        %3526 = vmatprep.subr.mxu0 0.0
        %v3527 = vand.u32 %v3028, 4294901760
        %v3528 = vsub.f32 %v3028, %v3527
        %v3529 = vand.u32 %v3528, 4294901760
        %3530 = vmatpush1.msra.mxu0 %v3529
        %3531 = vmatprep.subr.mxu0 0.0
        %v3532 = vand.u32 %v3029, 4294901760
        %v3533 = vsub.f32 %v3029, %v3532
        %v3534 = vand.u32 %v3533, 4294901760
        %3535 = vmatpush1.msra.mxu0 %v3534
        %3536 = vmatprep.subr.mxu0 0.0
        %v3537 = vand.u32 %v3030, 4294901760
        %v3538 = vsub.f32 %v3030, %v3537
        %v3539 = vand.u32 %v3538, 4294901760
        %3540 = vmatpush1.msra.mxu0 %v3539
        %3541 = vmatprep.subr.mxu0 0.0
        %v3542 = vand.u32 %v3031, 4294901760
        %v3543 = vsub.f32 %v3031, %v3542
        %v3544 = vand.u32 %v3543, 4294901760
        %3545 = vmatpush1.msra.mxu0 %v3544
        %3546 = vmatprep.subr.mxu0 0.0
        %v3547 = vand.u32 %v3032, 4294901760
        %v3548 = vsub.f32 %v3032, %v3547
        %v3549 = vand.u32 %v3548, 4294901760
        %3550 = vmatpush1.msra.mxu0 %v3549
        %3551 = vmatprep.subr.mxu0 0.0
        %v3552 = vand.u32 %v3033, 4294901760
        %v3553 = vsub.f32 %v3033, %v3552
        %v3554 = vand.u32 %v3553, 4294901760
        %3555 = vmatpush1.msra.mxu0 %v3554
        %3556 = vmatprep.subr.mxu0 0.0
        %v3557 = vand.u32 %v3034, 4294901760
        %v3558 = vsub.f32 %v3034, %v3557
        %v3559 = vand.u32 %v3558, 4294901760
        %3560 = vmatpush1.msra.mxu0 %v3559
        %3561 = vmatprep.subr.mxu0 0.0
        %v3562 = vand.u32 %v3035, 4294901760
        %v3563 = vsub.f32 %v3035, %v3562
        %v3564 = vand.u32 %v3563, 4294901760
        %3565 = vmatpush1.msra.mxu0 %v3564
        %3566 = vmatprep.subr.mxu0 0.0
        %v3567 = vand.u32 %v3036, 4294901760
        %v3568 = vsub.f32 %v3036, %v3567
        %v3569 = vand.u32 %v3568, 4294901760
        %3570 = vmatpush1.msra.mxu0 %v3569
        %3571 = vmatprep.subr.mxu0 0.0
        %v3572 = vand.u32 %v3037, 4294901760
        %v3573 = vsub.f32 %v3037, %v3572
        %v3574 = vand.u32 %v3573, 4294901760
        %3575 = vmatpush1.msra.mxu0 %v3574
        %3576 = vmatprep.subr.mxu0 0.0
        %v3577 = vand.u32 %v3038, 4294901760
        %v3578 = vsub.f32 %v3038, %v3577
        %v3579 = vand.u32 %v3578, 4294901760
        %3580 = vmatpush1.msra.mxu0 %v3579
        %3581 = vmatprep.subr.mxu0 0.0
        %v3582 = vand.u32 %v3039, 4294901760
        %v3583 = vsub.f32 %v3039, %v3582
        %v3584 = vand.u32 %v3583, 4294901760
        %3585 = vmatpush1.msra.mxu0 %v3584
        %3586 = vmatprep.subr.mxu0 0.0
        %3587 = vmatpush1.msra.mxu0 0.0
        %3588 = vmatprep.subr.mxu0 0.0
        %3589 = vmatpush1.msra.mxu0 0.0
        %3590 = vmatprep.subr.mxu0 0.0
        %3591 = vmatpush1.msra.mxu0 0.0
        %3592 = vmatprep.subr.mxu0 0.0
        %3593 = vmatpush1.msra.mxu0 0.0
        %3594 = vmatprep.subr.mxu0 0.0
        %3595 = vmatpush1.msra.mxu0 0.0
        %3596 = vmatprep.subr.mxu0 0.0
        %3597 = vmatpush1.msra.mxu0 0.0
        %3598 = vmatprep.subr.mxu0 0.0
        %3599 = vmatpush1.msra.mxu0 0.0
        %3600 = vmatprep.subr.mxu0 0.0
        %3601 = vmatpush1.msra.mxu0 0.0
        %3602 = vmatprep.subr.mxu0 0.0
        %3603 = vmatpush1.msra.mxu0 0.0
        %3604 = vmatprep.subr.mxu0 0.0
        %3605 = vmatpush1.msra.mxu0 0.0
        %3606 = vmatprep.subr.mxu0 0.0
        %3607 = vmatpush1.msra.mxu0 0.0
        %3608 = vmatprep.subr.mxu0 0.0
        %3609 = vmatpush1.msra.mxu0 0.0
        %3610 = vmatprep.subr.mxu0 0.0
        %3611 = vmatpush1.msra.mxu0 0.0
        %3612 = vmatprep.subr.mxu0 0.0
        %3613 = vmatpush1.msra.mxu0 0.0
        %3614 = vmatprep.subr.mxu0 0.0
        %3615 = vmatpush1.msra.mxu0 0.0
        %3616 = vmatprep.subr.mxu0 0.0
        %3617 = vmatpush1.msra.mxu0 0.0
        %3618 = vmatprep.mubr.f32.mxu0 0.0
        %v3619 = vand.u32 %v3021, 4294901760
        %3620 = vmatmul.mubr.f32.gmra.mrb[0].mxu0 %v3619
        %v3621 = vpop.f32.mrb[0].mxu0
        %v3622 = vadd.f32 %v3495, %v3621
        %v3623 = vpop.f32.mrb[0].mxu0
        %3624 = vmatprep.mubr.f32.mxu0 0.0
        %v3625 = vand.u32 %v3022, 4294901760
        %3626 = vmatmul.mubr.f32.gmra.mrb[0].mxu0 %v3625
        %v3627 = vpop.f32.mrb[0].mxu0
        %v3628 = vadd.f32 %v3503, %v3627
        %v3629 = vpop.f32.mrb[0].mxu0
        %3630 = vdwg.mxu0
        %3631 = vmatprep.subr.mxu0 0.0
        %v3632 = vand.u32 %v3024, 4294901760
        %3633 = vmatpush1.msra.mxu0 %v3632
        %3634 = vmatprep.subr.mxu0 0.0
        %v3635 = vand.u32 %v3025, 4294901760
        %3636 = vmatpush1.msra.mxu0 %v3635
        %3637 = vmatprep.subr.mxu0 0.0
        %v3638 = vand.u32 %v3026, 4294901760
        %3639 = vmatpush1.msra.mxu0 %v3638
        %3640 = vmatprep.subr.mxu0 0.0
        %v3641 = vand.u32 %v3027, 4294901760
        %3642 = vmatpush1.msra.mxu0 %v3641
        %3643 = vmatprep.subr.mxu0 0.0
        %v3644 = vand.u32 %v3028, 4294901760
        %3645 = vmatpush1.msra.mxu0 %v3644
        %3646 = vmatprep.subr.mxu0 0.0
        %v3647 = vand.u32 %v3029, 4294901760
        %3648 = vmatpush1.msra.mxu0 %v3647
        %3649 = vmatprep.subr.mxu0 0.0
        %v3650 = vand.u32 %v3030, 4294901760
        %3651 = vmatpush1.msra.mxu0 %v3650
        %3652 = vmatprep.subr.mxu0 0.0
        %v3653 = vand.u32 %v3031, 4294901760
        %3654 = vmatpush1.msra.mxu0 %v3653
        %3655 = vmatprep.subr.mxu0 0.0
        %v3656 = vand.u32 %v3032, 4294901760
        %3657 = vmatpush1.msra.mxu0 %v3656
        %3658 = vmatprep.subr.mxu0 0.0
        %v3659 = vand.u32 %v3033, 4294901760
        %3660 = vmatpush1.msra.mxu0 %v3659
        %3661 = vmatprep.subr.mxu0 0.0
        %v3662 = vand.u32 %v3034, 4294901760
        %3663 = vmatpush1.msra.mxu0 %v3662
        %3664 = vmatprep.subr.mxu0 0.0
        %v3665 = vand.u32 %v3035, 4294901760
        %3666 = vmatpush1.msra.mxu0 %v3665
        %3667 = vmatprep.subr.mxu0 0.0
        %v3668 = vand.u32 %v3036, 4294901760
        %3669 = vmatpush1.msra.mxu0 %v3668
        %3670 = vmatprep.subr.mxu0 0.0
        %v3671 = vand.u32 %v3037, 4294901760
        %3672 = vmatpush1.msra.mxu0 %v3671
        %3673 = vmatprep.subr.mxu0 0.0
        %v3674 = vand.u32 %v3038, 4294901760
        %3675 = vmatpush1.msra.mxu0 %v3674
        %3676 = vmatprep.subr.mxu0 0.0
        %v3677 = vand.u32 %v3039, 4294901760
        %3678 = vmatpush1.msra.mxu0 %v3677
        %3679 = vmatprep.subr.mxu0 0.0
        %3680 = vmatpush1.msra.mxu0 0.0
        %3681 = vmatprep.subr.mxu0 0.0
        %3682 = vmatpush1.msra.mxu0 0.0
        %3683 = vmatprep.subr.mxu0 0.0
        %3684 = vmatpush1.msra.mxu0 0.0
        %3685 = vmatprep.subr.mxu0 0.0
        %3686 = vmatpush1.msra.mxu0 0.0
        %3687 = vmatprep.subr.mxu0 0.0
        %3688 = vmatpush1.msra.mxu0 0.0
        %3689 = vmatprep.subr.mxu0 0.0
        %3690 = vmatpush1.msra.mxu0 0.0
        %3691 = vmatprep.subr.mxu0 0.0
        %3692 = vmatpush1.msra.mxu0 0.0
        %3693 = vmatprep.subr.mxu0 0.0
        %3694 = vmatpush1.msra.mxu0 0.0
        %3695 = vmatprep.subr.mxu0 0.0
        %3696 = vmatpush1.msra.mxu0 0.0
        %3697 = vmatprep.subr.mxu0 0.0
        %3698 = vmatpush1.msra.mxu0 0.0
        %3699 = vmatprep.subr.mxu0 0.0
        %3700 = vmatpush1.msra.mxu0 0.0
        %3701 = vmatprep.subr.mxu0 0.0
        %3702 = vmatpush1.msra.mxu0 0.0
        %3703 = vmatprep.subr.mxu0 0.0
        %3704 = vmatpush1.msra.mxu0 0.0
        %3705 = vmatprep.subr.mxu0 0.0
        %3706 = vmatpush1.msra.mxu0 0.0
        %3707 = vmatprep.subr.mxu0 0.0
        %3708 = vmatpush1.msra.mxu0 0.0
        %3709 = vmatprep.subr.mxu0 0.0
        %3710 = vmatpush1.msra.mxu0 0.0
        %3711 = vmatprep.mubr.f32.mxu0 0.0
        %v3712 = vand.u32 %v3021, 4294901760
        %3713 = vmatmul.mubr.f32.gmra.mrb[0].mxu0 %v3712
        %v3714 = vpop.f32.mrb[0].mxu0
        %v3715 = vadd.f32 %v3622, %v3714
        %v3716 = vpop.f32.mrb[0].mxu0
        %3717 = vmatprep.mubr.f32.mxu0 0.0
        %v3718 = vand.u32 %v3022, 4294901760
        %3719 = vmatmul.mubr.f32.gmra.mrb[0].mxu0 %v3718
        %v3720 = vpop.f32.mrb[0].mxu0
        %v3721 = vadd.f32 %v3628, %v3720
        %v3722 = vpop.f32.mrb[0].mxu0
        %3723 = vdwg.mxu0
        %v3724 = vadd.f32 %v3019, %v3715
        %v3725 = vadd.f32 %v3020, %v3721
        %v3726 = vld [vmem:[#allocation2 + $0x5] sm:$0xff]
        %v3727 = vld [vmem:[#allocation2 + $0xd] sm:$0xff]
        %s3728 = scalar_lea.vmem %s1, 640
        %v3729 = vld [vmem:[%s3728] sm:$0xff]
        %v3730 = vld [vmem:[%s3728 + $0x8] sm:$0xff]
        %v3731 = vld [vmem:[%s3728 + $0x10] sm:$0xff]
        %v3732 = vld [vmem:[%s3728 + $0x18] sm:$0xff]
        %v3733 = vld [vmem:[%s3728 + $0x20] sm:$0xff]
        %v3734 = vld [vmem:[%s3728 + $0x28] sm:$0xff]
        %v3735 = vld [vmem:[%s3728 + $0x30] sm:$0xff]
        %v3736 = vld [vmem:[%s3728 + $0x38] sm:$0xff]
        %v3737 = vld [vmem:[%s3728 + $0x40] sm:$0xff]
        %v3738 = vld [vmem:[%s3728 + $0x48] sm:$0xff]
        %v3739 = vld [vmem:[%s3728 + $0x50] sm:$0xff]
        %v3740 = vld [vmem:[%s3728 + $0x58] sm:$0xff]
        %v3741 = vld [vmem:[%s3728 + $0x60] sm:$0xff]
        %v3742 = vld [vmem:[%s3728 + $0x68] sm:$0xff]
        %v3743 = vld [vmem:[%s3728 + $0x70] sm:$0xff]
        %v3744 = vld [vmem:[%s3728 + $0x78] sm:$0xff]
        %3745 = vmatprep.subr.mxu0 0.0
        %v3746 = vand.u32 %v3729, 4294901760
        %3747 = vmatpush1.msra.mxu0 %v3746
        %3748 = vmatprep.subr.mxu0 0.0
        %v3749 = vand.u32 %v3730, 4294901760
        %3750 = vmatpush1.msra.mxu0 %v3749
        %3751 = vmatprep.subr.mxu0 0.0
        %v3752 = vand.u32 %v3731, 4294901760
        %3753 = vmatpush1.msra.mxu0 %v3752
        %3754 = vmatprep.subr.mxu0 0.0
        %v3755 = vand.u32 %v3732, 4294901760
        %3756 = vmatpush1.msra.mxu0 %v3755
        %3757 = vmatprep.subr.mxu0 0.0
        %v3758 = vand.u32 %v3733, 4294901760
        %3759 = vmatpush1.msra.mxu0 %v3758
        %3760 = vmatprep.subr.mxu0 0.0
        %v3761 = vand.u32 %v3734, 4294901760
        %3762 = vmatpush1.msra.mxu0 %v3761
        %3763 = vmatprep.subr.mxu0 0.0
        %v3764 = vand.u32 %v3735, 4294901760
        %3765 = vmatpush1.msra.mxu0 %v3764
        %3766 = vmatprep.subr.mxu0 0.0
        %v3767 = vand.u32 %v3736, 4294901760
        %3768 = vmatpush1.msra.mxu0 %v3767
        %3769 = vmatprep.subr.mxu0 0.0
        %v3770 = vand.u32 %v3737, 4294901760
        %3771 = vmatpush1.msra.mxu0 %v3770
        %3772 = vmatprep.subr.mxu0 0.0
        %v3773 = vand.u32 %v3738, 4294901760
        %3774 = vmatpush1.msra.mxu0 %v3773
        %3775 = vmatprep.subr.mxu0 0.0
        %v3776 = vand.u32 %v3739, 4294901760
        %3777 = vmatpush1.msra.mxu0 %v3776
        %3778 = vmatprep.subr.mxu0 0.0
        %v3779 = vand.u32 %v3740, 4294901760
        %3780 = vmatpush1.msra.mxu0 %v3779
        %3781 = vmatprep.subr.mxu0 0.0
        %v3782 = vand.u32 %v3741, 4294901760
        %3783 = vmatpush1.msra.mxu0 %v3782
        %3784 = vmatprep.subr.mxu0 0.0
        %v3785 = vand.u32 %v3742, 4294901760
        %3786 = vmatpush1.msra.mxu0 %v3785
        %3787 = vmatprep.subr.mxu0 0.0
        %v3788 = vand.u32 %v3743, 4294901760
        %3789 = vmatpush1.msra.mxu0 %v3788
        %3790 = vmatprep.subr.mxu0 0.0
        %v3791 = vand.u32 %v3744, 4294901760
        %3792 = vmatpush1.msra.mxu0 %v3791
        %3793 = vmatprep.subr.mxu0 0.0
        %3794 = vmatpush1.msra.mxu0 0.0
        %3795 = vmatprep.subr.mxu0 0.0
        %3796 = vmatpush1.msra.mxu0 0.0
        %3797 = vmatprep.subr.mxu0 0.0
        %3798 = vmatpush1.msra.mxu0 0.0
        %3799 = vmatprep.subr.mxu0 0.0
        %3800 = vmatpush1.msra.mxu0 0.0
        %3801 = vmatprep.subr.mxu0 0.0
        %3802 = vmatpush1.msra.mxu0 0.0
        %3803 = vmatprep.subr.mxu0 0.0
        %3804 = vmatpush1.msra.mxu0 0.0
        %3805 = vmatprep.subr.mxu0 0.0
        %3806 = vmatpush1.msra.mxu0 0.0
        %3807 = vmatprep.subr.mxu0 0.0
        %3808 = vmatpush1.msra.mxu0 0.0
        %3809 = vmatprep.subr.mxu0 0.0
        %3810 = vmatpush1.msra.mxu0 0.0
        %3811 = vmatprep.subr.mxu0 0.0
        %3812 = vmatpush1.msra.mxu0 0.0
        %3813 = vmatprep.subr.mxu0 0.0
        %3814 = vmatpush1.msra.mxu0 0.0
        %3815 = vmatprep.subr.mxu0 0.0
        %3816 = vmatpush1.msra.mxu0 0.0
        %3817 = vmatprep.subr.mxu0 0.0
        %3818 = vmatpush1.msra.mxu0 0.0
        %3819 = vmatprep.subr.mxu0 0.0
        %3820 = vmatpush1.msra.mxu0 0.0
        %3821 = vmatprep.subr.mxu0 0.0
        %3822 = vmatpush1.msra.mxu0 0.0
        %3823 = vmatprep.subr.mxu0 0.0
        %3824 = vmatpush1.msra.mxu0 0.0
        %3825 = vmatprep.mubr.f32.mxu0 0.0
        %v3826 = vand.u32 %v3726, 4294901760
        %v3827 = vsub.f32 %v3726, %v3826
        %v3828 = vand.u32 %v3827, 4294901760
        %v3829 = vsub.f32 %v3827, %v3828
        %v3830 = vand.u32 %v3829, 4294901760
        %3831 = vmatmul.mubr.f32.gmra.mrb[0].mxu0 %v3830
        %v3832 = vpop.f32.mrb[0].mxu0
        %v3833 = vadd.f32 0.0, %v3832
        %v3834 = vpop.f32.mrb[0].mxu0
        %3835 = vmatprep.mubr.f32.mxu0 0.0
        %v3836 = vand.u32 %v3727, 4294901760
        %v3837 = vsub.f32 %v3727, %v3836
        %v3838 = vand.u32 %v3837, 4294901760
        %v3839 = vsub.f32 %v3837, %v3838
        %v3840 = vand.u32 %v3839, 4294901760
        %3841 = vmatmul.mubr.f32.gmra.mrb[0].mxu0 %v3840
        %v3842 = vpop.f32.mrb[0].mxu0
        %v3843 = vadd.f32 0.0, %v3842
        %v3844 = vpop.f32.mrb[0].mxu0
        %3845 = vdwg.mxu0
        %3846 = vmatprep.subr.mxu0 0.0
        %v3847 = vand.u32 %v3729, 4294901760
        %v3848 = vsub.f32 %v3729, %v3847
        %v3849 = vand.u32 %v3848, 4294901760
        %v3850 = vsub.f32 %v3848, %v3849
        %v3851 = vand.u32 %v3850, 4294901760
        %3852 = vmatpush1.msra.mxu0 %v3851
        %3853 = vmatprep.subr.mxu0 0.0
        %v3854 = vand.u32 %v3730, 4294901760
        %v3855 = vsub.f32 %v3730, %v3854
        %v3856 = vand.u32 %v3855, 4294901760
        %v3857 = vsub.f32 %v3855, %v3856
        %v3858 = vand.u32 %v3857, 4294901760
        %3859 = vmatpush1.msra.mxu0 %v3858
        %3860 = vmatprep.subr.mxu0 0.0
        %v3861 = vand.u32 %v3731, 4294901760
        %v3862 = vsub.f32 %v3731, %v3861
        %v3863 = vand.u32 %v3862, 4294901760
        %v3864 = vsub.f32 %v3862, %v3863
        %v3865 = vand.u32 %v3864, 4294901760
        %3866 = vmatpush1.msra.mxu0 %v3865
        %3867 = vmatprep.subr.mxu0 0.0
        %v3868 = vand.u32 %v3732, 4294901760
        %v3869 = vsub.f32 %v3732, %v3868
        %v3870 = vand.u32 %v3869, 4294901760
        %v3871 = vsub.f32 %v3869, %v3870
        %v3872 = vand.u32 %v3871, 4294901760
        %3873 = vmatpush1.msra.mxu0 %v3872
        %3874 = vmatprep.subr.mxu0 0.0
        %v3875 = vand.u32 %v3733, 4294901760
        %v3876 = vsub.f32 %v3733, %v3875
        %v3877 = vand.u32 %v3876, 4294901760
        %v3878 = vsub.f32 %v3876, %v3877
        %v3879 = vand.u32 %v3878, 4294901760
        %3880 = vmatpush1.msra.mxu0 %v3879
        %3881 = vmatprep.subr.mxu0 0.0
        %v3882 = vand.u32 %v3734, 4294901760
        %v3883 = vsub.f32 %v3734, %v3882
        %v3884 = vand.u32 %v3883, 4294901760
        %v3885 = vsub.f32 %v3883, %v3884
        %v3886 = vand.u32 %v3885, 4294901760
        %3887 = vmatpush1.msra.mxu0 %v3886
        %3888 = vmatprep.subr.mxu0 0.0
        %v3889 = vand.u32 %v3735, 4294901760
        %v3890 = vsub.f32 %v3735, %v3889
        %v3891 = vand.u32 %v3890, 4294901760
        %v3892 = vsub.f32 %v3890, %v3891
        %v3893 = vand.u32 %v3892, 4294901760
        %3894 = vmatpush1.msra.mxu0 %v3893
        %3895 = vmatprep.subr.mxu0 0.0
        %v3896 = vand.u32 %v3736, 4294901760
        %v3897 = vsub.f32 %v3736, %v3896
        %v3898 = vand.u32 %v3897, 4294901760
        %v3899 = vsub.f32 %v3897, %v3898
        %v3900 = vand.u32 %v3899, 4294901760
        %3901 = vmatpush1.msra.mxu0 %v3900
        %3902 = vmatprep.subr.mxu0 0.0
        %v3903 = vand.u32 %v3737, 4294901760
        %v3904 = vsub.f32 %v3737, %v3903
        %v3905 = vand.u32 %v3904, 4294901760
        %v3906 = vsub.f32 %v3904, %v3905
        %v3907 = vand.u32 %v3906, 4294901760
        %3908 = vmatpush1.msra.mxu0 %v3907
        %3909 = vmatprep.subr.mxu0 0.0
        %v3910 = vand.u32 %v3738, 4294901760
        %v3911 = vsub.f32 %v3738, %v3910
        %v3912 = vand.u32 %v3911, 4294901760
        %v3913 = vsub.f32 %v3911, %v3912
        %v3914 = vand.u32 %v3913, 4294901760
        %3915 = vmatpush1.msra.mxu0 %v3914
        %3916 = vmatprep.subr.mxu0 0.0
        %v3917 = vand.u32 %v3739, 4294901760
        %v3918 = vsub.f32 %v3739, %v3917
        %v3919 = vand.u32 %v3918, 4294901760
        %v3920 = vsub.f32 %v3918, %v3919
        %v3921 = vand.u32 %v3920, 4294901760
        %3922 = vmatpush1.msra.mxu0 %v3921
        %3923 = vmatprep.subr.mxu0 0.0
        %v3924 = vand.u32 %v3740, 4294901760
        %v3925 = vsub.f32 %v3740, %v3924
        %v3926 = vand.u32 %v3925, 4294901760
        %v3927 = vsub.f32 %v3925, %v3926
        %v3928 = vand.u32 %v3927, 4294901760
        %3929 = vmatpush1.msra.mxu0 %v3928
        %3930 = vmatprep.subr.mxu0 0.0
        %v3931 = vand.u32 %v3741, 4294901760
        %v3932 = vsub.f32 %v3741, %v3931
        %v3933 = vand.u32 %v3932, 4294901760
        %v3934 = vsub.f32 %v3932, %v3933
        %v3935 = vand.u32 %v3934, 4294901760
        %3936 = vmatpush1.msra.mxu0 %v3935
        %3937 = vmatprep.subr.mxu0 0.0
        %v3938 = vand.u32 %v3742, 4294901760
        %v3939 = vsub.f32 %v3742, %v3938
        %v3940 = vand.u32 %v3939, 4294901760
        %v3941 = vsub.f32 %v3939, %v3940
        %v3942 = vand.u32 %v3941, 4294901760
        %3943 = vmatpush1.msra.mxu0 %v3942
        %3944 = vmatprep.subr.mxu0 0.0
        %v3945 = vand.u32 %v3743, 4294901760
        %v3946 = vsub.f32 %v3743, %v3945
        %v3947 = vand.u32 %v3946, 4294901760
        %v3948 = vsub.f32 %v3946, %v3947
        %v3949 = vand.u32 %v3948, 4294901760
        %3950 = vmatpush1.msra.mxu0 %v3949
        %3951 = vmatprep.subr.mxu0 0.0
        %v3952 = vand.u32 %v3744, 4294901760
        %v3953 = vsub.f32 %v3744, %v3952
        %v3954 = vand.u32 %v3953, 4294901760
        %v3955 = vsub.f32 %v3953, %v3954
        %v3956 = vand.u32 %v3955, 4294901760
        %3957 = vmatpush1.msra.mxu0 %v3956
        %3958 = vmatprep.subr.mxu0 0.0
        %3959 = vmatpush1.msra.mxu0 0.0
        %3960 = vmatprep.subr.mxu0 0.0
        %3961 = vmatpush1.msra.mxu0 0.0
        %3962 = vmatprep.subr.mxu0 0.0
        %3963 = vmatpush1.msra.mxu0 0.0
        %3964 = vmatprep.subr.mxu0 0.0
        %3965 = vmatpush1.msra.mxu0 0.0
        %3966 = vmatprep.subr.mxu0 0.0
        %3967 = vmatpush1.msra.mxu0 0.0
        %3968 = vmatprep.subr.mxu0 0.0
        %3969 = vmatpush1.msra.mxu0 0.0
        %3970 = vmatprep.subr.mxu0 0.0
        %3971 = vmatpush1.msra.mxu0 0.0
        %3972 = vmatprep.subr.mxu0 0.0
        %3973 = vmatpush1.msra.mxu0 0.0
        %3974 = vmatprep.subr.mxu0 0.0
        %3975 = vmatpush1.msra.mxu0 0.0
        %3976 = vmatprep.subr.mxu0 0.0
        %3977 = vmatpush1.msra.mxu0 0.0
        %3978 = vmatprep.subr.mxu0 0.0
        %3979 = vmatpush1.msra.mxu0 0.0
        %3980 = vmatprep.subr.mxu0 0.0
        %3981 = vmatpush1.msra.mxu0 0.0
        %3982 = vmatprep.subr.mxu0 0.0
        %3983 = vmatpush1.msra.mxu0 0.0
        %3984 = vmatprep.subr.mxu0 0.0
        %3985 = vmatpush1.msra.mxu0 0.0
        %3986 = vmatprep.subr.mxu0 0.0
        %3987 = vmatpush1.msra.mxu0 0.0
        %3988 = vmatprep.subr.mxu0 0.0
        %3989 = vmatpush1.msra.mxu0 0.0
        %3990 = vmatprep.mubr.f32.mxu0 0.0
        %v3991 = vand.u32 %v3726, 4294901760
        %3992 = vmatmul.mubr.f32.gmra.mrb[0].mxu0 %v3991
        %v3993 = vpop.f32.mrb[0].mxu0
        %v3994 = vadd.f32 %v3833, %v3993
        %v3995 = vpop.f32.mrb[0].mxu0
        %3996 = vmatprep.mubr.f32.mxu0 0.0
        %v3997 = vand.u32 %v3727, 4294901760
        %3998 = vmatmul.mubr.f32.gmra.mrb[0].mxu0 %v3997
        %v3999 = vpop.f32.mrb[0].mxu0
        %v4000 = vadd.f32 %v3843, %v3999
        %v4001 = vpop.f32.mrb[0].mxu0
        %4002 = vdwg.mxu0
        %4003 = vmatprep.subr.mxu0 0.0
        %v4004 = vand.u32 %v3729, 4294901760
        %v4005 = vsub.f32 %v3729, %v4004
        %4006 = vmatpush1.msra.mxu0 %v4005
        %4007 = vmatprep.subr.mxu0 0.0
        %v4008 = vand.u32 %v3730, 4294901760
        %v4009 = vsub.f32 %v3730, %v4008
        %4010 = vmatpush1.msra.mxu0 %v4009
        %4011 = vmatprep.subr.mxu0 0.0
        %v4012 = vand.u32 %v3731, 4294901760
        %v4013 = vsub.f32 %v3731, %v4012
        %4014 = vmatpush1.msra.mxu0 %v4013
        %4015 = vmatprep.subr.mxu0 0.0
        %v4016 = vand.u32 %v3732, 4294901760
        %v4017 = vsub.f32 %v3732, %v4016
        %4018 = vmatpush1.msra.mxu0 %v4017
        %4019 = vmatprep.subr.mxu0 0.0
        %v4020 = vand.u32 %v3733, 4294901760
        %v4021 = vsub.f32 %v3733, %v4020
        %4022 = vmatpush1.msra.mxu0 %v4021
        %4023 = vmatprep.subr.mxu0 0.0
        %v4024 = vand.u32 %v3734, 4294901760
        %v4025 = vsub.f32 %v3734, %v4024
        %4026 = vmatpush1.msra.mxu0 %v4025
        %4027 = vmatprep.subr.mxu0 0.0
        %v4028 = vand.u32 %v3735, 4294901760
        %v4029 = vsub.f32 %v3735, %v4028
        %4030 = vmatpush1.msra.mxu0 %v4029
        %4031 = vmatprep.subr.mxu0 0.0
        %v4032 = vand.u32 %v3736, 4294901760
        %v4033 = vsub.f32 %v3736, %v4032
        %4034 = vmatpush1.msra.mxu0 %v4033
        %4035 = vmatprep.subr.mxu0 0.0
        %v4036 = vand.u32 %v3737, 4294901760
        %v4037 = vsub.f32 %v3737, %v4036
        %4038 = vmatpush1.msra.mxu0 %v4037
        %4039 = vmatprep.subr.mxu0 0.0
        %v4040 = vand.u32 %v3738, 4294901760
        %v4041 = vsub.f32 %v3738, %v4040
        %4042 = vmatpush1.msra.mxu0 %v4041
        %4043 = vmatprep.subr.mxu0 0.0
        %v4044 = vand.u32 %v3739, 4294901760
        %v4045 = vsub.f32 %v3739, %v4044
        %4046 = vmatpush1.msra.mxu0 %v4045
        %4047 = vmatprep.subr.mxu0 0.0
        %v4048 = vand.u32 %v3740, 4294901760
        %v4049 = vsub.f32 %v3740, %v4048
        %4050 = vmatpush1.msra.mxu0 %v4049
        %4051 = vmatprep.subr.mxu0 0.0
        %v4052 = vand.u32 %v3741, 4294901760
        %v4053 = vsub.f32 %v3741, %v4052
        %4054 = vmatpush1.msra.mxu0 %v4053
        %4055 = vmatprep.subr.mxu0 0.0
        %v4056 = vand.u32 %v3742, 4294901760
        %v4057 = vsub.f32 %v3742, %v4056
        %4058 = vmatpush1.msra.mxu0 %v4057
        %4059 = vmatprep.subr.mxu0 0.0
        %v4060 = vand.u32 %v3743, 4294901760
        %v4061 = vsub.f32 %v3743, %v4060
        %4062 = vmatpush1.msra.mxu0 %v4061
        %4063 = vmatprep.subr.mxu0 0.0
        %v4064 = vand.u32 %v3744, 4294901760
        %v4065 = vsub.f32 %v3744, %v4064
        %4066 = vmatpush1.msra.mxu0 %v4065
        %4067 = vmatprep.subr.mxu0 0.0
        %4068 = vmatpush1.msra.mxu0 0.0
        %4069 = vmatprep.subr.mxu0 0.0
        %4070 = vmatpush1.msra.mxu0 0.0
        %4071 = vmatprep.subr.mxu0 0.0
        %4072 = vmatpush1.msra.mxu0 0.0
        %4073 = vmatprep.subr.mxu0 0.0
        %4074 = vmatpush1.msra.mxu0 0.0
        %4075 = vmatprep.subr.mxu0 0.0
        %4076 = vmatpush1.msra.mxu0 0.0
        %4077 = vmatprep.subr.mxu0 0.0
        %4078 = vmatpush1.msra.mxu0 0.0
        %4079 = vmatprep.subr.mxu0 0.0
        %4080 = vmatpush1.msra.mxu0 0.0
        %4081 = vmatprep.subr.mxu0 0.0
        %4082 = vmatpush1.msra.mxu0 0.0
        %4083 = vmatprep.subr.mxu0 0.0
        %4084 = vmatpush1.msra.mxu0 0.0
        %4085 = vmatprep.subr.mxu0 0.0
        %4086 = vmatpush1.msra.mxu0 0.0
        %4087 = vmatprep.subr.mxu0 0.0
        %4088 = vmatpush1.msra.mxu0 0.0
        %4089 = vmatprep.subr.mxu0 0.0
        %4090 = vmatpush1.msra.mxu0 0.0
        %4091 = vmatprep.subr.mxu0 0.0
        %4092 = vmatpush1.msra.mxu0 0.0
        %4093 = vmatprep.subr.mxu0 0.0
        %4094 = vmatpush1.msra.mxu0 0.0
        %4095 = vmatprep.subr.mxu0 0.0
        %4096 = vmatpush1.msra.mxu0 0.0
        %4097 = vmatprep.subr.mxu0 0.0
        %4098 = vmatpush1.msra.mxu0 0.0
        %4099 = vmatprep.mubr.f32.mxu0 0.0
        %v4100 = vand.u32 %v3726, 4294901760
        %v4101 = vsub.f32 %v3726, %v4100
        %4102 = vmatmul.mubr.f32.gmra.mrb[0].mxu0 %v4101
        %v4103 = vpop.f32.mrb[0].mxu0
        %v4104 = vadd.f32 %v3994, %v4103
        %v4105 = vpop.f32.mrb[0].mxu0
        %4106 = vmatprep.mubr.f32.mxu0 0.0
        %v4107 = vand.u32 %v3727, 4294901760
        %v4108 = vsub.f32 %v3727, %v4107
        %4109 = vmatmul.mubr.f32.gmra.mrb[0].mxu0 %v4108
        %v4110 = vpop.f32.mrb[0].mxu0
        %v4111 = vadd.f32 %v4000, %v4110
        %v4112 = vpop.f32.mrb[0].mxu0
        %4113 = vdwg.mxu0
        %4114 = vmatprep.subr.mxu0 0.0
        %v4115 = vand.u32 %v3729, 4294901760
        %4116 = vmatpush1.msra.mxu0 %v4115
        %4117 = vmatprep.subr.mxu0 0.0
        %v4118 = vand.u32 %v3730, 4294901760
        %4119 = vmatpush1.msra.mxu0 %v4118
        %4120 = vmatprep.subr.mxu0 0.0
        %v4121 = vand.u32 %v3731, 4294901760
        %4122 = vmatpush1.msra.mxu0 %v4121
        %4123 = vmatprep.subr.mxu0 0.0
        %v4124 = vand.u32 %v3732, 4294901760
        %4125 = vmatpush1.msra.mxu0 %v4124
        %4126 = vmatprep.subr.mxu0 0.0
        %v4127 = vand.u32 %v3733, 4294901760
        %4128 = vmatpush1.msra.mxu0 %v4127
        %4129 = vmatprep.subr.mxu0 0.0
        %v4130 = vand.u32 %v3734, 4294901760
        %4131 = vmatpush1.msra.mxu0 %v4130
        %4132 = vmatprep.subr.mxu0 0.0
        %v4133 = vand.u32 %v3735, 4294901760
        %4134 = vmatpush1.msra.mxu0 %v4133
        %4135 = vmatprep.subr.mxu0 0.0
        %v4136 = vand.u32 %v3736, 4294901760
        %4137 = vmatpush1.msra.mxu0 %v4136
        %4138 = vmatprep.subr.mxu0 0.0
        %v4139 = vand.u32 %v3737, 4294901760
        %4140 = vmatpush1.msra.mxu0 %v4139
        %4141 = vmatprep.subr.mxu0 0.0
        %v4142 = vand.u32 %v3738, 4294901760
        %4143 = vmatpush1.msra.mxu0 %v4142
        %4144 = vmatprep.subr.mxu0 0.0
        %v4145 = vand.u32 %v3739, 4294901760
        %4146 = vmatpush1.msra.mxu0 %v4145
        %4147 = vmatprep.subr.mxu0 0.0
        %v4148 = vand.u32 %v3740, 4294901760
        %4149 = vmatpush1.msra.mxu0 %v4148
        %4150 = vmatprep.subr.mxu0 0.0
        %v4151 = vand.u32 %v3741, 4294901760
        %4152 = vmatpush1.msra.mxu0 %v4151
        %4153 = vmatprep.subr.mxu0 0.0
        %v4154 = vand.u32 %v3742, 4294901760
        %4155 = vmatpush1.msra.mxu0 %v4154
        %4156 = vmatprep.subr.mxu0 0.0
        %v4157 = vand.u32 %v3743, 4294901760
        %4158 = vmatpush1.msra.mxu0 %v4157
        %4159 = vmatprep.subr.mxu0 0.0
        %v4160 = vand.u32 %v3744, 4294901760
        %4161 = vmatpush1.msra.mxu0 %v4160
        %4162 = vmatprep.subr.mxu0 0.0
        %4163 = vmatpush1.msra.mxu0 0.0
        %4164 = vmatprep.subr.mxu0 0.0
        %4165 = vmatpush1.msra.mxu0 0.0
        %4166 = vmatprep.subr.mxu0 0.0
        %4167 = vmatpush1.msra.mxu0 0.0
        %4168 = vmatprep.subr.mxu0 0.0
        %4169 = vmatpush1.msra.mxu0 0.0
        %4170 = vmatprep.subr.mxu0 0.0
        %4171 = vmatpush1.msra.mxu0 0.0
        %4172 = vmatprep.subr.mxu0 0.0
        %4173 = vmatpush1.msra.mxu0 0.0
        %4174 = vmatprep.subr.mxu0 0.0
        %4175 = vmatpush1.msra.mxu0 0.0
        %4176 = vmatprep.subr.mxu0 0.0
        %4177 = vmatpush1.msra.mxu0 0.0
        %4178 = vmatprep.subr.mxu0 0.0
        %4179 = vmatpush1.msra.mxu0 0.0
        %4180 = vmatprep.subr.mxu0 0.0
        %4181 = vmatpush1.msra.mxu0 0.0
        %4182 = vmatprep.subr.mxu0 0.0
        %4183 = vmatpush1.msra.mxu0 0.0
        %4184 = vmatprep.subr.mxu0 0.0
        %4185 = vmatpush1.msra.mxu0 0.0
        %4186 = vmatprep.subr.mxu0 0.0
        %4187 = vmatpush1.msra.mxu0 0.0
        %4188 = vmatprep.subr.mxu0 0.0
        %4189 = vmatpush1.msra.mxu0 0.0
        %4190 = vmatprep.subr.mxu0 0.0
        %4191 = vmatpush1.msra.mxu0 0.0
        %4192 = vmatprep.subr.mxu0 0.0
        %4193 = vmatpush1.msra.mxu0 0.0
        %4194 = vmatprep.mubr.f32.mxu0 0.0
        %v4195 = vand.u32 %v3726, 4294901760
        %v4196 = vsub.f32 %v3726, %v4195
        %v4197 = vand.u32 %v4196, 4294901760
        %4198 = vmatmul.mubr.f32.gmra.mrb[0].mxu0 %v4197
        %v4199 = vpop.f32.mrb[0].mxu0
        %v4200 = vadd.f32 %v4104, %v4199
        %v4201 = vpop.f32.mrb[0].mxu0
        %4202 = vmatprep.mubr.f32.mxu0 0.0
        %v4203 = vand.u32 %v3727, 4294901760
        %v4204 = vsub.f32 %v3727, %v4203
        %v4205 = vand.u32 %v4204, 4294901760
        %4206 = vmatmul.mubr.f32.gmra.mrb[0].mxu0 %v4205
        %v4207 = vpop.f32.mrb[0].mxu0
        %v4208 = vadd.f32 %v4111, %v4207
        %v4209 = vpop.f32.mrb[0].mxu0
        %4210 = vdwg.mxu0
        %4211 = vmatprep.subr.mxu0 0.0
        %v4212 = vand.u32 %v3729, 4294901760
        %v4213 = vsub.f32 %v3729, %v4212
        %v4214 = vand.u32 %v4213, 4294901760
        %4215 = vmatpush1.msra.mxu0 %v4214
        %4216 = vmatprep.subr.mxu0 0.0
        %v4217 = vand.u32 %v3730, 4294901760
        %v4218 = vsub.f32 %v3730, %v4217
        %v4219 = vand.u32 %v4218, 4294901760
        %4220 = vmatpush1.msra.mxu0 %v4219
        %4221 = vmatprep.subr.mxu0 0.0
        %v4222 = vand.u32 %v3731, 4294901760
        %v4223 = vsub.f32 %v3731, %v4222
        %v4224 = vand.u32 %v4223, 4294901760
        %4225 = vmatpush1.msra.mxu0 %v4224
        %4226 = vmatprep.subr.mxu0 0.0
        %v4227 = vand.u32 %v3732, 4294901760
        %v4228 = vsub.f32 %v3732, %v4227
        %v4229 = vand.u32 %v4228, 4294901760
        %4230 = vmatpush1.msra.mxu0 %v4229
        %4231 = vmatprep.subr.mxu0 0.0
        %v4232 = vand.u32 %v3733, 4294901760
        %v4233 = vsub.f32 %v3733, %v4232
        %v4234 = vand.u32 %v4233, 4294901760
        %4235 = vmatpush1.msra.mxu0 %v4234
        %4236 = vmatprep.subr.mxu0 0.0
        %v4237 = vand.u32 %v3734, 4294901760
        %v4238 = vsub.f32 %v3734, %v4237
        %v4239 = vand.u32 %v4238, 4294901760
        %4240 = vmatpush1.msra.mxu0 %v4239
        %4241 = vmatprep.subr.mxu0 0.0
        %v4242 = vand.u32 %v3735, 4294901760
        %v4243 = vsub.f32 %v3735, %v4242
        %v4244 = vand.u32 %v4243, 4294901760
        %4245 = vmatpush1.msra.mxu0 %v4244
        %4246 = vmatprep.subr.mxu0 0.0
        %v4247 = vand.u32 %v3736, 4294901760
        %v4248 = vsub.f32 %v3736, %v4247
        %v4249 = vand.u32 %v4248, 4294901760
        %4250 = vmatpush1.msra.mxu0 %v4249
        %4251 = vmatprep.subr.mxu0 0.0
        %v4252 = vand.u32 %v3737, 4294901760
        %v4253 = vsub.f32 %v3737, %v4252
        %v4254 = vand.u32 %v4253, 4294901760
        %4255 = vmatpush1.msra.mxu0 %v4254
        %4256 = vmatprep.subr.mxu0 0.0
        %v4257 = vand.u32 %v3738, 4294901760
        %v4258 = vsub.f32 %v3738, %v4257
        %v4259 = vand.u32 %v4258, 4294901760
        %4260 = vmatpush1.msra.mxu0 %v4259
        %4261 = vmatprep.subr.mxu0 0.0
        %v4262 = vand.u32 %v3739, 4294901760
        %v4263 = vsub.f32 %v3739, %v4262
        %v4264 = vand.u32 %v4263, 4294901760
        %4265 = vmatpush1.msra.mxu0 %v4264
        %4266 = vmatprep.subr.mxu0 0.0
        %v4267 = vand.u32 %v3740, 4294901760
        %v4268 = vsub.f32 %v3740, %v4267
        %v4269 = vand.u32 %v4268, 4294901760
        %4270 = vmatpush1.msra.mxu0 %v4269
        %4271 = vmatprep.subr.mxu0 0.0
        %v4272 = vand.u32 %v3741, 4294901760
        %v4273 = vsub.f32 %v3741, %v4272
        %v4274 = vand.u32 %v4273, 4294901760
        %4275 = vmatpush1.msra.mxu0 %v4274
        %4276 = vmatprep.subr.mxu0 0.0
        %v4277 = vand.u32 %v3742, 4294901760
        %v4278 = vsub.f32 %v3742, %v4277
        %v4279 = vand.u32 %v4278, 4294901760
        %4280 = vmatpush1.msra.mxu0 %v4279
        %4281 = vmatprep.subr.mxu0 0.0
        %v4282 = vand.u32 %v3743, 4294901760
        %v4283 = vsub.f32 %v3743, %v4282
        %v4284 = vand.u32 %v4283, 4294901760
        %4285 = vmatpush1.msra.mxu0 %v4284
        %4286 = vmatprep.subr.mxu0 0.0
        %v4287 = vand.u32 %v3744, 4294901760
        %v4288 = vsub.f32 %v3744, %v4287
        %v4289 = vand.u32 %v4288, 4294901760
        %4290 = vmatpush1.msra.mxu0 %v4289
        %4291 = vmatprep.subr.mxu0 0.0
        %4292 = vmatpush1.msra.mxu0 0.0
        %4293 = vmatprep.subr.mxu0 0.0
        %4294 = vmatpush1.msra.mxu0 0.0
        %4295 = vmatprep.subr.mxu0 0.0
        %4296 = vmatpush1.msra.mxu0 0.0
        %4297 = vmatprep.subr.mxu0 0.0
        %4298 = vmatpush1.msra.mxu0 0.0
        %4299 = vmatprep.subr.mxu0 0.0
        %4300 = vmatpush1.msra.mxu0 0.0
        %4301 = vmatprep.subr.mxu0 0.0
        %4302 = vmatpush1.msra.mxu0 0.0
        %4303 = vmatprep.subr.mxu0 0.0
        %4304 = vmatpush1.msra.mxu0 0.0
        %4305 = vmatprep.subr.mxu0 0.0
        %4306 = vmatpush1.msra.mxu0 0.0
        %4307 = vmatprep.subr.mxu0 0.0
        %4308 = vmatpush1.msra.mxu0 0.0
        %4309 = vmatprep.subr.mxu0 0.0
        %4310 = vmatpush1.msra.mxu0 0.0
        %4311 = vmatprep.subr.mxu0 0.0
        %4312 = vmatpush1.msra.mxu0 0.0
        %4313 = vmatprep.subr.mxu0 0.0
        %4314 = vmatpush1.msra.mxu0 0.0
        %4315 = vmatprep.subr.mxu0 0.0
        %4316 = vmatpush1.msra.mxu0 0.0
        %4317 = vmatprep.subr.mxu0 0.0
        %4318 = vmatpush1.msra.mxu0 0.0
        %4319 = vmatprep.subr.mxu0 0.0
        %4320 = vmatpush1.msra.mxu0 0.0
        %4321 = vmatprep.subr.mxu0 0.0
        %4322 = vmatpush1.msra.mxu0 0.0
        %4323 = vmatprep.mubr.f32.mxu0 0.0
        %v4324 = vand.u32 %v3726, 4294901760
        %4325 = vmatmul.mubr.f32.gmra.mrb[0].mxu0 %v4324
        %v4326 = vpop.f32.mrb[0].mxu0
        %v4327 = vadd.f32 %v4200, %v4326
        %v4328 = vpop.f32.mrb[0].mxu0
        %4329 = vmatprep.mubr.f32.mxu0 0.0
        %v4330 = vand.u32 %v3727, 4294901760
        %4331 = vmatmul.mubr.f32.gmra.mrb[0].mxu0 %v4330
        %v4332 = vpop.f32.mrb[0].mxu0
        %v4333 = vadd.f32 %v4208, %v4332
        %v4334 = vpop.f32.mrb[0].mxu0
        %4335 = vdwg.mxu0
        %4336 = vmatprep.subr.mxu0 0.0
        %v4337 = vand.u32 %v3729, 4294901760
        %4338 = vmatpush1.msra.mxu0 %v4337
        %4339 = vmatprep.subr.mxu0 0.0
        %v4340 = vand.u32 %v3730, 4294901760
        %4341 = vmatpush1.msra.mxu0 %v4340
        %4342 = vmatprep.subr.mxu0 0.0
        %v4343 = vand.u32 %v3731, 4294901760
        %4344 = vmatpush1.msra.mxu0 %v4343
        %4345 = vmatprep.subr.mxu0 0.0
        %v4346 = vand.u32 %v3732, 4294901760
        %4347 = vmatpush1.msra.mxu0 %v4346
        %4348 = vmatprep.subr.mxu0 0.0
        %v4349 = vand.u32 %v3733, 4294901760
        %4350 = vmatpush1.msra.mxu0 %v4349
        %4351 = vmatprep.subr.mxu0 0.0
        %v4352 = vand.u32 %v3734, 4294901760
        %4353 = vmatpush1.msra.mxu0 %v4352
        %4354 = vmatprep.subr.mxu0 0.0
        %v4355 = vand.u32 %v3735, 4294901760
        %4356 = vmatpush1.msra.mxu0 %v4355
        %4357 = vmatprep.subr.mxu0 0.0
        %v4358 = vand.u32 %v3736, 4294901760
        %4359 = vmatpush1.msra.mxu0 %v4358
        %4360 = vmatprep.subr.mxu0 0.0
        %v4361 = vand.u32 %v3737, 4294901760
        %4362 = vmatpush1.msra.mxu0 %v4361
        %4363 = vmatprep.subr.mxu0 0.0
        %v4364 = vand.u32 %v3738, 4294901760
        %4365 = vmatpush1.msra.mxu0 %v4364
        %4366 = vmatprep.subr.mxu0 0.0
        %v4367 = vand.u32 %v3739, 4294901760
        %4368 = vmatpush1.msra.mxu0 %v4367
        %4369 = vmatprep.subr.mxu0 0.0
        %v4370 = vand.u32 %v3740, 4294901760
        %4371 = vmatpush1.msra.mxu0 %v4370
        %4372 = vmatprep.subr.mxu0 0.0
        %v4373 = vand.u32 %v3741, 4294901760
        %4374 = vmatpush1.msra.mxu0 %v4373
        %4375 = vmatprep.subr.mxu0 0.0
        %v4376 = vand.u32 %v3742, 4294901760
        %4377 = vmatpush1.msra.mxu0 %v4376
        %4378 = vmatprep.subr.mxu0 0.0
        %v4379 = vand.u32 %v3743, 4294901760
        %4380 = vmatpush1.msra.mxu0 %v4379
        %4381 = vmatprep.subr.mxu0 0.0
        %v4382 = vand.u32 %v3744, 4294901760
        %4383 = vmatpush1.msra.mxu0 %v4382
        %4384 = vmatprep.subr.mxu0 0.0
        %4385 = vmatpush1.msra.mxu0 0.0
        %4386 = vmatprep.subr.mxu0 0.0
        %4387 = vmatpush1.msra.mxu0 0.0
        %4388 = vmatprep.subr.mxu0 0.0
        %4389 = vmatpush1.msra.mxu0 0.0
        %4390 = vmatprep.subr.mxu0 0.0
        %4391 = vmatpush1.msra.mxu0 0.0
        %4392 = vmatprep.subr.mxu0 0.0
        %4393 = vmatpush1.msra.mxu0 0.0
        %4394 = vmatprep.subr.mxu0 0.0
        %4395 = vmatpush1.msra.mxu0 0.0
        %4396 = vmatprep.subr.mxu0 0.0
        %4397 = vmatpush1.msra.mxu0 0.0
        %4398 = vmatprep.subr.mxu0 0.0
        %4399 = vmatpush1.msra.mxu0 0.0
        %4400 = vmatprep.subr.mxu0 0.0
        %4401 = vmatpush1.msra.mxu0 0.0
        %4402 = vmatprep.subr.mxu0 0.0
        %4403 = vmatpush1.msra.mxu0 0.0
        %4404 = vmatprep.subr.mxu0 0.0
        %4405 = vmatpush1.msra.mxu0 0.0
        %4406 = vmatprep.subr.mxu0 0.0
        %4407 = vmatpush1.msra.mxu0 0.0
        %4408 = vmatprep.subr.mxu0 0.0
        %4409 = vmatpush1.msra.mxu0 0.0
        %4410 = vmatprep.subr.mxu0 0.0
        %4411 = vmatpush1.msra.mxu0 0.0
        %4412 = vmatprep.subr.mxu0 0.0
        %4413 = vmatpush1.msra.mxu0 0.0
        %4414 = vmatprep.subr.mxu0 0.0
        %4415 = vmatpush1.msra.mxu0 0.0
        %4416 = vmatprep.mubr.f32.mxu0 0.0
        %v4417 = vand.u32 %v3726, 4294901760
        %4418 = vmatmul.mubr.f32.gmra.mrb[0].mxu0 %v4417
        %v4419 = vpop.f32.mrb[0].mxu0
        %v4420 = vadd.f32 %v4327, %v4419
        %v4421 = vpop.f32.mrb[0].mxu0
        %4422 = vmatprep.mubr.f32.mxu0 0.0
        %v4423 = vand.u32 %v3727, 4294901760
        %4424 = vmatmul.mubr.f32.gmra.mrb[0].mxu0 %v4423
        %v4425 = vpop.f32.mrb[0].mxu0
        %v4426 = vadd.f32 %v4333, %v4425
        %v4427 = vpop.f32.mrb[0].mxu0
        %4428 = vdwg.mxu0
        %v4429 = vadd.f32 %v3724, %v4420
        %v4430 = vadd.f32 %v3725, %v4426
        %v4431 = vld [vmem:[#allocation2 + $0x6] sm:$0xff]
        %v4432 = vld [vmem:[#allocation2 + $0xe] sm:$0xff]
        %s4433 = scalar_lea.vmem %s1, 768
        %v4434 = vld [vmem:[%s4433] sm:$0xff]
        %v4435 = vld [vmem:[%s4433 + $0x8] sm:$0xff]
        %v4436 = vld [vmem:[%s4433 + $0x10] sm:$0xff]
        %v4437 = vld [vmem:[%s4433 + $0x18] sm:$0xff]
        %v4438 = vld [vmem:[%s4433 + $0x20] sm:$0xff]
        %v4439 = vld [vmem:[%s4433 + $0x28] sm:$0xff]
        %v4440 = vld [vmem:[%s4433 + $0x30] sm:$0xff]
        %v4441 = vld [vmem:[%s4433 + $0x38] sm:$0xff]
        %v4442 = vld [vmem:[%s4433 + $0x40] sm:$0xff]
        %v4443 = vld [vmem:[%s4433 + $0x48] sm:$0xff]
        %v4444 = vld [vmem:[%s4433 + $0x50] sm:$0xff]
        %v4445 = vld [vmem:[%s4433 + $0x58] sm:$0xff]
        %v4446 = vld [vmem:[%s4433 + $0x60] sm:$0xff]
        %v4447 = vld [vmem:[%s4433 + $0x68] sm:$0xff]
        %v4448 = vld [vmem:[%s4433 + $0x70] sm:$0xff]
        %v4449 = vld [vmem:[%s4433 + $0x78] sm:$0xff]
        %4450 = vmatprep.subr.mxu0 0.0
        %v4451 = vand.u32 %v4434, 4294901760
        %4452 = vmatpush1.msra.mxu0 %v4451
        %4453 = vmatprep.subr.mxu0 0.0
        %v4454 = vand.u32 %v4435, 4294901760
        %4455 = vmatpush1.msra.mxu0 %v4454
        %4456 = vmatprep.subr.mxu0 0.0
        %v4457 = vand.u32 %v4436, 4294901760
        %4458 = vmatpush1.msra.mxu0 %v4457
        %4459 = vmatprep.subr.mxu0 0.0
        %v4460 = vand.u32 %v4437, 4294901760
        %4461 = vmatpush1.msra.mxu0 %v4460
        %4462 = vmatprep.subr.mxu0 0.0
        %v4463 = vand.u32 %v4438, 4294901760
        %4464 = vmatpush1.msra.mxu0 %v4463
        %4465 = vmatprep.subr.mxu0 0.0
        %v4466 = vand.u32 %v4439, 4294901760
        %4467 = vmatpush1.msra.mxu0 %v4466
        %4468 = vmatprep.subr.mxu0 0.0
        %v4469 = vand.u32 %v4440, 4294901760
        %4470 = vmatpush1.msra.mxu0 %v4469
        %4471 = vmatprep.subr.mxu0 0.0
        %v4472 = vand.u32 %v4441, 4294901760
        %4473 = vmatpush1.msra.mxu0 %v4472
        %4474 = vmatprep.subr.mxu0 0.0
        %v4475 = vand.u32 %v4442, 4294901760
        %4476 = vmatpush1.msra.mxu0 %v4475
        %4477 = vmatprep.subr.mxu0 0.0
        %v4478 = vand.u32 %v4443, 4294901760
        %4479 = vmatpush1.msra.mxu0 %v4478
        %4480 = vmatprep.subr.mxu0 0.0
        %v4481 = vand.u32 %v4444, 4294901760
        %4482 = vmatpush1.msra.mxu0 %v4481
        %4483 = vmatprep.subr.mxu0 0.0
        %v4484 = vand.u32 %v4445, 4294901760
        %4485 = vmatpush1.msra.mxu0 %v4484
        %4486 = vmatprep.subr.mxu0 0.0
        %v4487 = vand.u32 %v4446, 4294901760
        %4488 = vmatpush1.msra.mxu0 %v4487
        %4489 = vmatprep.subr.mxu0 0.0
        %v4490 = vand.u32 %v4447, 4294901760
        %4491 = vmatpush1.msra.mxu0 %v4490
        %4492 = vmatprep.subr.mxu0 0.0
        %v4493 = vand.u32 %v4448, 4294901760
        %4494 = vmatpush1.msra.mxu0 %v4493
        %4495 = vmatprep.subr.mxu0 0.0
        %v4496 = vand.u32 %v4449, 4294901760
        %4497 = vmatpush1.msra.mxu0 %v4496
        %4498 = vmatprep.subr.mxu0 0.0
        %4499 = vmatpush1.msra.mxu0 0.0
        %4500 = vmatprep.subr.mxu0 0.0
        %4501 = vmatpush1.msra.mxu0 0.0
        %4502 = vmatprep.subr.mxu0 0.0
        %4503 = vmatpush1.msra.mxu0 0.0
        %4504 = vmatprep.subr.mxu0 0.0
        %4505 = vmatpush1.msra.mxu0 0.0
        %4506 = vmatprep.subr.mxu0 0.0
        %4507 = vmatpush1.msra.mxu0 0.0
        %4508 = vmatprep.subr.mxu0 0.0
        %4509 = vmatpush1.msra.mxu0 0.0
        %4510 = vmatprep.subr.mxu0 0.0
        %4511 = vmatpush1.msra.mxu0 0.0
        %4512 = vmatprep.subr.mxu0 0.0
        %4513 = vmatpush1.msra.mxu0 0.0
        %4514 = vmatprep.subr.mxu0 0.0
        %4515 = vmatpush1.msra.mxu0 0.0
        %4516 = vmatprep.subr.mxu0 0.0
        %4517 = vmatpush1.msra.mxu0 0.0
        %4518 = vmatprep.subr.mxu0 0.0
        %4519 = vmatpush1.msra.mxu0 0.0
        %4520 = vmatprep.subr.mxu0 0.0
        %4521 = vmatpush1.msra.mxu0 0.0
        %4522 = vmatprep.subr.mxu0 0.0
        %4523 = vmatpush1.msra.mxu0 0.0
        %4524 = vmatprep.subr.mxu0 0.0
        %4525 = vmatpush1.msra.mxu0 0.0
        %4526 = vmatprep.subr.mxu0 0.0
        %4527 = vmatpush1.msra.mxu0 0.0
        %4528 = vmatprep.subr.mxu0 0.0
        %4529 = vmatpush1.msra.mxu0 0.0
        %4530 = vmatprep.mubr.f32.mxu0 0.0
        %v4531 = vand.u32 %v4431, 4294901760
        %v4532 = vsub.f32 %v4431, %v4531
        %v4533 = vand.u32 %v4532, 4294901760
        %v4534 = vsub.f32 %v4532, %v4533
        %v4535 = vand.u32 %v4534, 4294901760
        %4536 = vmatmul.mubr.f32.gmra.mrb[0].mxu0 %v4535
        %v4537 = vpop.f32.mrb[0].mxu0
        %v4538 = vadd.f32 0.0, %v4537
        %v4539 = vpop.f32.mrb[0].mxu0
        %4540 = vmatprep.mubr.f32.mxu0 0.0
        %v4541 = vand.u32 %v4432, 4294901760
        %v4542 = vsub.f32 %v4432, %v4541
        %v4543 = vand.u32 %v4542, 4294901760
        %v4544 = vsub.f32 %v4542, %v4543
        %v4545 = vand.u32 %v4544, 4294901760
        %4546 = vmatmul.mubr.f32.gmra.mrb[0].mxu0 %v4545
        %v4547 = vpop.f32.mrb[0].mxu0
        %v4548 = vadd.f32 0.0, %v4547
        %v4549 = vpop.f32.mrb[0].mxu0
        %4550 = vdwg.mxu0
        %4551 = vmatprep.subr.mxu0 0.0
        %v4552 = vand.u32 %v4434, 4294901760
        %v4553 = vsub.f32 %v4434, %v4552
        %v4554 = vand.u32 %v4553, 4294901760
        %v4555 = vsub.f32 %v4553, %v4554
        %v4556 = vand.u32 %v4555, 4294901760
        %4557 = vmatpush1.msra.mxu0 %v4556
        %4558 = vmatprep.subr.mxu0 0.0
        %v4559 = vand.u32 %v4435, 4294901760
        %v4560 = vsub.f32 %v4435, %v4559
        %v4561 = vand.u32 %v4560, 4294901760
        %v4562 = vsub.f32 %v4560, %v4561
        %v4563 = vand.u32 %v4562, 4294901760
        %4564 = vmatpush1.msra.mxu0 %v4563
        %4565 = vmatprep.subr.mxu0 0.0
        %v4566 = vand.u32 %v4436, 4294901760
        %v4567 = vsub.f32 %v4436, %v4566
        %v4568 = vand.u32 %v4567, 4294901760
        %v4569 = vsub.f32 %v4567, %v4568
        %v4570 = vand.u32 %v4569, 4294901760
        %4571 = vmatpush1.msra.mxu0 %v4570
        %4572 = vmatprep.subr.mxu0 0.0
        %v4573 = vand.u32 %v4437, 4294901760
        %v4574 = vsub.f32 %v4437, %v4573
        %v4575 = vand.u32 %v4574, 4294901760
        %v4576 = vsub.f32 %v4574, %v4575
        %v4577 = vand.u32 %v4576, 4294901760
        %4578 = vmatpush1.msra.mxu0 %v4577
        %4579 = vmatprep.subr.mxu0 0.0
        %v4580 = vand.u32 %v4438, 4294901760
        %v4581 = vsub.f32 %v4438, %v4580
        %v4582 = vand.u32 %v4581, 4294901760
        %v4583 = vsub.f32 %v4581, %v4582
        %v4584 = vand.u32 %v4583, 4294901760
        %4585 = vmatpush1.msra.mxu0 %v4584
        %4586 = vmatprep.subr.mxu0 0.0
        %v4587 = vand.u32 %v4439, 4294901760
        %v4588 = vsub.f32 %v4439, %v4587
        %v4589 = vand.u32 %v4588, 4294901760
        %v4590 = vsub.f32 %v4588, %v4589
        %v4591 = vand.u32 %v4590, 4294901760
        %4592 = vmatpush1.msra.mxu0 %v4591
        %4593 = vmatprep.subr.mxu0 0.0
        %v4594 = vand.u32 %v4440, 4294901760
        %v4595 = vsub.f32 %v4440, %v4594
        %v4596 = vand.u32 %v4595, 4294901760
        %v4597 = vsub.f32 %v4595, %v4596
        %v4598 = vand.u32 %v4597, 4294901760
        %4599 = vmatpush1.msra.mxu0 %v4598
        %4600 = vmatprep.subr.mxu0 0.0
        %v4601 = vand.u32 %v4441, 4294901760
        %v4602 = vsub.f32 %v4441, %v4601
        %v4603 = vand.u32 %v4602, 4294901760
        %v4604 = vsub.f32 %v4602, %v4603
        %v4605 = vand.u32 %v4604, 4294901760
        %4606 = vmatpush1.msra.mxu0 %v4605
        %4607 = vmatprep.subr.mxu0 0.0
        %v4608 = vand.u32 %v4442, 4294901760
        %v4609 = vsub.f32 %v4442, %v4608
        %v4610 = vand.u32 %v4609, 4294901760
        %v4611 = vsub.f32 %v4609, %v4610
        %v4612 = vand.u32 %v4611, 4294901760
        %4613 = vmatpush1.msra.mxu0 %v4612
        %4614 = vmatprep.subr.mxu0 0.0
        %v4615 = vand.u32 %v4443, 4294901760
        %v4616 = vsub.f32 %v4443, %v4615
        %v4617 = vand.u32 %v4616, 4294901760
        %v4618 = vsub.f32 %v4616, %v4617
        %v4619 = vand.u32 %v4618, 4294901760
        %4620 = vmatpush1.msra.mxu0 %v4619
        %4621 = vmatprep.subr.mxu0 0.0
        %v4622 = vand.u32 %v4444, 4294901760
        %v4623 = vsub.f32 %v4444, %v4622
        %v4624 = vand.u32 %v4623, 4294901760
        %v4625 = vsub.f32 %v4623, %v4624
        %v4626 = vand.u32 %v4625, 4294901760
        %4627 = vmatpush1.msra.mxu0 %v4626
        %4628 = vmatprep.subr.mxu0 0.0
        %v4629 = vand.u32 %v4445, 4294901760
        %v4630 = vsub.f32 %v4445, %v4629
        %v4631 = vand.u32 %v4630, 4294901760
        %v4632 = vsub.f32 %v4630, %v4631
        %v4633 = vand.u32 %v4632, 4294901760
        %4634 = vmatpush1.msra.mxu0 %v4633
        %4635 = vmatprep.subr.mxu0 0.0
        %v4636 = vand.u32 %v4446, 4294901760
        %v4637 = vsub.f32 %v4446, %v4636
        %v4638 = vand.u32 %v4637, 4294901760
        %v4639 = vsub.f32 %v4637, %v4638
        %v4640 = vand.u32 %v4639, 4294901760
        %4641 = vmatpush1.msra.mxu0 %v4640
        %4642 = vmatprep.subr.mxu0 0.0
        %v4643 = vand.u32 %v4447, 4294901760
        %v4644 = vsub.f32 %v4447, %v4643
        %v4645 = vand.u32 %v4644, 4294901760
        %v4646 = vsub.f32 %v4644, %v4645
        %v4647 = vand.u32 %v4646, 4294901760
        %4648 = vmatpush1.msra.mxu0 %v4647
        %4649 = vmatprep.subr.mxu0 0.0
        %v4650 = vand.u32 %v4448, 4294901760
        %v4651 = vsub.f32 %v4448, %v4650
        %v4652 = vand.u32 %v4651, 4294901760
        %v4653 = vsub.f32 %v4651, %v4652
        %v4654 = vand.u32 %v4653, 4294901760
        %4655 = vmatpush1.msra.mxu0 %v4654
        %4656 = vmatprep.subr.mxu0 0.0
        %v4657 = vand.u32 %v4449, 4294901760
        %v4658 = vsub.f32 %v4449, %v4657
        %v4659 = vand.u32 %v4658, 4294901760
        %v4660 = vsub.f32 %v4658, %v4659
        %v4661 = vand.u32 %v4660, 4294901760
        %4662 = vmatpush1.msra.mxu0 %v4661
        %4663 = vmatprep.subr.mxu0 0.0
        %4664 = vmatpush1.msra.mxu0 0.0
        %4665 = vmatprep.subr.mxu0 0.0
        %4666 = vmatpush1.msra.mxu0 0.0
        %4667 = vmatprep.subr.mxu0 0.0
        %4668 = vmatpush1.msra.mxu0 0.0
        %4669 = vmatprep.subr.mxu0 0.0
        %4670 = vmatpush1.msra.mxu0 0.0
        %4671 = vmatprep.subr.mxu0 0.0
        %4672 = vmatpush1.msra.mxu0 0.0
        %4673 = vmatprep.subr.mxu0 0.0
        %4674 = vmatpush1.msra.mxu0 0.0
        %4675 = vmatprep.subr.mxu0 0.0
        %4676 = vmatpush1.msra.mxu0 0.0
        %4677 = vmatprep.subr.mxu0 0.0
        %4678 = vmatpush1.msra.mxu0 0.0
        %4679 = vmatprep.subr.mxu0 0.0
        %4680 = vmatpush1.msra.mxu0 0.0
        %4681 = vmatprep.subr.mxu0 0.0
        %4682 = vmatpush1.msra.mxu0 0.0
        %4683 = vmatprep.subr.mxu0 0.0
        %4684 = vmatpush1.msra.mxu0 0.0
        %4685 = vmatprep.subr.mxu0 0.0
        %4686 = vmatpush1.msra.mxu0 0.0
        %4687 = vmatprep.subr.mxu0 0.0
        %4688 = vmatpush1.msra.mxu0 0.0
        %4689 = vmatprep.subr.mxu0 0.0
        %4690 = vmatpush1.msra.mxu0 0.0
        %4691 = vmatprep.subr.mxu0 0.0
        %4692 = vmatpush1.msra.mxu0 0.0
        %4693 = vmatprep.subr.mxu0 0.0
        %4694 = vmatpush1.msra.mxu0 0.0
        %4695 = vmatprep.mubr.f32.mxu0 0.0
        %v4696 = vand.u32 %v4431, 4294901760
        %4697 = vmatmul.mubr.f32.gmra.mrb[0].mxu0 %v4696
        %v4698 = vpop.f32.mrb[0].mxu0
        %v4699 = vadd.f32 %v4538, %v4698
        %v4700 = vpop.f32.mrb[0].mxu0
        %4701 = vmatprep.mubr.f32.mxu0 0.0
        %v4702 = vand.u32 %v4432, 4294901760
        %4703 = vmatmul.mubr.f32.gmra.mrb[0].mxu0 %v4702
        %v4704 = vpop.f32.mrb[0].mxu0
        %v4705 = vadd.f32 %v4548, %v4704
        %v4706 = vpop.f32.mrb[0].mxu0
        %4707 = vdwg.mxu0
        %4708 = vmatprep.subr.mxu0 0.0
        %v4709 = vand.u32 %v4434, 4294901760
        %v4710 = vsub.f32 %v4434, %v4709
        %4711 = vmatpush1.msra.mxu0 %v4710
        %4712 = vmatprep.subr.mxu0 0.0
        %v4713 = vand.u32 %v4435, 4294901760
        %v4714 = vsub.f32 %v4435, %v4713
        %4715 = vmatpush1.msra.mxu0 %v4714
        %4716 = vmatprep.subr.mxu0 0.0
        %v4717 = vand.u32 %v4436, 4294901760
        %v4718 = vsub.f32 %v4436, %v4717
        %4719 = vmatpush1.msra.mxu0 %v4718
        %4720 = vmatprep.subr.mxu0 0.0
        %v4721 = vand.u32 %v4437, 4294901760
        %v4722 = vsub.f32 %v4437, %v4721
        %4723 = vmatpush1.msra.mxu0 %v4722
        %4724 = vmatprep.subr.mxu0 0.0
        %v4725 = vand.u32 %v4438, 4294901760
        %v4726 = vsub.f32 %v4438, %v4725
        %4727 = vmatpush1.msra.mxu0 %v4726
        %4728 = vmatprep.subr.mxu0 0.0
        %v4729 = vand.u32 %v4439, 4294901760
        %v4730 = vsub.f32 %v4439, %v4729
        %4731 = vmatpush1.msra.mxu0 %v4730
        %4732 = vmatprep.subr.mxu0 0.0
        %v4733 = vand.u32 %v4440, 4294901760
        %v4734 = vsub.f32 %v4440, %v4733
        %4735 = vmatpush1.msra.mxu0 %v4734
        %4736 = vmatprep.subr.mxu0 0.0
        %v4737 = vand.u32 %v4441, 4294901760
        %v4738 = vsub.f32 %v4441, %v4737
        %4739 = vmatpush1.msra.mxu0 %v4738
        %4740 = vmatprep.subr.mxu0 0.0
        %v4741 = vand.u32 %v4442, 4294901760
        %v4742 = vsub.f32 %v4442, %v4741
        %4743 = vmatpush1.msra.mxu0 %v4742
        %4744 = vmatprep.subr.mxu0 0.0
        %v4745 = vand.u32 %v4443, 4294901760
        %v4746 = vsub.f32 %v4443, %v4745
        %4747 = vmatpush1.msra.mxu0 %v4746
        %4748 = vmatprep.subr.mxu0 0.0
        %v4749 = vand.u32 %v4444, 4294901760
        %v4750 = vsub.f32 %v4444, %v4749
        %4751 = vmatpush1.msra.mxu0 %v4750
        %4752 = vmatprep.subr.mxu0 0.0
        %v4753 = vand.u32 %v4445, 4294901760
        %v4754 = vsub.f32 %v4445, %v4753
        %4755 = vmatpush1.msra.mxu0 %v4754
        %4756 = vmatprep.subr.mxu0 0.0
        %v4757 = vand.u32 %v4446, 4294901760
        %v4758 = vsub.f32 %v4446, %v4757
        %4759 = vmatpush1.msra.mxu0 %v4758
        %4760 = vmatprep.subr.mxu0 0.0
        %v4761 = vand.u32 %v4447, 4294901760
        %v4762 = vsub.f32 %v4447, %v4761
        %4763 = vmatpush1.msra.mxu0 %v4762
        %4764 = vmatprep.subr.mxu0 0.0
        %v4765 = vand.u32 %v4448, 4294901760
        %v4766 = vsub.f32 %v4448, %v4765
        %4767 = vmatpush1.msra.mxu0 %v4766
        %4768 = vmatprep.subr.mxu0 0.0
        %v4769 = vand.u32 %v4449, 4294901760
        %v4770 = vsub.f32 %v4449, %v4769
        %4771 = vmatpush1.msra.mxu0 %v4770
        %4772 = vmatprep.subr.mxu0 0.0
        %4773 = vmatpush1.msra.mxu0 0.0
        %4774 = vmatprep.subr.mxu0 0.0
        %4775 = vmatpush1.msra.mxu0 0.0
        %4776 = vmatprep.subr.mxu0 0.0
        %4777 = vmatpush1.msra.mxu0 0.0
        %4778 = vmatprep.subr.mxu0 0.0
        %4779 = vmatpush1.msra.mxu0 0.0
        %4780 = vmatprep.subr.mxu0 0.0
        %4781 = vmatpush1.msra.mxu0 0.0
        %4782 = vmatprep.subr.mxu0 0.0
        %4783 = vmatpush1.msra.mxu0 0.0
        %4784 = vmatprep.subr.mxu0 0.0
        %4785 = vmatpush1.msra.mxu0 0.0
        %4786 = vmatprep.subr.mxu0 0.0
        %4787 = vmatpush1.msra.mxu0 0.0
        %4788 = vmatprep.subr.mxu0 0.0
        %4789 = vmatpush1.msra.mxu0 0.0
        %4790 = vmatprep.subr.mxu0 0.0
        %4791 = vmatpush1.msra.mxu0 0.0
        %4792 = vmatprep.subr.mxu0 0.0
        %4793 = vmatpush1.msra.mxu0 0.0
        %4794 = vmatprep.subr.mxu0 0.0
        %4795 = vmatpush1.msra.mxu0 0.0
        %4796 = vmatprep.subr.mxu0 0.0
        %4797 = vmatpush1.msra.mxu0 0.0
        %4798 = vmatprep.subr.mxu0 0.0
        %4799 = vmatpush1.msra.mxu0 0.0
        %4800 = vmatprep.subr.mxu0 0.0
        %4801 = vmatpush1.msra.mxu0 0.0
        %4802 = vmatprep.subr.mxu0 0.0
        %4803 = vmatpush1.msra.mxu0 0.0
        %4804 = vmatprep.mubr.f32.mxu0 0.0
        %v4805 = vand.u32 %v4431, 4294901760
        %v4806 = vsub.f32 %v4431, %v4805
        %4807 = vmatmul.mubr.f32.gmra.mrb[0].mxu0 %v4806
        %v4808 = vpop.f32.mrb[0].mxu0
        %v4809 = vadd.f32 %v4699, %v4808
        %v4810 = vpop.f32.mrb[0].mxu0
        %4811 = vmatprep.mubr.f32.mxu0 0.0
        %v4812 = vand.u32 %v4432, 4294901760
        %v4813 = vsub.f32 %v4432, %v4812
        %4814 = vmatmul.mubr.f32.gmra.mrb[0].mxu0 %v4813
        %v4815 = vpop.f32.mrb[0].mxu0
        %v4816 = vadd.f32 %v4705, %v4815
        %v4817 = vpop.f32.mrb[0].mxu0
        %4818 = vdwg.mxu0
        %4819 = vmatprep.subr.mxu0 0.0
        %v4820 = vand.u32 %v4434, 4294901760
        %4821 = vmatpush1.msra.mxu0 %v4820
        %4822 = vmatprep.subr.mxu0 0.0
        %v4823 = vand.u32 %v4435, 4294901760
        %4824 = vmatpush1.msra.mxu0 %v4823
        %4825 = vmatprep.subr.mxu0 0.0
        %v4826 = vand.u32 %v4436, 4294901760
        %4827 = vmatpush1.msra.mxu0 %v4826
        %4828 = vmatprep.subr.mxu0 0.0
        %v4829 = vand.u32 %v4437, 4294901760
        %4830 = vmatpush1.msra.mxu0 %v4829
        %4831 = vmatprep.subr.mxu0 0.0
        %v4832 = vand.u32 %v4438, 4294901760
        %4833 = vmatpush1.msra.mxu0 %v4832
        %4834 = vmatprep.subr.mxu0 0.0
        %v4835 = vand.u32 %v4439, 4294901760
        %4836 = vmatpush1.msra.mxu0 %v4835
        %4837 = vmatprep.subr.mxu0 0.0
        %v4838 = vand.u32 %v4440, 4294901760
        %4839 = vmatpush1.msra.mxu0 %v4838
        %4840 = vmatprep.subr.mxu0 0.0
        %v4841 = vand.u32 %v4441, 4294901760
        %4842 = vmatpush1.msra.mxu0 %v4841
        %4843 = vmatprep.subr.mxu0 0.0
        %v4844 = vand.u32 %v4442, 4294901760
        %4845 = vmatpush1.msra.mxu0 %v4844
        %4846 = vmatprep.subr.mxu0 0.0
        %v4847 = vand.u32 %v4443, 4294901760
        %4848 = vmatpush1.msra.mxu0 %v4847
        %4849 = vmatprep.subr.mxu0 0.0
        %v4850 = vand.u32 %v4444, 4294901760
        %4851 = vmatpush1.msra.mxu0 %v4850
        %4852 = vmatprep.subr.mxu0 0.0
        %v4853 = vand.u32 %v4445, 4294901760
        %4854 = vmatpush1.msra.mxu0 %v4853
        %4855 = vmatprep.subr.mxu0 0.0
        %v4856 = vand.u32 %v4446, 4294901760
        %4857 = vmatpush1.msra.mxu0 %v4856
        %4858 = vmatprep.subr.mxu0 0.0
        %v4859 = vand.u32 %v4447, 4294901760
        %4860 = vmatpush1.msra.mxu0 %v4859
        %4861 = vmatprep.subr.mxu0 0.0
        %v4862 = vand.u32 %v4448, 4294901760
        %4863 = vmatpush1.msra.mxu0 %v4862
        %4864 = vmatprep.subr.mxu0 0.0
        %v4865 = vand.u32 %v4449, 4294901760
        %4866 = vmatpush1.msra.mxu0 %v4865
        %4867 = vmatprep.subr.mxu0 0.0
        %4868 = vmatpush1.msra.mxu0 0.0
        %4869 = vmatprep.subr.mxu0 0.0
        %4870 = vmatpush1.msra.mxu0 0.0
        %4871 = vmatprep.subr.mxu0 0.0
        %4872 = vmatpush1.msra.mxu0 0.0
        %4873 = vmatprep.subr.mxu0 0.0
        %4874 = vmatpush1.msra.mxu0 0.0
        %4875 = vmatprep.subr.mxu0 0.0
        %4876 = vmatpush1.msra.mxu0 0.0
        %4877 = vmatprep.subr.mxu0 0.0
        %4878 = vmatpush1.msra.mxu0 0.0
        %4879 = vmatprep.subr.mxu0 0.0
        %4880 = vmatpush1.msra.mxu0 0.0
        %4881 = vmatprep.subr.mxu0 0.0
        %4882 = vmatpush1.msra.mxu0 0.0
        %4883 = vmatprep.subr.mxu0 0.0
        %4884 = vmatpush1.msra.mxu0 0.0
        %4885 = vmatprep.subr.mxu0 0.0
        %4886 = vmatpush1.msra.mxu0 0.0
        %4887 = vmatprep.subr.mxu0 0.0
        %4888 = vmatpush1.msra.mxu0 0.0
        %4889 = vmatprep.subr.mxu0 0.0
        %4890 = vmatpush1.msra.mxu0 0.0
        %4891 = vmatprep.subr.mxu0 0.0
        %4892 = vmatpush1.msra.mxu0 0.0
        %4893 = vmatprep.subr.mxu0 0.0
        %4894 = vmatpush1.msra.mxu0 0.0
        %4895 = vmatprep.subr.mxu0 0.0
        %4896 = vmatpush1.msra.mxu0 0.0
        %4897 = vmatprep.subr.mxu0 0.0
        %4898 = vmatpush1.msra.mxu0 0.0
        %4899 = vmatprep.mubr.f32.mxu0 0.0
        %v4900 = vand.u32 %v4431, 4294901760
        %v4901 = vsub.f32 %v4431, %v4900
        %v4902 = vand.u32 %v4901, 4294901760
        %4903 = vmatmul.mubr.f32.gmra.mrb[0].mxu0 %v4902
        %v4904 = vpop.f32.mrb[0].mxu0
        %v4905 = vadd.f32 %v4809, %v4904
        %v4906 = vpop.f32.mrb[0].mxu0
        %4907 = vmatprep.mubr.f32.mxu0 0.0
        %v4908 = vand.u32 %v4432, 4294901760
        %v4909 = vsub.f32 %v4432, %v4908
        %v4910 = vand.u32 %v4909, 4294901760
        %4911 = vmatmul.mubr.f32.gmra.mrb[0].mxu0 %v4910
        %v4912 = vpop.f32.mrb[0].mxu0
        %v4913 = vadd.f32 %v4816, %v4912
        %v4914 = vpop.f32.mrb[0].mxu0
        %4915 = vdwg.mxu0
        %4916 = vmatprep.subr.mxu0 0.0
        %v4917 = vand.u32 %v4434, 4294901760
        %v4918 = vsub.f32 %v4434, %v4917
        %v4919 = vand.u32 %v4918, 4294901760
        %4920 = vmatpush1.msra.mxu0 %v4919
        %4921 = vmatprep.subr.mxu0 0.0
        %v4922 = vand.u32 %v4435, 4294901760
        %v4923 = vsub.f32 %v4435, %v4922
        %v4924 = vand.u32 %v4923, 4294901760
        %4925 = vmatpush1.msra.mxu0 %v4924
        %4926 = vmatprep.subr.mxu0 0.0
        %v4927 = vand.u32 %v4436, 4294901760
        %v4928 = vsub.f32 %v4436, %v4927
        %v4929 = vand.u32 %v4928, 4294901760
        %4930 = vmatpush1.msra.mxu0 %v4929
        %4931 = vmatprep.subr.mxu0 0.0
        %v4932 = vand.u32 %v4437, 4294901760
        %v4933 = vsub.f32 %v4437, %v4932
        %v4934 = vand.u32 %v4933, 4294901760
        %4935 = vmatpush1.msra.mxu0 %v4934
        %4936 = vmatprep.subr.mxu0 0.0
        %v4937 = vand.u32 %v4438, 4294901760
        %v4938 = vsub.f32 %v4438, %v4937
        %v4939 = vand.u32 %v4938, 4294901760
        %4940 = vmatpush1.msra.mxu0 %v4939
        %4941 = vmatprep.subr.mxu0 0.0
        %v4942 = vand.u32 %v4439, 4294901760
        %v4943 = vsub.f32 %v4439, %v4942
        %v4944 = vand.u32 %v4943, 4294901760
        %4945 = vmatpush1.msra.mxu0 %v4944
        %4946 = vmatprep.subr.mxu0 0.0
        %v4947 = vand.u32 %v4440, 4294901760
        %v4948 = vsub.f32 %v4440, %v4947
        %v4949 = vand.u32 %v4948, 4294901760
        %4950 = vmatpush1.msra.mxu0 %v4949
        %4951 = vmatprep.subr.mxu0 0.0
        %v4952 = vand.u32 %v4441, 4294901760
        %v4953 = vsub.f32 %v4441, %v4952
        %v4954 = vand.u32 %v4953, 4294901760
        %4955 = vmatpush1.msra.mxu0 %v4954
        %4956 = vmatprep.subr.mxu0 0.0
        %v4957 = vand.u32 %v4442, 4294901760
        %v4958 = vsub.f32 %v4442, %v4957
        %v4959 = vand.u32 %v4958, 4294901760
        %4960 = vmatpush1.msra.mxu0 %v4959
        %4961 = vmatprep.subr.mxu0 0.0
        %v4962 = vand.u32 %v4443, 4294901760
        %v4963 = vsub.f32 %v4443, %v4962
        %v4964 = vand.u32 %v4963, 4294901760
        %4965 = vmatpush1.msra.mxu0 %v4964
        %4966 = vmatprep.subr.mxu0 0.0
        %v4967 = vand.u32 %v4444, 4294901760
        %v4968 = vsub.f32 %v4444, %v4967
        %v4969 = vand.u32 %v4968, 4294901760
        %4970 = vmatpush1.msra.mxu0 %v4969
        %4971 = vmatprep.subr.mxu0 0.0
        %v4972 = vand.u32 %v4445, 4294901760
        %v4973 = vsub.f32 %v4445, %v4972
        %v4974 = vand.u32 %v4973, 4294901760
        %4975 = vmatpush1.msra.mxu0 %v4974
        %4976 = vmatprep.subr.mxu0 0.0
        %v4977 = vand.u32 %v4446, 4294901760
        %v4978 = vsub.f32 %v4446, %v4977
        %v4979 = vand.u32 %v4978, 4294901760
        %4980 = vmatpush1.msra.mxu0 %v4979
        %4981 = vmatprep.subr.mxu0 0.0
        %v4982 = vand.u32 %v4447, 4294901760
        %v4983 = vsub.f32 %v4447, %v4982
        %v4984 = vand.u32 %v4983, 4294901760
        %4985 = vmatpush1.msra.mxu0 %v4984
        %4986 = vmatprep.subr.mxu0 0.0
        %v4987 = vand.u32 %v4448, 4294901760
        %v4988 = vsub.f32 %v4448, %v4987
        %v4989 = vand.u32 %v4988, 4294901760
        %4990 = vmatpush1.msra.mxu0 %v4989
        %4991 = vmatprep.subr.mxu0 0.0
        %v4992 = vand.u32 %v4449, 4294901760
        %v4993 = vsub.f32 %v4449, %v4992
        %v4994 = vand.u32 %v4993, 4294901760
        %4995 = vmatpush1.msra.mxu0 %v4994
        %4996 = vmatprep.subr.mxu0 0.0
        %4997 = vmatpush1.msra.mxu0 0.0
        %4998 = vmatprep.subr.mxu0 0.0
        %4999 = vmatpush1.msra.mxu0 0.0
        %5000 = vmatprep.subr.mxu0 0.0
        %5001 = vmatpush1.msra.mxu0 0.0
        %5002 = vmatprep.subr.mxu0 0.0
        %5003 = vmatpush1.msra.mxu0 0.0
        %5004 = vmatprep.subr.mxu0 0.0
        %5005 = vmatpush1.msra.mxu0 0.0
        %5006 = vmatprep.subr.mxu0 0.0
        %5007 = vmatpush1.msra.mxu0 0.0
        %5008 = vmatprep.subr.mxu0 0.0
        %5009 = vmatpush1.msra.mxu0 0.0
        %5010 = vmatprep.subr.mxu0 0.0
        %5011 = vmatpush1.msra.mxu0 0.0
        %5012 = vmatprep.subr.mxu0 0.0
        %5013 = vmatpush1.msra.mxu0 0.0
        %5014 = vmatprep.subr.mxu0 0.0
        %5015 = vmatpush1.msra.mxu0 0.0
        %5016 = vmatprep.subr.mxu0 0.0
        %5017 = vmatpush1.msra.mxu0 0.0
        %5018 = vmatprep.subr.mxu0 0.0
        %5019 = vmatpush1.msra.mxu0 0.0
        %5020 = vmatprep.subr.mxu0 0.0
        %5021 = vmatpush1.msra.mxu0 0.0
        %5022 = vmatprep.subr.mxu0 0.0
        %5023 = vmatpush1.msra.mxu0 0.0
        %5024 = vmatprep.subr.mxu0 0.0
        %5025 = vmatpush1.msra.mxu0 0.0
        %5026 = vmatprep.subr.mxu0 0.0
        %5027 = vmatpush1.msra.mxu0 0.0
        %5028 = vmatprep.mubr.f32.mxu0 0.0
        %v5029 = vand.u32 %v4431, 4294901760
        %5030 = vmatmul.mubr.f32.gmra.mrb[0].mxu0 %v5029
        %v5031 = vpop.f32.mrb[0].mxu0
        %v5032 = vadd.f32 %v4905, %v5031
        %v5033 = vpop.f32.mrb[0].mxu0
        %5034 = vmatprep.mubr.f32.mxu0 0.0
        %v5035 = vand.u32 %v4432, 4294901760
        %5036 = vmatmul.mubr.f32.gmra.mrb[0].mxu0 %v5035
        %v5037 = vpop.f32.mrb[0].mxu0
        %v5038 = vadd.f32 %v4913, %v5037
        %v5039 = vpop.f32.mrb[0].mxu0
        %5040 = vdwg.mxu0
        %5041 = vmatprep.subr.mxu0 0.0
        %v5042 = vand.u32 %v4434, 4294901760
        %5043 = vmatpush1.msra.mxu0 %v5042
        %5044 = vmatprep.subr.mxu0 0.0
        %v5045 = vand.u32 %v4435, 4294901760
        %5046 = vmatpush1.msra.mxu0 %v5045
        %5047 = vmatprep.subr.mxu0 0.0
        %v5048 = vand.u32 %v4436, 4294901760
        %5049 = vmatpush1.msra.mxu0 %v5048
        %5050 = vmatprep.subr.mxu0 0.0
        %v5051 = vand.u32 %v4437, 4294901760
        %5052 = vmatpush1.msra.mxu0 %v5051
        %5053 = vmatprep.subr.mxu0 0.0
        %v5054 = vand.u32 %v4438, 4294901760
        %5055 = vmatpush1.msra.mxu0 %v5054
        %5056 = vmatprep.subr.mxu0 0.0
        %v5057 = vand.u32 %v4439, 4294901760
        %5058 = vmatpush1.msra.mxu0 %v5057
        %5059 = vmatprep.subr.mxu0 0.0
        %v5060 = vand.u32 %v4440, 4294901760
        %5061 = vmatpush1.msra.mxu0 %v5060
        %5062 = vmatprep.subr.mxu0 0.0
        %v5063 = vand.u32 %v4441, 4294901760
        %5064 = vmatpush1.msra.mxu0 %v5063
        %5065 = vmatprep.subr.mxu0 0.0
        %v5066 = vand.u32 %v4442, 4294901760
        %5067 = vmatpush1.msra.mxu0 %v5066
        %5068 = vmatprep.subr.mxu0 0.0
        %v5069 = vand.u32 %v4443, 4294901760
        %5070 = vmatpush1.msra.mxu0 %v5069
        %5071 = vmatprep.subr.mxu0 0.0
        %v5072 = vand.u32 %v4444, 4294901760
        %5073 = vmatpush1.msra.mxu0 %v5072
        %5074 = vmatprep.subr.mxu0 0.0
        %v5075 = vand.u32 %v4445, 4294901760
        %5076 = vmatpush1.msra.mxu0 %v5075
        %5077 = vmatprep.subr.mxu0 0.0
        %v5078 = vand.u32 %v4446, 4294901760
        %5079 = vmatpush1.msra.mxu0 %v5078
        %5080 = vmatprep.subr.mxu0 0.0
        %v5081 = vand.u32 %v4447, 4294901760
        %5082 = vmatpush1.msra.mxu0 %v5081
        %5083 = vmatprep.subr.mxu0 0.0
        %v5084 = vand.u32 %v4448, 4294901760
        %5085 = vmatpush1.msra.mxu0 %v5084
        %5086 = vmatprep.subr.mxu0 0.0
        %v5087 = vand.u32 %v4449, 4294901760
        %5088 = vmatpush1.msra.mxu0 %v5087
        %5089 = vmatprep.subr.mxu0 0.0
        %5090 = vmatpush1.msra.mxu0 0.0
        %5091 = vmatprep.subr.mxu0 0.0
        %5092 = vmatpush1.msra.mxu0 0.0
        %5093 = vmatprep.subr.mxu0 0.0
        %5094 = vmatpush1.msra.mxu0 0.0
        %5095 = vmatprep.subr.mxu0 0.0
        %5096 = vmatpush1.msra.mxu0 0.0
        %5097 = vmatprep.subr.mxu0 0.0
        %5098 = vmatpush1.msra.mxu0 0.0
        %5099 = vmatprep.subr.mxu0 0.0
        %5100 = vmatpush1.msra.mxu0 0.0
        %5101 = vmatprep.subr.mxu0 0.0
        %5102 = vmatpush1.msra.mxu0 0.0
        %5103 = vmatprep.subr.mxu0 0.0
        %5104 = vmatpush1.msra.mxu0 0.0
        %5105 = vmatprep.subr.mxu0 0.0
        %5106 = vmatpush1.msra.mxu0 0.0
        %5107 = vmatprep.subr.mxu0 0.0
        %5108 = vmatpush1.msra.mxu0 0.0
        %5109 = vmatprep.subr.mxu0 0.0
        %5110 = vmatpush1.msra.mxu0 0.0
        %5111 = vmatprep.subr.mxu0 0.0
        %5112 = vmatpush1.msra.mxu0 0.0
        %5113 = vmatprep.subr.mxu0 0.0
        %5114 = vmatpush1.msra.mxu0 0.0
        %5115 = vmatprep.subr.mxu0 0.0
        %5116 = vmatpush1.msra.mxu0 0.0
        %5117 = vmatprep.subr.mxu0 0.0
        %5118 = vmatpush1.msra.mxu0 0.0
        %5119 = vmatprep.subr.mxu0 0.0
        %5120 = vmatpush1.msra.mxu0 0.0
        %5121 = vmatprep.mubr.f32.mxu0 0.0
        %v5122 = vand.u32 %v4431, 4294901760
        %5123 = vmatmul.mubr.f32.gmra.mrb[0].mxu0 %v5122
        %v5124 = vpop.f32.mrb[0].mxu0
        %v5125 = vadd.f32 %v5032, %v5124
        %v5126 = vpop.f32.mrb[0].mxu0
        %5127 = vmatprep.mubr.f32.mxu0 0.0
        %v5128 = vand.u32 %v4432, 4294901760
        %5129 = vmatmul.mubr.f32.gmra.mrb[0].mxu0 %v5128
        %v5130 = vpop.f32.mrb[0].mxu0
        %v5131 = vadd.f32 %v5038, %v5130
        %v5132 = vpop.f32.mrb[0].mxu0
        %5133 = vdwg.mxu0
        %v5134 = vadd.f32 %v4429, %v5125
        %v5135 = vadd.f32 %v4430, %v5131
        %v5136 = vxor.u32 %v5134, 2147483648
        %v5137 = vxor.u32 %v5135, 2147483648
        %v5138 = vmul.f32 %v5136, 1.442695
        %v5139 = vpow.pop %v5138
        %v5140 = vmul.f32 %v5137, 1.442695
        %v5141 = vpow.pop %v5140
        %v5142 = vadd.f32 %v5139, 1.0
        %v5143 = vadd.f32 %v5141, 1.0
        %v5144 = vrcp.pop %v5142
        %v5145 = vmul.f32 1.0, %v5144
        %v5146 = vrcp.pop %v5143
        %v5147 = vmul.f32 1.0, %v5146
        %v5148 = vld [vmem:[%s141] sm:$0xff]
        %v5149 = vld [vmem:[%s141 + $0x8] sm:$0xff]
        %v5150 = vld [vmem:[%s141 + $0x10] sm:$0xff]
        %v5151 = vld [vmem:[%s141 + $0x18] sm:$0xff]
        %v5152 = vld [vmem:[%s141 + $0x20] sm:$0xff]
        %v5153 = vld [vmem:[%s141 + $0x28] sm:$0xff]
        %v5154 = vld [vmem:[%s141 + $0x30] sm:$0xff]
        %v5155 = vld [vmem:[%s141 + $0x38] sm:$0xff]
        %v5156 = vmul.f32 %v5148, %v5145
        %v5157 = vmul.f32 %v5149, %v5147
        %v5158 = vmul.f32 %v5150, %v5145
        %v5159 = vmul.f32 %v5151, %v5147
        %v5160 = vmul.f32 %v5152, %v5145
        %v5161 = vmul.f32 %v5153, %v5147
        %v5162 = vmul.f32 %v5154, %v5145
        %v5163 = vmul.f32 %v5155, %v5147
        %5164 = vst.msk [vmem:[%s136] sm:$0xff] %vm153, %v5156
        %5165 = vst.msk [vmem:[%s136 + $0x8] sm:$0xff] %vm153, %v5157
        %5166 = vst.msk [vmem:[%s136 + $0x10] sm:$0xff] %vm153, %v5158
        %5167 = vst.msk [vmem:[%s136 + $0x18] sm:$0xff] %vm153, %v5159
        %5168 = vst.msk [vmem:[%s136 + $0x20] sm:$0xff] %vm153, %v5160
        %5169 = vst.msk [vmem:[%s136 + $0x28] sm:$0xff] %vm153, %v5161
        %5170 = vst.msk [vmem:[%s136 + $0x30] sm:$0xff] %vm153, %v5162
        %5171 = vst.msk [vmem:[%s136 + $0x38] sm:$0xff] %vm153, %v5163
        %s5172 = sand.u32 %s71, 1
        %s5173 = scalar_lea.sflag [#allocation4], %s5172
        %s5174 = sand.u32 %s71, 1
        %s5175 = smul.addr %s5174, 64
        %s5176 = scalar_lea.vmem [#allocation3], %s5175
        // Predicated region
        $region29: #{tpu_custom_call.1} parent=27 // pred_check
          %p5177 = pneg %p81
        $region30: #{tpu_custom_call.1} parent=27 // pred_check_branch
          %5179 = sbr.rel (%p5177) target = $region32
        $region31: #{tpu_custom_call.1} parent=27 // pred_region
          %s5181 = ssub.s32 1024, 1024
          %5182 = vsyncadd %s5173, %s5181
          %s5183 = smul.addr %s16, 8
          %s5184 = smul.addr %s5183, 128
          %s5185 = scalar_lea.hbm %s2, %s5184
          %s5186 = sshll.u32 %s5176, 4
          %s5187 = int_to_ptr.vmem [resolvable:$true] %s5186
          %5192 = dma.vmem_to_hbm [thread:$0]  %s5187, 1024, %s5185, %s5173, 128, 128, 8
        $region32: #{tpu_custom_call.1} parent=27 // pred_fallthru
          _
      $region28: #{tpu_custom_call.1} parent=5 // pred_fallthru
        _
      %p5193 = scmp.le.s32.totalorder 2, %s11
      // Predicated region
      $region33: #{tpu_custom_call.1} parent=5 // pred_check
        %p5194 = pneg %p5193
      $region34: #{tpu_custom_call.1} parent=5 // pred_check_branch
        %5196 = sbr.rel (%p5194) target = $region36
      $region35: #{tpu_custom_call.1} parent=5 // pred_region
        %s5197 = ssub.s32 %s11, 2
        // Predicated region
        $region37: #{tpu_custom_call.1} parent=35 // pred_check
          %p5198 = pneg %p87
        $region38: #{tpu_custom_call.1} parent=35 // pred_check_branch
          %5200 = sbr.rel (%p5198) target = $region40
        $region39: #{tpu_custom_call.1} parent=35 // pred_region
          %s5201 = sand.u32 %s72, 1
          %s5202 = scalar_lea.sflag [#allocation4], %s5201
          %s5203 = sand.u32 %s72, 1
          %s5204 = smul.addr %s5203, 64
          %s5205 = scalar_lea.vmem [#allocation3], %s5204
          %5206 = dma.done %s5202, 1024
        $region40: #{tpu_custom_call.1} parent=35 // pred_fallthru
          _
      $region36: #{tpu_custom_call.1} parent=5 // pred_fallthru
        _
    $region6: #{tpu_custom_call.1} parent=1 // loop_footer
      %s15 = sadd.s32 1, %s11
    $region7: #{tpu_custom_call.1} parent=1 // loop_footer_branch
      %10 = sbr.rel target = $region3
    $region8: #{tpu_custom_call.1} parent=1 // loop_exit
      _
    %5207 = vsyncpa [#allocation4], 1
    %s5208 = scalar_lea.sflag [#allocation4], 1
    %5209 = vsyncpa %s5208, 1

</llo_original>
